<compile_context>
chip_gen: v5e
topology: v5e:2x2
jax: 0.10.0
libtpu: 0.0.40
codegen_flags: <defaults>
</compile_context>

<pallas_src>
import functools

import numpy as np

import jax
import jax.numpy as jnp
from jax.experimental import pallas as pl
from jax.experimental.pallas import tpu as pltpu

_BN_EPS = 1e-5
_LAYERS = ("l1c1", "l1c2", "l2c1", "l2c2", "l3c1", "l3c2")
_CMAX = 16   # every layer's channel count is zero-padded to this


# ----------------------------------------------------------------------------
# Fused whole-network kernel: 6 x (Conv3x3 + folded BN + ReLU) + residual.
# ----------------------------------------------------------------------------
def _fused_net_kernel(x_ref, w_ref, scale_ref, shift_ref, mask_ref, out_ref,
                      act_ref, patch_ref, *, shifts, num_layers, cmax):
    """Refs (leading batch dim squeezed by BlockSpec):
      x_ref:     (C, HW)             f32  one image, channel-major, lane-dense
      w_ref:     (L, CMAX, 9*CMAX)   bf16 per-layer GEMM weights (zero-padded)
      scale_ref: (L, CMAX, 1)        f32  folded BN scale (0 on pad channels)
      shift_ref: (L, CMAX, 1)        f32  folded BN shift + conv bias
      mask_ref:  (9, 1, HW)          f32  per-tap validity mask (conv padding)
      out_ref:   (C, HW)             f32  x + delta
      act_ref:   (CMAX, HW)          f32  VMEM scratch: current activation
      patch_ref: (9*CMAX, HW)        bf16 VMEM scratch: stacked im2col patch
    """
    C = x_ref.shape[0]

    # Pack the image into a zero-padded CMAX-channel slab (dead rows = 0).
    act_ref[...] = jnp.zeros_like(act_ref)
    act_ref[0:C, :] = x_ref[...]

    for l in range(num_layers):
        act = act_ref[...]                                   # (CMAX, HW) f32
        # In-VMEM im2col: 9 lane-rolled copies of the slab, masked so taps
        # that fall outside the image (the zero padding of the conv) are 0.
        for t in range(9):
            s = shifts[t]
            p = act if s == 0 else pltpu.roll(act, s, 1)     # XLU lane roll
            if t != 4:                                       # centre tap: all-ones mask
                p = p * mask_ref[t]
            patch_ref[t * cmax:(t + 1) * cmax, :] = p.astype(patch_ref.dtype)

        # One K = 9*CMAX GEMM on the MXU (bf16 in, f32 accumulation).
        y = jnp.dot(w_ref[l], patch_ref[...],
                    preferred_element_type=jnp.float32)      # (CMAX, HW) f32
        y = y * scale_ref[l] + shift_ref[l]                  # folded BN + bias
        act_ref[...] = jnp.maximum(y, 0.0)                   # ReLU

    # Fused residual: out = x + delta (single aligned lane-dense store).
    out_ref[...] = act_ref[0:C, :] + x_ref[...]


# ----------------------------------------------------------------------------
# Host-side parameter folding / constants
# ----------------------------------------------------------------------------
def _fold_params(params):
    """Stack per-layer GEMM weights (CMAX, 9*CMAX) and BN scale/shift."""
    w_l, sc_l, sh_l = [], [], []
    for name in _LAYERS:
        p = params[name]
        co, ci = p["w"].shape[0], p["w"].shape[1]
        # PyTorch (Co, Ci, 3, 3) -> (Co, kh, kw, Ci) -> (Co, 9, Ci) -> pad.
        w = jnp.transpose(p["w"], (0, 2, 3, 1)).reshape(co, 9, ci)
        w = jnp.pad(w, ((0, _CMAX - co), (0, 0), (0, _CMAX - ci)))
        w_l.append(w.reshape(_CMAX, 9 * _CMAX))
        scale = p["gamma"] * jax.lax.rsqrt(p["var"] + _BN_EPS)
        shift = (p["b"] - p["mean"]) * scale + p["beta"]
        sc_l.append(jnp.pad(scale, (0, _CMAX - co)).reshape(_CMAX, 1))
        sh_l.append(jnp.pad(shift, (0, _CMAX - co)).reshape(_CMAX, 1))
    w_all = jnp.stack(w_l).astype(jnp.bfloat16)       # (6, CMAX, 9*CMAX)
    scale_all = jnp.stack(sc_l).astype(jnp.float32)   # (6, CMAX, 1)
    shift_all = jnp.stack(sh_l).astype(jnp.float32)   # (6, CMAX, 1)
    return w_all, scale_all, shift_all


def _tap_masks(H, W):
    """(9, 1, H*W) f32: 1 where tap (kh,kw) reads inside the image."""
    HW = H * W
    ii = np.arange(HW) // W
    jj = np.arange(HW) % W
    masks = np.zeros((9, 1, HW), np.float32)
    for kh in range(3):
        for kw in range(3):
            ok = ((ii + kh - 1 >= 0) & (ii + kh - 1 < H) &
                  (jj + kw - 1 >= 0) & (jj + kw - 1 < W))
            masks[kh * 3 + kw, 0, :] = ok.astype(np.float32)
    return jnp.asarray(masks)


# ----------------------------------------------------------------------------
# Norm_Indentity_Net forward
# ----------------------------------------------------------------------------
def norm_identity_forward(params, x_nchw):
    N, C, H, W = x_nchw.shape
    HW = H * W
    assert C <= _CMAX

    x_flat = x_nchw.reshape(N, C, HW)                  # layout-preserving

    w_all, scale_all, shift_all = _fold_params(params)
    masks = _tap_masks(H, W)
    # Tap (kh,kw) reads pixel (i+kh-1, j+kw-1): flat offset d=(kh-1)*W+(kw-1);
    # rolled[p] = act[p + d]  <=>  roll shift = (-d) mod HW.
    shifts = tuple(int((-((kh - 1) * W + (kw - 1))) % HW)
                   for kh in range(3) for kw in range(3))

    kernel = functools.partial(_fused_net_kernel, shifts=shifts,
                               num_layers=len(_LAYERS), cmax=_CMAX)

    out_flat = pl.pallas_call(
        kernel,
        out_shape=jax.ShapeDtypeStruct((N, C, HW), jnp.float32),
        grid=(N,),
        in_specs=[
            pl.BlockSpec((None, C, HW), lambda n: (n, 0, 0)),   # image slab
            pl.BlockSpec(w_all.shape, lambda n: (0, 0, 0)),     # weights (const)
            pl.BlockSpec(scale_all.shape, lambda n: (0, 0, 0)),  # BN scale (const)
            pl.BlockSpec(shift_all.shape, lambda n: (0, 0, 0)),  # BN shift (const)
            pl.BlockSpec(masks.shape, lambda n: (0, 0, 0)),     # tap masks (const)
        ],
        out_specs=pl.BlockSpec((None, C, HW), lambda n: (n, 0, 0)),
        scratch_shapes=[
            pltpu.VMEM((_CMAX, HW), jnp.float32),               # activation slab
            pltpu.VMEM((9 * _CMAX, HW), jnp.bfloat16),          # im2col patch
        ],
        compiler_params=pltpu.CompilerParams(
            dimension_semantics=("parallel",)),
    )(x_flat, w_all, scale_all, shift_all, masks)

    return out_flat.reshape(N, C, H, W)


# ----------------------------------------------------------------------------
# Parameter init + pure-JAX reference (for correctness cross-check)
# ----------------------------------------------------------------------------
def init_params(key, in_channel=3):
    # ConvBlock(ch_in, ch_out) = [conv ch_in->ch_out, conv ch_out->ch_out]
    shapes = [
        (in_channel, 16), (16, 16),                  # layer1
        (16, 16), (16, 16),                          # layer2
        (16, in_channel), (in_channel, in_channel),  # layer3
    ]
    params = {}
    for name, (ci, co), k in zip(_LAYERS, shapes, jax.random.split(key, 6)):
        kw, kb, kg, kbe, km, kv = jax.random.split(k, 6)
        params[name] = {
            "w": 0.05 * jax.random.normal(kw, (co, ci, 3, 3), jnp.float32),
            "b": 0.05 * jax.random.normal(kb, (co,), jnp.float32),
            "gamma": 1.0 + 0.1 * jax.random.normal(kg, (co,), jnp.float32),
            "beta": 0.05 * jax.random.normal(kbe, (co,), jnp.float32),
            "mean": 0.05 * jax.random.normal(km, (co,), jnp.float32),
            "var": 1.0 + 0.2 * jax.random.uniform(kv, (co,), jnp.float32),
        }
    return params


def _reference_forward(params, x_nchw):
    def layer(a, p):
        y = jax.lax.conv_general_dilated(
            a, p["w"], window_strides=(1, 1), padding="SAME",
            dimension_numbers=("NCHW", "OIHW", "NCHW"),
            precision=jax.lax.Precision.HIGHEST)
        y = y + p["b"][None, :, None, None]
        scale = p["gamma"] * jax.lax.rsqrt(p["var"] + _BN_EPS)
        y = (y - p["mean"][None, :, None, None]) * scale[None, :, None, None]
        y = y + p["beta"][None, :, None, None]
        return jnp.maximum(y, 0.0)

    a = x_nchw
    for name in _LAYERS:
        a = layer(a, params[name])
    return x_nchw + a


if __name__ == "__main__":
    in_channel = 3
    N, H, W = 2, 16, 16

    key = jax.random.PRNGKey(0)
    kp, kx = jax.random.split(key)
    params = init_params(kp, in_channel)
    x = jax.random.normal(kx, (N, in_channel, H, W), jnp.float32)

    fwd = jax.jit(norm_identity_forward)
    out = jax.block_until_ready(fwd(params, x))

    assert out.shape == (N, in_channel, H, W), out.shape
    assert bool(jnp.all(jnp.isfinite(out)))

    ref = _reference_forward(params, x)
    max_err = float(jnp.max(jnp.abs(out - ref)))
    assert max_err < 3e-2, f"max |pallas - reference| = {max_err}"

    print("KERNEL_OK")
</pallas_src>

<mosaic_0001>
module attributes {stable_mosaic.version = 11 : i64} {
  func.func @_fused_net_kernel(%arg0: i32, %arg1: memref<1x3x256xf32, #tpu.memory_space<vmem>>, %arg2: memref<6x16x144xbf16, #tpu.memory_space<vmem>>, %arg3: memref<6x16x1xf32, #tpu.memory_space<vmem>>, %arg4: memref<6x16x1xf32, #tpu.memory_space<vmem>>, %arg5: memref<9x1x256xf32, #tpu.memory_space<vmem>>, %arg6: memref<1x3x256xf32, #tpu.memory_space<vmem>>, %arg7: memref<16x256xf32, #tpu.memory_space<vmem>>, %arg8: memref<144x256xbf16, #tpu.memory_space<vmem>>) attributes {dimension_semantics = [#tpu.dimension_semantics<parallel>], iteration_bounds = array<i64: 2>, scalar_prefetch = 0 : i64, scratch_operands = 2 : i64, tpu.core_type = #tpu.core_type<tc>, window_params = [{transform_indices = @transform_0, window_bounds = array<i64: 1, 3, 256>}, {pipeline_mode = #tpu.pipeline_mode<synchronous>, transform_indices = @transform_1, window_bounds = array<i64: 6, 16, 144>}, {pipeline_mode = #tpu.pipeline_mode<synchronous>, transform_indices = @transform_2, window_bounds = array<i64: 6, 16, 1>}, {pipeline_mode = #tpu.pipeline_mode<synchronous>, transform_indices = @transform_3, window_bounds = array<i64: 6, 16, 1>}, {pipeline_mode = #tpu.pipeline_mode<synchronous>, transform_indices = @transform_4, window_bounds = array<i64: 9, 1, 256>}, {transform_indices = @transform_5, window_bounds = array<i64: 1, 3, 256>}]} {
    %cst = arith.constant 0.000000e+00 : f32
    %0 = vector.broadcast %cst : f32 to vector<16x256xf32>
    %c0 = arith.constant 0 : index
    %c0_0 = arith.constant 0 : index
    %1 = vector.load %arg7[%c0, %c0_0] : memref<16x256xf32, #tpu.memory_space<vmem>>, vector<16x256xf32>
    tpu.vector_store %arg7[%c0, %c0_0], %0 {strides = array<i32>} : memref<16x256xf32, #tpu.memory_space<vmem>>, vector<16x256xf32>,
    %c0_1 = arith.constant 0 : index
    %c0_2 = arith.constant 0 : index
    %c0_3 = arith.constant 0 : index
    %2 = vector.load %arg1[%c0_1, %c0_2, %c0_3] : memref<1x3x256xf32, #tpu.memory_space<vmem>>, vector<1x3x256xf32>
    %3 = vector.shape_cast %2 : vector<1x3x256xf32> to vector<3x256xf32>
    %c0_4 = arith.constant 0 : index
    %c0_5 = arith.constant 0 : index
    %4 = vector.load %arg7[%c0_4, %c0_5] : memref<16x256xf32, #tpu.memory_space<vmem>>, vector<3x256xf32>
    tpu.vector_store %arg7[%c0_4, %c0_5], %3 {strides = array<i32>} : memref<16x256xf32, #tpu.memory_space<vmem>>, vector<3x256xf32>,
    %c0_6 = arith.constant 0 : index
    %c0_7 = arith.constant 0 : index
    %5 = vector.load %arg7[%c0_6, %c0_7] : memref<16x256xf32, #tpu.memory_space<vmem>>, vector<16x256xf32>
    %c17_i32 = arith.constant 17 : i32
    %6 = tpu.dynamic_rotate %5 by %c17_i32 dim 1 : vector<16x256xf32>, i32 -> vector<16x256xf32>
    %c0_8 = arith.constant 0 : index
    %c0_9 = arith.constant 0 : index
    %c0_10 = arith.constant 0 : index
    %7 = vector.load %arg5[%c0_8, %c0_9, %c0_10] : memref<9x1x256xf32, #tpu.memory_space<vmem>>, vector<1x1x256xf32>
    %8 = vector.shape_cast %7 : vector<1x1x256xf32> to vector<1x256xf32>
    %9 = vector.broadcast %8 : vector<1x256xf32> to vector<16x256xf32>
    %10 = arith.mulf %6, %9 : vector<16x256xf32>
    %11 = arith.truncf %10 : vector<16x256xf32> to vector<16x256xbf16>
    %c0_11 = arith.constant 0 : index
    %c0_12 = arith.constant 0 : index
    %12 = vector.load %arg8[%c0_11, %c0_12] : memref<144x256xbf16, #tpu.memory_space<vmem>>, vector<16x256xbf16>
    tpu.vector_store %arg8[%c0_11, %c0_12], %11 {strides = array<i32>} : memref<144x256xbf16, #tpu.memory_space<vmem>>, vector<16x256xbf16>,
    %c16_i32 = arith.constant 16 : i32
    %13 = tpu.dynamic_rotate %5 by %c16_i32 dim 1 : vector<16x256xf32>, i32 -> vector<16x256xf32>
    %c1 = arith.constant 1 : index
    %c0_13 = arith.constant 0 : index
    %c0_14 = arith.constant 0 : index
    %14 = vector.load %arg5[%c1, %c0_13, %c0_14] : memref<9x1x256xf32, #tpu.memory_space<vmem>>, vector<1x1x256xf32>
    %15 = vector.shape_cast %14 : vector<1x1x256xf32> to vector<1x256xf32>
    %16 = vector.broadcast %15 : vector<1x256xf32> to vector<16x256xf32>
    %17 = arith.mulf %13, %16 : vector<16x256xf32>
    %18 = arith.truncf %17 : vector<16x256xf32> to vector<16x256xbf16>
    %c16 = arith.constant 16 : index
    %c0_15 = arith.constant 0 : index
    %19 = vector.load %arg8[%c16, %c0_15] : memref<144x256xbf16, #tpu.memory_space<vmem>>, vector<16x256xbf16>
    tpu.vector_store %arg8[%c16, %c0_15], %18 {strides = array<i32>} : memref<144x256xbf16, #tpu.memory_space<vmem>>, vector<16x256xbf16>,
    %c15_i32 = arith.constant 15 : i32
    %20 = tpu.dynamic_rotate %5 by %c15_i32 dim 1 : vector<16x256xf32>, i32 -> vector<16x256xf32>
    %c2 = arith.constant 2 : index
    %c0_16 = arith.constant 0 : index
    %c0_17 = arith.constant 0 : index
    %21 = vector.load %arg5[%c2, %c0_16, %c0_17] : memref<9x1x256xf32, #tpu.memory_space<vmem>>, vector<1x1x256xf32>
    %22 = vector.shape_cast %21 : vector<1x1x256xf32> to vector<1x256xf32>
    %23 = vector.broadcast %22 : vector<1x256xf32> to vector<16x256xf32>
    %24 = arith.mulf %20, %23 : vector<16x256xf32>
    %25 = arith.truncf %24 : vector<16x256xf32> to vector<16x256xbf16>
    %c32 = arith.constant 32 : index
    %c0_18 = arith.constant 0 : index
    %26 = vector.load %arg8[%c32, %c0_18] : memref<144x256xbf16, #tpu.memory_space<vmem>>, vector<16x256xbf16>
    tpu.vector_store %arg8[%c32, %c0_18], %25 {strides = array<i32>} : memref<144x256xbf16, #tpu.memory_space<vmem>>, vector<16x256xbf16>,
    %c1_i32 = arith.constant 1 : i32
    %27 = tpu.dynamic_rotate %5 by %c1_i32 dim 1 : vector<16x256xf32>, i32 -> vector<16x256xf32>
    %c3 = arith.constant 3 : index
    %c0_19 = arith.constant 0 : index
    %c0_20 = arith.constant 0 : index
    %28 = vector.load %arg5[%c3, %c0_19, %c0_20] : memref<9x1x256xf32, #tpu.memory_space<vmem>>, vector<1x1x256xf32>
    %29 = vector.shape_cast %28 : vector<1x1x256xf32> to vector<1x256xf32>
    %30 = vector.broadcast %29 : vector<1x256xf32> to vector<16x256xf32>
    %31 = arith.mulf %27, %30 : vector<16x256xf32>
    %32 = arith.truncf %31 : vector<16x256xf32> to vector<16x256xbf16>
    %c48 = arith.constant 48 : index
    %c0_21 = arith.constant 0 : index
    %33 = vector.load %arg8[%c48, %c0_21] : memref<144x256xbf16, #tpu.memory_space<vmem>>, vector<16x256xbf16>
    tpu.vector_store %arg8[%c48, %c0_21], %32 {strides = array<i32>} : memref<144x256xbf16, #tpu.memory_space<vmem>>, vector<16x256xbf16>,
    %34 = arith.truncf %5 : vector<16x256xf32> to vector<16x256xbf16>
    %c64 = arith.constant 64 : index
    %c0_22 = arith.constant 0 : index
    %35 = vector.load %arg8[%c64, %c0_22] : memref<144x256xbf16, #tpu.memory_space<vmem>>, vector<16x256xbf16>
    tpu.vector_store %arg8[%c64, %c0_22], %34 {strides = array<i32>} : memref<144x256xbf16, #tpu.memory_space<vmem>>, vector<16x256xbf16>,
    %c255_i32 = arith.constant 255 : i32
    %36 = tpu.dynamic_rotate %5 by %c255_i32 dim 1 : vector<16x256xf32>, i32 -> vector<16x256xf32>
    %c5 = arith.constant 5 : index
    %c0_23 = arith.constant 0 : index
    %c0_24 = arith.constant 0 : index
    %37 = vector.load %arg5[%c5, %c0_23, %c0_24] : memref<9x1x256xf32, #tpu.memory_space<vmem>>, vector<1x1x256xf32>
    %38 = vector.shape_cast %37 : vector<1x1x256xf32> to vector<1x256xf32>
    %39 = vector.broadcast %38 : vector<1x256xf32> to vector<16x256xf32>
    %40 = arith.mulf %36, %39 : vector<16x256xf32>
    %41 = arith.truncf %40 : vector<16x256xf32> to vector<16x256xbf16>
    %c80 = arith.constant 80 : index
    %c0_25 = arith.constant 0 : index
    %42 = vector.load %arg8[%c80, %c0_25] : memref<144x256xbf16, #tpu.memory_space<vmem>>, vector<16x256xbf16>
    tpu.vector_store %arg8[%c80, %c0_25], %41 {strides = array<i32>} : memref<144x256xbf16, #tpu.memory_space<vmem>>, vector<16x256xbf16>,
    %c241_i32 = arith.constant 241 : i32
    %43 = tpu.dynamic_rotate %5 by %c241_i32 dim 1 : vector<16x256xf32>, i32 -> vector<16x256xf32>
    %c6 = arith.constant 6 : index
    %c0_26 = arith.constant 0 : index
    %c0_27 = arith.constant 0 : index
    %44 = vector.load %arg5[%c6, %c0_26, %c0_27] : memref<9x1x256xf32, #tpu.memory_space<vmem>>, vector<1x1x256xf32>
    %45 = vector.shape_cast %44 : vector<1x1x256xf32> to vector<1x256xf32>
    %46 = vector.broadcast %45 : vector<1x256xf32> to vector<16x256xf32>
    %47 = arith.mulf %43, %46 : vector<16x256xf32>
    %48 = arith.truncf %47 : vector<16x256xf32> to vector<16x256xbf16>
    %c96 = arith.constant 96 : index
    %c0_28 = arith.constant 0 : index
    %49 = vector.load %arg8[%c96, %c0_28] : memref<144x256xbf16, #tpu.memory_space<vmem>>, vector<16x256xbf16>
    tpu.vector_store %arg8[%c96, %c0_28], %48 {strides = array<i32>} : memref<144x256xbf16, #tpu.memory_space<vmem>>, vector<16x256xbf16>,
    %c240_i32 = arith.constant 240 : i32
    %50 = tpu.dynamic_rotate %5 by %c240_i32 dim 1 : vector<16x256xf32>, i32 -> vector<16x256xf32>
    %c7 = arith.constant 7 : index
    %c0_29 = arith.constant 0 : index
    %c0_30 = arith.constant 0 : index
    %51 = vector.load %arg5[%c7, %c0_29, %c0_30] : memref<9x1x256xf32, #tpu.memory_space<vmem>>, vector<1x1x256xf32>
    %52 = vector.shape_cast %51 : vector<1x1x256xf32> to vector<1x256xf32>
    %53 = vector.broadcast %52 : vector<1x256xf32> to vector<16x256xf32>
    %54 = arith.mulf %50, %53 : vector<16x256xf32>
    %55 = arith.truncf %54 : vector<16x256xf32> to vector<16x256xbf16>
    %c112 = arith.constant 112 : index
    %c0_31 = arith.constant 0 : index
    %56 = vector.load %arg8[%c112, %c0_31] : memref<144x256xbf16, #tpu.memory_space<vmem>>, vector<16x256xbf16>
    tpu.vector_store %arg8[%c112, %c0_31], %55 {strides = array<i32>} : memref<144x256xbf16, #tpu.memory_space<vmem>>, vector<16x256xbf16>,
    %c239_i32 = arith.constant 239 : i32
    %57 = tpu.dynamic_rotate %5 by %c239_i32 dim 1 : vector<16x256xf32>, i32 -> vector<16x256xf32>
    %c8 = arith.constant 8 : index
    %c0_32 = arith.constant 0 : index
    %c0_33 = arith.constant 0 : index
    %58 = vector.load %arg5[%c8, %c0_32, %c0_33] : memref<9x1x256xf32, #tpu.memory_space<vmem>>, vector<1x1x256xf32>
    %59 = vector.shape_cast %58 : vector<1x1x256xf32> to vector<1x256xf32>
    %60 = vector.broadcast %59 : vector<1x256xf32> to vector<16x256xf32>
    %61 = arith.mulf %57, %60 : vector<16x256xf32>
    %62 = arith.truncf %61 : vector<16x256xf32> to vector<16x256xbf16>
    %c128 = arith.constant 128 : index
    %c0_34 = arith.constant 0 : index
    %63 = vector.load %arg8[%c128, %c0_34] : memref<144x256xbf16, #tpu.memory_space<vmem>>, vector<16x256xbf16>
    tpu.vector_store %arg8[%c128, %c0_34], %62 {strides = array<i32>} : memref<144x256xbf16, #tpu.memory_space<vmem>>, vector<16x256xbf16>,
    %c0_35 = arith.constant 0 : index
    %c0_36 = arith.constant 0 : index
    %c0_37 = arith.constant 0 : index
    %64 = vector.load %arg2[%c0_35, %c0_36, %c0_37] : memref<6x16x144xbf16, #tpu.memory_space<vmem>>, vector<1x16x144xbf16>
    %65 = vector.shape_cast %64 : vector<1x16x144xbf16> to vector<16x144xbf16>
    %c0_38 = arith.constant 0 : index
    %c0_39 = arith.constant 0 : index
    %66 = vector.load %arg8[%c0_38, %c0_39] : memref<144x256xbf16, #tpu.memory_space<vmem>>, vector<144x256xbf16>
    %cst_40 = arith.constant dense<0.000000e+00> : vector<16x256xf32>
    %67 = tpu.matmul %65, %66, %cst_40 {dimension_numbers = #tpu.dot_dimension_numbers<[1], [0], [0], [1], [0, 0, 1, 1], [], []>} : vector<16x144xbf16>, vector<144x256xbf16>, vector<16x256xf32> -> vector<16x256xf32>
    %c0_41 = arith.constant 0 : index
    %c0_42 = arith.constant 0 : index
    %c0_43 = arith.constant 0 : index
    %68 = vector.load %arg3[%c0_41, %c0_42, %c0_43] : memref<6x16x1xf32, #tpu.memory_space<vmem>>, vector<1x16x1xf32>
    %69 = vector.shape_cast %68 : vector<1x16x1xf32> to vector<16x1xf32>
    %70 = vector.broadcast %69 : vector<16x1xf32> to vector<16x256xf32>
    %71 = arith.mulf %67, %70 : vector<16x256xf32>
    %c0_44 = arith.constant 0 : index
    %c0_45 = arith.constant 0 : index
    %c0_46 = arith.constant 0 : index
    %72 = vector.load %arg4[%c0_44, %c0_45, %c0_46] : memref<6x16x1xf32, #tpu.memory_space<vmem>>, vector<1x16x1xf32>
    %73 = vector.shape_cast %72 : vector<1x16x1xf32> to vector<16x1xf32>
    %74 = vector.broadcast %73 : vector<16x1xf32> to vector<16x256xf32>
    %75 = arith.addf %71, %74 : vector<16x256xf32>
    %cst_47 = arith.constant 0.000000e+00 : f32
    %76 = vector.broadcast %cst_47 : f32 to vector<16x256xf32>
    %77 = arith.maximumf %75, %76 : vector<16x256xf32>
    %c0_48 = arith.constant 0 : index
    %c0_49 = arith.constant 0 : index
    %78 = vector.load %arg7[%c0_48, %c0_49] : memref<16x256xf32, #tpu.memory_space<vmem>>, vector<16x256xf32>
    tpu.vector_store %arg7[%c0_48, %c0_49], %77 {strides = array<i32>} : memref<16x256xf32, #tpu.memory_space<vmem>>, vector<16x256xf32>,
    %c0_50 = arith.constant 0 : index
    %c0_51 = arith.constant 0 : index
    %79 = vector.load %arg7[%c0_50, %c0_51] : memref<16x256xf32, #tpu.memory_space<vmem>>, vector<16x256xf32>
    %c17_i32_52 = arith.constant 17 : i32
    %80 = tpu.dynamic_rotate %79 by %c17_i32_52 dim 1 : vector<16x256xf32>, i32 -> vector<16x256xf32>
    %c0_53 = arith.constant 0 : index
    %c0_54 = arith.constant 0 : index
    %c0_55 = arith.constant 0 : index
    %81 = vector.load %arg5[%c0_53, %c0_54, %c0_55] : memref<9x1x256xf32, #tpu.memory_space<vmem>>, vector<1x1x256xf32>
    %82 = vector.shape_cast %81 : vector<1x1x256xf32> to vector<1x256xf32>
    %83 = vector.broadcast %82 : vector<1x256xf32> to vector<16x256xf32>
    %84 = arith.mulf %80, %83 : vector<16x256xf32>
    %85 = arith.truncf %84 : vector<16x256xf32> to vector<16x256xbf16>
    %c0_56 = arith.constant 0 : index
    %c0_57 = arith.constant 0 : index
    %86 = vector.load %arg8[%c0_56, %c0_57] : memref<144x256xbf16, #tpu.memory_space<vmem>>, vector<16x256xbf16>
    tpu.vector_store %arg8[%c0_56, %c0_57], %85 {strides = array<i32>} : memref<144x256xbf16, #tpu.memory_space<vmem>>, vector<16x256xbf16>,
    %c16_i32_58 = arith.constant 16 : i32
    %87 = tpu.dynamic_rotate %79 by %c16_i32_58 dim 1 : vector<16x256xf32>, i32 -> vector<16x256xf32>
    %c1_59 = arith.constant 1 : index
    %c0_60 = arith.constant 0 : index
    %c0_61 = arith.constant 0 : index
    %88 = vector.load %arg5[%c1_59, %c0_60, %c0_61] : memref<9x1x256xf32, #tpu.memory_space<vmem>>, vector<1x1x256xf32>
    %89 = vector.shape_cast %88 : vector<1x1x256xf32> to vector<1x256xf32>
    %90 = vector.broadcast %89 : vector<1x256xf32> to vector<16x256xf32>
    %91 = arith.mulf %87, %90 : vector<16x256xf32>
    %92 = arith.truncf %91 : vector<16x256xf32> to vector<16x256xbf16>
    %c16_62 = arith.constant 16 : index
    %c0_63 = arith.constant 0 : index
    %93 = vector.load %arg8[%c16_62, %c0_63] : memref<144x256xbf16, #tpu.memory_space<vmem>>, vector<16x256xbf16>
    tpu.vector_store %arg8[%c16_62, %c0_63], %92 {strides = array<i32>} : memref<144x256xbf16, #tpu.memory_space<vmem>>, vector<16x256xbf16>,
    %c15_i32_64 = arith.constant 15 : i32
    %94 = tpu.dynamic_rotate %79 by %c15_i32_64 dim 1 : vector<16x256xf32>, i32 -> vector<16x256xf32>
    %c2_65 = arith.constant 2 : index
    %c0_66 = arith.constant 0 : index
    %c0_67 = arith.constant 0 : index
    %95 = vector.load %arg5[%c2_65, %c0_66, %c0_67] : memref<9x1x256xf32, #tpu.memory_space<vmem>>, vector<1x1x256xf32>
    %96 = vector.shape_cast %95 : vector<1x1x256xf32> to vector<1x256xf32>
    %97 = vector.broadcast %96 : vector<1x256xf32> to vector<16x256xf32>
    %98 = arith.mulf %94, %97 : vector<16x256xf32>
    %99 = arith.truncf %98 : vector<16x256xf32> to vector<16x256xbf16>
    %c32_68 = arith.constant 32 : index
    %c0_69 = arith.constant 0 : index
    %100 = vector.load %arg8[%c32_68, %c0_69] : memref<144x256xbf16, #tpu.memory_space<vmem>>, vector<16x256xbf16>
    tpu.vector_store %arg8[%c32_68, %c0_69], %99 {strides = array<i32>} : memref<144x256xbf16, #tpu.memory_space<vmem>>, vector<16x256xbf16>,
    %c1_i32_70 = arith.constant 1 : i32
    %101 = tpu.dynamic_rotate %79 by %c1_i32_70 dim 1 : vector<16x256xf32>, i32 -> vector<16x256xf32>
    %c3_71 = arith.constant 3 : index
    %c0_72 = arith.constant 0 : index
    %c0_73 = arith.constant 0 : index
    %102 = vector.load %arg5[%c3_71, %c0_72, %c0_73] : memref<9x1x256xf32, #tpu.memory_space<vmem>>, vector<1x1x256xf32>
    %103 = vector.shape_cast %102 : vector<1x1x256xf32> to vector<1x256xf32>
    %104 = vector.broadcast %103 : vector<1x256xf32> to vector<16x256xf32>
    %105 = arith.mulf %101, %104 : vector<16x256xf32>
    %106 = arith.truncf %105 : vector<16x256xf32> to vector<16x256xbf16>
    %c48_74 = arith.constant 48 : index
    %c0_75 = arith.constant 0 : index
    %107 = vector.load %arg8[%c48_74, %c0_75] : memref<144x256xbf16, #tpu.memory_space<vmem>>, vector<16x256xbf16>
    tpu.vector_store %arg8[%c48_74, %c0_75], %106 {strides = array<i32>} : memref<144x256xbf16, #tpu.memory_space<vmem>>, vector<16x256xbf16>,
    %108 = arith.truncf %79 : vector<16x256xf32> to vector<16x256xbf16>
    %c64_76 = arith.constant 64 : index
    %c0_77 = arith.constant 0 : index
    %109 = vector.load %arg8[%c64_76, %c0_77] : memref<144x256xbf16, #tpu.memory_space<vmem>>, vector<16x256xbf16>
    tpu.vector_store %arg8[%c64_76, %c0_77], %108 {strides = array<i32>} : memref<144x256xbf16, #tpu.memory_space<vmem>>, vector<16x256xbf16>,
    %c255_i32_78 = arith.constant 255 : i32
    %110 = tpu.dynamic_rotate %79 by %c255_i32_78 dim 1 : vector<16x256xf32>, i32 -> vector<16x256xf32>
    %c5_79 = arith.constant 5 : index
    %c0_80 = arith.constant 0 : index
    %c0_81 = arith.constant 0 : index
    %111 = vector.load %arg5[%c5_79, %c0_80, %c0_81] : memref<9x1x256xf32, #tpu.memory_space<vmem>>, vector<1x1x256xf32>
    %112 = vector.shape_cast %111 : vector<1x1x256xf32> to vector<1x256xf32>
    %113 = vector.broadcast %112 : vector<1x256xf32> to vector<16x256xf32>
    %114 = arith.mulf %110, %113 : vector<16x256xf32>
    %115 = arith.truncf %114 : vector<16x256xf32> to vector<16x256xbf16>
    %c80_82 = arith.constant 80 : index
    %c0_83 = arith.constant 0 : index
    %116 = vector.load %arg8[%c80_82, %c0_83] : memref<144x256xbf16, #tpu.memory_space<vmem>>, vector<16x256xbf16>
    tpu.vector_store %arg8[%c80_82, %c0_83], %115 {strides = array<i32>} : memref<144x256xbf16, #tpu.memory_space<vmem>>, vector<16x256xbf16>,
    %c241_i32_84 = arith.constant 241 : i32
    %117 = tpu.dynamic_rotate %79 by %c241_i32_84 dim 1 : vector<16x256xf32>, i32 -> vector<16x256xf32>
    %c6_85 = arith.constant 6 : index
    %c0_86 = arith.constant 0 : index
    %c0_87 = arith.constant 0 : index
    %118 = vector.load %arg5[%c6_85, %c0_86, %c0_87] : memref<9x1x256xf32, #tpu.memory_space<vmem>>, vector<1x1x256xf32>
    %119 = vector.shape_cast %118 : vector<1x1x256xf32> to vector<1x256xf32>
    %120 = vector.broadcast %119 : vector<1x256xf32> to vector<16x256xf32>
    %121 = arith.mulf %117, %120 : vector<16x256xf32>
    %122 = arith.truncf %121 : vector<16x256xf32> to vector<16x256xbf16>
    %c96_88 = arith.constant 96 : index
    %c0_89 = arith.constant 0 : index
    %123 = vector.load %arg8[%c96_88, %c0_89] : memref<144x256xbf16, #tpu.memory_space<vmem>>, vector<16x256xbf16>
    tpu.vector_store %arg8[%c96_88, %c0_89], %122 {strides = array<i32>} : memref<144x256xbf16, #tpu.memory_space<vmem>>, vector<16x256xbf16>,
    %c240_i32_90 = arith.constant 240 : i32
    %124 = tpu.dynamic_rotate %79 by %c240_i32_90 dim 1 : vector<16x256xf32>, i32 -> vector<16x256xf32>
    %c7_91 = arith.constant 7 : index
    %c0_92 = arith.constant 0 : index
    %c0_93 = arith.constant 0 : index
    %125 = vector.load %arg5[%c7_91, %c0_92, %c0_93] : memref<9x1x256xf32, #tpu.memory_space<vmem>>, vector<1x1x256xf32>
    %126 = vector.shape_cast %125 : vector<1x1x256xf32> to vector<1x256xf32>
    %127 = vector.broadcast %126 : vector<1x256xf32> to vector<16x256xf32>
    %128 = arith.mulf %124, %127 : vector<16x256xf32>
    %129 = arith.truncf %128 : vector<16x256xf32> to vector<16x256xbf16>
    %c112_94 = arith.constant 112 : index
    %c0_95 = arith.constant 0 : index
    %130 = vector.load %arg8[%c112_94, %c0_95] : memref<144x256xbf16, #tpu.memory_space<vmem>>, vector<16x256xbf16>
    tpu.vector_store %arg8[%c112_94, %c0_95], %129 {strides = array<i32>} : memref<144x256xbf16, #tpu.memory_space<vmem>>, vector<16x256xbf16>,
    %c239_i32_96 = arith.constant 239 : i32
    %131 = tpu.dynamic_rotate %79 by %c239_i32_96 dim 1 : vector<16x256xf32>, i32 -> vector<16x256xf32>
    %c8_97 = arith.constant 8 : index
    %c0_98 = arith.constant 0 : index
    %c0_99 = arith.constant 0 : index
    %132 = vector.load %arg5[%c8_97, %c0_98, %c0_99] : memref<9x1x256xf32, #tpu.memory_space<vmem>>, vector<1x1x256xf32>
    %133 = vector.shape_cast %132 : vector<1x1x256xf32> to vector<1x256xf32>
    %134 = vector.broadcast %133 : vector<1x256xf32> to vector<16x256xf32>
    %135 = arith.mulf %131, %134 : vector<16x256xf32>
    %136 = arith.truncf %135 : vector<16x256xf32> to vector<16x256xbf16>
    %c128_100 = arith.constant 128 : index
    %c0_101 = arith.constant 0 : index
    %137 = vector.load %arg8[%c128_100, %c0_101] : memref<144x256xbf16, #tpu.memory_space<vmem>>, vector<16x256xbf16>
    tpu.vector_store %arg8[%c128_100, %c0_101], %136 {strides = array<i32>} : memref<144x256xbf16, #tpu.memory_space<vmem>>, vector<16x256xbf16>,
    %c1_102 = arith.constant 1 : index
    %c0_103 = arith.constant 0 : index
    %c0_104 = arith.constant 0 : index
    %138 = vector.load %arg2[%c1_102, %c0_103, %c0_104] : memref<6x16x144xbf16, #tpu.memory_space<vmem>>, vector<1x16x144xbf16>
    %139 = vector.shape_cast %138 : vector<1x16x144xbf16> to vector<16x144xbf16>
    %c0_105 = arith.constant 0 : index
    %c0_106 = arith.constant 0 : index
    %140 = vector.load %arg8[%c0_105, %c0_106] : memref<144x256xbf16, #tpu.memory_space<vmem>>, vector<144x256xbf16>
    %cst_107 = arith.constant dense<0.000000e+00> : vector<16x256xf32>
    %141 = tpu.matmul %139, %140, %cst_107 {dimension_numbers = #tpu.dot_dimension_numbers<[1], [0], [0], [1], [0, 0, 1, 1], [], []>} : vector<16x144xbf16>, vector<144x256xbf16>, vector<16x256xf32> -> vector<16x256xf32>
    %c1_108 = arith.constant 1 : index
    %c0_109 = arith.constant 0 : index
    %c0_110 = arith.constant 0 : index
    %142 = vector.load %arg3[%c1_108, %c0_109, %c0_110] : memref<6x16x1xf32, #tpu.memory_space<vmem>>, vector<1x16x1xf32>
    %143 = vector.shape_cast %142 : vector<1x16x1xf32> to vector<16x1xf32>
    %144 = vector.broadcast %143 : vector<16x1xf32> to vector<16x256xf32>
    %145 = arith.mulf %141, %144 : vector<16x256xf32>
    %c1_111 = arith.constant 1 : index
    %c0_112 = arith.constant 0 : index
    %c0_113 = arith.constant 0 : index
    %146 = vector.load %arg4[%c1_111, %c0_112, %c0_113] : memref<6x16x1xf32, #tpu.memory_space<vmem>>, vector<1x16x1xf32>
    %147 = vector.shape_cast %146 : vector<1x16x1xf32> to vector<16x1xf32>
    %148 = vector.broadcast %147 : vector<16x1xf32> to vector<16x256xf32>
    %149 = arith.addf %145, %148 : vector<16x256xf32>
    %cst_114 = arith.constant 0.000000e+00 : f32
    %150 = vector.broadcast %cst_114 : f32 to vector<16x256xf32>
    %151 = arith.maximumf %149, %150 : vector<16x256xf32>
    %c0_115 = arith.constant 0 : index
    %c0_116 = arith.constant 0 : index
    %152 = vector.load %arg7[%c0_115, %c0_116] : memref<16x256xf32, #tpu.memory_space<vmem>>, vector<16x256xf32>
    tpu.vector_store %arg7[%c0_115, %c0_116], %151 {strides = array<i32>} : memref<16x256xf32, #tpu.memory_space<vmem>>, vector<16x256xf32>,
    %c0_117 = arith.constant 0 : index
    %c0_118 = arith.constant 0 : index
    %153 = vector.load %arg7[%c0_117, %c0_118] : memref<16x256xf32, #tpu.memory_space<vmem>>, vector<16x256xf32>
    %c17_i32_119 = arith.constant 17 : i32
    %154 = tpu.dynamic_rotate %153 by %c17_i32_119 dim 1 : vector<16x256xf32>, i32 -> vector<16x256xf32>
    %c0_120 = arith.constant 0 : index
    %c0_121 = arith.constant 0 : index
    %c0_122 = arith.constant 0 : index
    %155 = vector.load %arg5[%c0_120, %c0_121, %c0_122] : memref<9x1x256xf32, #tpu.memory_space<vmem>>, vector<1x1x256xf32>
    %156 = vector.shape_cast %155 : vector<1x1x256xf32> to vector<1x256xf32>
    %157 = vector.broadcast %156 : vector<1x256xf32> to vector<16x256xf32>
    %158 = arith.mulf %154, %157 : vector<16x256xf32>
    %159 = arith.truncf %158 : vector<16x256xf32> to vector<16x256xbf16>
    %c0_123 = arith.constant 0 : index
    %c0_124 = arith.constant 0 : index
    %160 = vector.load %arg8[%c0_123, %c0_124] : memref<144x256xbf16, #tpu.memory_space<vmem>>, vector<16x256xbf16>
    tpu.vector_store %arg8[%c0_123, %c0_124], %159 {strides = array<i32>} : memref<144x256xbf16, #tpu.memory_space<vmem>>, vector<16x256xbf16>,
    %c16_i32_125 = arith.constant 16 : i32
    %161 = tpu.dynamic_rotate %153 by %c16_i32_125 dim 1 : vector<16x256xf32>, i32 -> vector<16x256xf32>
    %c1_126 = arith.constant 1 : index
    %c0_127 = arith.constant 0 : index
    %c0_128 = arith.constant 0 : index
    %162 = vector.load %arg5[%c1_126, %c0_127, %c0_128] : memref<9x1x256xf32, #tpu.memory_space<vmem>>, vector<1x1x256xf32>
    %163 = vector.shape_cast %162 : vector<1x1x256xf32> to vector<1x256xf32>
    %164 = vector.broadcast %163 : vector<1x256xf32> to vector<16x256xf32>
    %165 = arith.mulf %161, %164 : vector<16x256xf32>
    %166 = arith.truncf %165 : vector<16x256xf32> to vector<16x256xbf16>
    %c16_129 = arith.constant 16 : index
    %c0_130 = arith.constant 0 : index
    %167 = vector.load %arg8[%c16_129, %c0_130] : memref<144x256xbf16, #tpu.memory_space<vmem>>, vector<16x256xbf16>
    tpu.vector_store %arg8[%c16_129, %c0_130], %166 {strides = array<i32>} : memref<144x256xbf16, #tpu.memory_space<vmem>>, vector<16x256xbf16>,
    %c15_i32_131 = arith.constant 15 : i32
    %168 = tpu.dynamic_rotate %153 by %c15_i32_131 dim 1 : vector<16x256xf32>, i32 -> vector<16x256xf32>
    %c2_132 = arith.constant 2 : index
    %c0_133 = arith.constant 0 : index
    %c0_134 = arith.constant 0 : index
    %169 = vector.load %arg5[%c2_132, %c0_133, %c0_134] : memref<9x1x256xf32, #tpu.memory_space<vmem>>, vector<1x1x256xf32>
    %170 = vector.shape_cast %169 : vector<1x1x256xf32> to vector<1x256xf32>
    %171 = vector.broadcast %170 : vector<1x256xf32> to vector<16x256xf32>
    %172 = arith.mulf %168, %171 : vector<16x256xf32>
    %173 = arith.truncf %172 : vector<16x256xf32> to vector<16x256xbf16>
    %c32_135 = arith.constant 32 : index
    %c0_136 = arith.constant 0 : index
    %174 = vector.load %arg8[%c32_135, %c0_136] : memref<144x256xbf16, #tpu.memory_space<vmem>>, vector<16x256xbf16>
    tpu.vector_store %arg8[%c32_135, %c0_136], %173 {strides = array<i32>} : memref<144x256xbf16, #tpu.memory_space<vmem>>, vector<16x256xbf16>,
    %c1_i32_137 = arith.constant 1 : i32
    %175 = tpu.dynamic_rotate %153 by %c1_i32_137 dim 1 : vector<16x256xf32>, i32 -> vector<16x256xf32>
    %c3_138 = arith.constant 3 : index
    %c0_139 = arith.constant 0 : index
    %c0_140 = arith.constant 0 : index
    %176 = vector.load %arg5[%c3_138, %c0_139, %c0_140] : memref<9x1x256xf32, #tpu.memory_space<vmem>>, vector<1x1x256xf32>
    %177 = vector.shape_cast %176 : vector<1x1x256xf32> to vector<1x256xf32>
    %178 = vector.broadcast %177 : vector<1x256xf32> to vector<16x256xf32>
    %179 = arith.mulf %175, %178 : vector<16x256xf32>
    %180 = arith.truncf %179 : vector<16x256xf32> to vector<16x256xbf16>
    %c48_141 = arith.constant 48 : index
    %c0_142 = arith.constant 0 : index
    %181 = vector.load %arg8[%c48_141, %c0_142] : memref<144x256xbf16, #tpu.memory_space<vmem>>, vector<16x256xbf16>
    tpu.vector_store %arg8[%c48_141, %c0_142], %180 {strides = array<i32>} : memref<144x256xbf16, #tpu.memory_space<vmem>>, vector<16x256xbf16>,
    %182 = arith.truncf %153 : vector<16x256xf32> to vector<16x256xbf16>
    %c64_143 = arith.constant 64 : index
    %c0_144 = arith.constant 0 : index
    %183 = vector.load %arg8[%c64_143, %c0_144] : memref<144x256xbf16, #tpu.memory_space<vmem>>, vector<16x256xbf16>
    tpu.vector_store %arg8[%c64_143, %c0_144], %182 {strides = array<i32>} : memref<144x256xbf16, #tpu.memory_space<vmem>>, vector<16x256xbf16>,
    %c255_i32_145 = arith.constant 255 : i32
    %184 = tpu.dynamic_rotate %153 by %c255_i32_145 dim 1 : vector<16x256xf32>, i32 -> vector<16x256xf32>
    %c5_146 = arith.constant 5 : index
    %c0_147 = arith.constant 0 : index
    %c0_148 = arith.constant 0 : index
    %185 = vector.load %arg5[%c5_146, %c0_147, %c0_148] : memref<9x1x256xf32, #tpu.memory_space<vmem>>, vector<1x1x256xf32>
    %186 = vector.shape_cast %185 : vector<1x1x256xf32> to vector<1x256xf32>
    %187 = vector.broadcast %186 : vector<1x256xf32> to vector<16x256xf32>
    %188 = arith.mulf %184, %187 : vector<16x256xf32>
    %189 = arith.truncf %188 : vector<16x256xf32> to vector<16x256xbf16>
    %c80_149 = arith.constant 80 : index
    %c0_150 = arith.constant 0 : index
    %190 = vector.load %arg8[%c80_149, %c0_150] : memref<144x256xbf16, #tpu.memory_space<vmem>>, vector<16x256xbf16>
    tpu.vector_store %arg8[%c80_149, %c0_150], %189 {strides = array<i32>} : memref<144x256xbf16, #tpu.memory_space<vmem>>, vector<16x256xbf16>,
    %c241_i32_151 = arith.constant 241 : i32
    %191 = tpu.dynamic_rotate %153 by %c241_i32_151 dim 1 : vector<16x256xf32>, i32 -> vector<16x256xf32>
    %c6_152 = arith.constant 6 : index
    %c0_153 = arith.constant 0 : index
    %c0_154 = arith.constant 0 : index
    %192 = vector.load %arg5[%c6_152, %c0_153, %c0_154] : memref<9x1x256xf32, #tpu.memory_space<vmem>>, vector<1x1x256xf32>
    %193 = vector.shape_cast %192 : vector<1x1x256xf32> to vector<1x256xf32>
    %194 = vector.broadcast %193 : vector<1x256xf32> to vector<16x256xf32>
    %195 = arith.mulf %191, %194 : vector<16x256xf32>
    %196 = arith.truncf %195 : vector<16x256xf32> to vector<16x256xbf16>
    %c96_155 = arith.constant 96 : index
    %c0_156 = arith.constant 0 : index
    %197 = vector.load %arg8[%c96_155, %c0_156] : memref<144x256xbf16, #tpu.memory_space<vmem>>, vector<16x256xbf16>
    tpu.vector_store %arg8[%c96_155, %c0_156], %196 {strides = array<i32>} : memref<144x256xbf16, #tpu.memory_space<vmem>>, vector<16x256xbf16>,
    %c240_i32_157 = arith.constant 240 : i32
    %198 = tpu.dynamic_rotate %153 by %c240_i32_157 dim 1 : vector<16x256xf32>, i32 -> vector<16x256xf32>
    %c7_158 = arith.constant 7 : index
    %c0_159 = arith.constant 0 : index
    %c0_160 = arith.constant 0 : index
    %199 = vector.load %arg5[%c7_158, %c0_159, %c0_160] : memref<9x1x256xf32, #tpu.memory_space<vmem>>, vector<1x1x256xf32>
    %200 = vector.shape_cast %199 : vector<1x1x256xf32> to vector<1x256xf32>
    %201 = vector.broadcast %200 : vector<1x256xf32> to vector<16x256xf32>
    %202 = arith.mulf %198, %201 : vector<16x256xf32>
    %203 = arith.truncf %202 : vector<16x256xf32> to vector<16x256xbf16>
    %c112_161 = arith.constant 112 : index
    %c0_162 = arith.constant 0 : index
    %204 = vector.load %arg8[%c112_161, %c0_162] : memref<144x256xbf16, #tpu.memory_space<vmem>>, vector<16x256xbf16>
    tpu.vector_store %arg8[%c112_161, %c0_162], %203 {strides = array<i32>} : memref<144x256xbf16, #tpu.memory_space<vmem>>, vector<16x256xbf16>,
    %c239_i32_163 = arith.constant 239 : i32
    %205 = tpu.dynamic_rotate %153 by %c239_i32_163 dim 1 : vector<16x256xf32>, i32 -> vector<16x256xf32>
    %c8_164 = arith.constant 8 : index
    %c0_165 = arith.constant 0 : index
    %c0_166 = arith.constant 0 : index
    %206 = vector.load %arg5[%c8_164, %c0_165, %c0_166] : memref<9x1x256xf32, #tpu.memory_space<vmem>>, vector<1x1x256xf32>
    %207 = vector.shape_cast %206 : vector<1x1x256xf32> to vector<1x256xf32>
    %208 = vector.broadcast %207 : vector<1x256xf32> to vector<16x256xf32>
    %209 = arith.mulf %205, %208 : vector<16x256xf32>
    %210 = arith.truncf %209 : vector<16x256xf32> to vector<16x256xbf16>
    %c128_167 = arith.constant 128 : index
    %c0_168 = arith.constant 0 : index
    %211 = vector.load %arg8[%c128_167, %c0_168] : memref<144x256xbf16, #tpu.memory_space<vmem>>, vector<16x256xbf16>
    tpu.vector_store %arg8[%c128_167, %c0_168], %210 {strides = array<i32>} : memref<144x256xbf16, #tpu.memory_space<vmem>>, vector<16x256xbf16>,
    %c2_169 = arith.constant 2 : index
    %c0_170 = arith.constant 0 : index
    %c0_171 = arith.constant 0 : index
    %212 = vector.load %arg2[%c2_169, %c0_170, %c0_171] : memref<6x16x144xbf16, #tpu.memory_space<vmem>>, vector<1x16x144xbf16>
    %213 = vector.shape_cast %212 : vector<1x16x144xbf16> to vector<16x144xbf16>
    %c0_172 = arith.constant 0 : index
    %c0_173 = arith.constant 0 : index
    %214 = vector.load %arg8[%c0_172, %c0_173] : memref<144x256xbf16, #tpu.memory_space<vmem>>, vector<144x256xbf16>
    %cst_174 = arith.constant dense<0.000000e+00> : vector<16x256xf32>
    %215 = tpu.matmul %213, %214, %cst_174 {dimension_numbers = #tpu.dot_dimension_numbers<[1], [0], [0], [1], [0, 0, 1, 1], [], []>} : vector<16x144xbf16>, vector<144x256xbf16>, vector<16x256xf32> -> vector<16x256xf32>
    %c2_175 = arith.constant 2 : index
    %c0_176 = arith.constant 0 : index
    %c0_177 = arith.constant 0 : index
    %216 = vector.load %arg3[%c2_175, %c0_176, %c0_177] : memref<6x16x1xf32, #tpu.memory_space<vmem>>, vector<1x16x1xf32>
    %217 = vector.shape_cast %216 : vector<1x16x1xf32> to vector<16x1xf32>
    %218 = vector.broadcast %217 : vector<16x1xf32> to vector<16x256xf32>
    %219 = arith.mulf %215, %218 : vector<16x256xf32>
    %c2_178 = arith.constant 2 : index
    %c0_179 = arith.constant 0 : index
    %c0_180 = arith.constant 0 : index
    %220 = vector.load %arg4[%c2_178, %c0_179, %c0_180] : memref<6x16x1xf32, #tpu.memory_space<vmem>>, vector<1x16x1xf32>
    %221 = vector.shape_cast %220 : vector<1x16x1xf32> to vector<16x1xf32>
    %222 = vector.broadcast %221 : vector<16x1xf32> to vector<16x256xf32>
    %223 = arith.addf %219, %222 : vector<16x256xf32>
    %cst_181 = arith.constant 0.000000e+00 : f32
    %224 = vector.broadcast %cst_181 : f32 to vector<16x256xf32>
    %225 = arith.maximumf %223, %224 : vector<16x256xf32>
    %c0_182 = arith.constant 0 : index
    %c0_183 = arith.constant 0 : index
    %226 = vector.load %arg7[%c0_182, %c0_183] : memref<16x256xf32, #tpu.memory_space<vmem>>, vector<16x256xf32>
    tpu.vector_store %arg7[%c0_182, %c0_183], %225 {strides = array<i32>} : memref<16x256xf32, #tpu.memory_space<vmem>>, vector<16x256xf32>,
    %c0_184 = arith.constant 0 : index
    %c0_185 = arith.constant 0 : index
    %227 = vector.load %arg7[%c0_184, %c0_185] : memref<16x256xf32, #tpu.memory_space<vmem>>, vector<16x256xf32>
    %c17_i32_186 = arith.constant 17 : i32
    %228 = tpu.dynamic_rotate %227 by %c17_i32_186 dim 1 : vector<16x256xf32>, i32 -> vector<16x256xf32>
    %c0_187 = arith.constant 0 : index
    %c0_188 = arith.constant 0 : index
    %c0_189 = arith.constant 0 : index
    %229 = vector.load %arg5[%c0_187, %c0_188, %c0_189] : memref<9x1x256xf32, #tpu.memory_space<vmem>>, vector<1x1x256xf32>
    %230 = vector.shape_cast %229 : vector<1x1x256xf32> to vector<1x256xf32>
    %231 = vector.broadcast %230 : vector<1x256xf32> to vector<16x256xf32>
    %232 = arith.mulf %228, %231 : vector<16x256xf32>
    %233 = arith.truncf %232 : vector<16x256xf32> to vector<16x256xbf16>
    %c0_190 = arith.constant 0 : index
    %c0_191 = arith.constant 0 : index
    %234 = vector.load %arg8[%c0_190, %c0_191] : memref<144x256xbf16, #tpu.memory_space<vmem>>, vector<16x256xbf16>
    tpu.vector_store %arg8[%c0_190, %c0_191], %233 {strides = array<i32>} : memref<144x256xbf16, #tpu.memory_space<vmem>>, vector<16x256xbf16>,
    %c16_i32_192 = arith.constant 16 : i32
    %235 = tpu.dynamic_rotate %227 by %c16_i32_192 dim 1 : vector<16x256xf32>, i32 -> vector<16x256xf32>
    %c1_193 = arith.constant 1 : index
    %c0_194 = arith.constant 0 : index
    %c0_195 = arith.constant 0 : index
    %236 = vector.load %arg5[%c1_193, %c0_194, %c0_195] : memref<9x1x256xf32, #tpu.memory_space<vmem>>, vector<1x1x256xf32>
    %237 = vector.shape_cast %236 : vector<1x1x256xf32> to vector<1x256xf32>
    %238 = vector.broadcast %237 : vector<1x256xf32> to vector<16x256xf32>
    %239 = arith.mulf %235, %238 : vector<16x256xf32>
    %240 = arith.truncf %239 : vector<16x256xf32> to vector<16x256xbf16>
    %c16_196 = arith.constant 16 : index
    %c0_197 = arith.constant 0 : index
    %241 = vector.load %arg8[%c16_196, %c0_197] : memref<144x256xbf16, #tpu.memory_space<vmem>>, vector<16x256xbf16>
    tpu.vector_store %arg8[%c16_196, %c0_197], %240 {strides = array<i32>} : memref<144x256xbf16, #tpu.memory_space<vmem>>, vector<16x256xbf16>,
    %c15_i32_198 = arith.constant 15 : i32
    %242 = tpu.dynamic_rotate %227 by %c15_i32_198 dim 1 : vector<16x256xf32>, i32 -> vector<16x256xf32>
    %c2_199 = arith.constant 2 : index
    %c0_200 = arith.constant 0 : index
    %c0_201 = arith.constant 0 : index
    %243 = vector.load %arg5[%c2_199, %c0_200, %c0_201] : memref<9x1x256xf32, #tpu.memory_space<vmem>>, vector<1x1x256xf32>
    %244 = vector.shape_cast %243 : vector<1x1x256xf32> to vector<1x256xf32>
    %245 = vector.broadcast %244 : vector<1x256xf32> to vector<16x256xf32>
    %246 = arith.mulf %242, %245 : vector<16x256xf32>
    %247 = arith.truncf %246 : vector<16x256xf32> to vector<16x256xbf16>
    %c32_202 = arith.constant 32 : index
    %c0_203 = arith.constant 0 : index
    %248 = vector.load %arg8[%c32_202, %c0_203] : memref<144x256xbf16, #tpu.memory_space<vmem>>, vector<16x256xbf16>
    tpu.vector_store %arg8[%c32_202, %c0_203], %247 {strides = array<i32>} : memref<144x256xbf16, #tpu.memory_space<vmem>>, vector<16x256xbf16>,
    %c1_i32_204 = arith.constant 1 : i32
    %249 = tpu.dynamic_rotate %227 by %c1_i32_204 dim 1 : vector<16x256xf32>, i32 -> vector<16x256xf32>
    %c3_205 = arith.constant 3 : index
    %c0_206 = arith.constant 0 : index
    %c0_207 = arith.constant 0 : index
    %250 = vector.load %arg5[%c3_205, %c0_206, %c0_207] : memref<9x1x256xf32, #tpu.memory_space<vmem>>, vector<1x1x256xf32>
    %251 = vector.shape_cast %250 : vector<1x1x256xf32> to vector<1x256xf32>
    %252 = vector.broadcast %251 : vector<1x256xf32> to vector<16x256xf32>
    %253 = arith.mulf %249, %252 : vector<16x256xf32>
    %254 = arith.truncf %253 : vector<16x256xf32> to vector<16x256xbf16>
    %c48_208 = arith.constant 48 : index
    %c0_209 = arith.constant 0 : index
    %255 = vector.load %arg8[%c48_208, %c0_209] : memref<144x256xbf16, #tpu.memory_space<vmem>>, vector<16x256xbf16>
    tpu.vector_store %arg8[%c48_208, %c0_209], %254 {strides = array<i32>} : memref<144x256xbf16, #tpu.memory_space<vmem>>, vector<16x256xbf16>,
    %256 = arith.truncf %227 : vector<16x256xf32> to vector<16x256xbf16>
    %c64_210 = arith.constant 64 : index
    %c0_211 = arith.constant 0 : index
    %257 = vector.load %arg8[%c64_210, %c0_211] : memref<144x256xbf16, #tpu.memory_space<vmem>>, vector<16x256xbf16>
    tpu.vector_store %arg8[%c64_210, %c0_211], %256 {strides = array<i32>} : memref<144x256xbf16, #tpu.memory_space<vmem>>, vector<16x256xbf16>,
    %c255_i32_212 = arith.constant 255 : i32
    %258 = tpu.dynamic_rotate %227 by %c255_i32_212 dim 1 : vector<16x256xf32>, i32 -> vector<16x256xf32>
    %c5_213 = arith.constant 5 : index
    %c0_214 = arith.constant 0 : index
    %c0_215 = arith.constant 0 : index
    %259 = vector.load %arg5[%c5_213, %c0_214, %c0_215] : memref<9x1x256xf32, #tpu.memory_space<vmem>>, vector<1x1x256xf32>
    %260 = vector.shape_cast %259 : vector<1x1x256xf32> to vector<1x256xf32>
    %261 = vector.broadcast %260 : vector<1x256xf32> to vector<16x256xf32>
    %262 = arith.mulf %258, %261 : vector<16x256xf32>
    %263 = arith.truncf %262 : vector<16x256xf32> to vector<16x256xbf16>
    %c80_216 = arith.constant 80 : index
    %c0_217 = arith.constant 0 : index
    %264 = vector.load %arg8[%c80_216, %c0_217] : memref<144x256xbf16, #tpu.memory_space<vmem>>, vector<16x256xbf16>
    tpu.vector_store %arg8[%c80_216, %c0_217], %263 {strides = array<i32>} : memref<144x256xbf16, #tpu.memory_space<vmem>>, vector<16x256xbf16>,
    %c241_i32_218 = arith.constant 241 : i32
    %265 = tpu.dynamic_rotate %227 by %c241_i32_218 dim 1 : vector<16x256xf32>, i32 -> vector<16x256xf32>
    %c6_219 = arith.constant 6 : index
    %c0_220 = arith.constant 0 : index
    %c0_221 = arith.constant 0 : index
    %266 = vector.load %arg5[%c6_219, %c0_220, %c0_221] : memref<9x1x256xf32, #tpu.memory_space<vmem>>, vector<1x1x256xf32>
    %267 = vector.shape_cast %266 : vector<1x1x256xf32> to vector<1x256xf32>
    %268 = vector.broadcast %267 : vector<1x256xf32> to vector<16x256xf32>
    %269 = arith.mulf %265, %268 : vector<16x256xf32>
    %270 = arith.truncf %269 : vector<16x256xf32> to vector<16x256xbf16>
    %c96_222 = arith.constant 96 : index
    %c0_223 = arith.constant 0 : index
    %271 = vector.load %arg8[%c96_222, %c0_223] : memref<144x256xbf16, #tpu.memory_space<vmem>>, vector<16x256xbf16>
    tpu.vector_store %arg8[%c96_222, %c0_223], %270 {strides = array<i32>} : memref<144x256xbf16, #tpu.memory_space<vmem>>, vector<16x256xbf16>,
    %c240_i32_224 = arith.constant 240 : i32
    %272 = tpu.dynamic_rotate %227 by %c240_i32_224 dim 1 : vector<16x256xf32>, i32 -> vector<16x256xf32>
    %c7_225 = arith.constant 7 : index
    %c0_226 = arith.constant 0 : index
    %c0_227 = arith.constant 0 : index
    %273 = vector.load %arg5[%c7_225, %c0_226, %c0_227] : memref<9x1x256xf32, #tpu.memory_space<vmem>>, vector<1x1x256xf32>
    %274 = vector.shape_cast %273 : vector<1x1x256xf32> to vector<1x256xf32>
    %275 = vector.broadcast %274 : vector<1x256xf32> to vector<16x256xf32>
    %276 = arith.mulf %272, %275 : vector<16x256xf32>
    %277 = arith.truncf %276 : vector<16x256xf32> to vector<16x256xbf16>
    %c112_228 = arith.constant 112 : index
    %c0_229 = arith.constant 0 : index
    %278 = vector.load %arg8[%c112_228, %c0_229] : memref<144x256xbf16, #tpu.memory_space<vmem>>, vector<16x256xbf16>
    tpu.vector_store %arg8[%c112_228, %c0_229], %277 {strides = array<i32>} : memref<144x256xbf16, #tpu.memory_space<vmem>>, vector<16x256xbf16>,
    %c239_i32_230 = arith.constant 239 : i32
    %279 = tpu.dynamic_rotate %227 by %c239_i32_230 dim 1 : vector<16x256xf32>, i32 -> vector<16x256xf32>
    %c8_231 = arith.constant 8 : index
    %c0_232 = arith.constant 0 : index
    %c0_233 = arith.constant 0 : index
    %280 = vector.load %arg5[%c8_231, %c0_232, %c0_233] : memref<9x1x256xf32, #tpu.memory_space<vmem>>, vector<1x1x256xf32>
    %281 = vector.shape_cast %280 : vector<1x1x256xf32> to vector<1x256xf32>
    %282 = vector.broadcast %281 : vector<1x256xf32> to vector<16x256xf32>
    %283 = arith.mulf %279, %282 : vector<16x256xf32>
    %284 = arith.truncf %283 : vector<16x256xf32> to vector<16x256xbf16>
    %c128_234 = arith.constant 128 : index
    %c0_235 = arith.constant 0 : index
    %285 = vector.load %arg8[%c128_234, %c0_235] : memref<144x256xbf16, #tpu.memory_space<vmem>>, vector<16x256xbf16>
    tpu.vector_store %arg8[%c128_234, %c0_235], %284 {strides = array<i32>} : memref<144x256xbf16, #tpu.memory_space<vmem>>, vector<16x256xbf16>,
    %c3_236 = arith.constant 3 : index
    %c0_237 = arith.constant 0 : index
    %c0_238 = arith.constant 0 : index
    %286 = vector.load %arg2[%c3_236, %c0_237, %c0_238] : memref<6x16x144xbf16, #tpu.memory_space<vmem>>, vector<1x16x144xbf16>
    %287 = vector.shape_cast %286 : vector<1x16x144xbf16> to vector<16x144xbf16>
    %c0_239 = arith.constant 0 : index
    %c0_240 = arith.constant 0 : index
    %288 = vector.load %arg8[%c0_239, %c0_240] : memref<144x256xbf16, #tpu.memory_space<vmem>>, vector<144x256xbf16>
    %cst_241 = arith.constant dense<0.000000e+00> : vector<16x256xf32>
    %289 = tpu.matmul %287, %288, %cst_241 {dimension_numbers = #tpu.dot_dimension_numbers<[1], [0], [0], [1], [0, 0, 1, 1], [], []>} : vector<16x144xbf16>, vector<144x256xbf16>, vector<16x256xf32> -> vector<16x256xf32>
    %c3_242 = arith.constant 3 : index
    %c0_243 = arith.constant 0 : index
    %c0_244 = arith.constant 0 : index
    %290 = vector.load %arg3[%c3_242, %c0_243, %c0_244] : memref<6x16x1xf32, #tpu.memory_space<vmem>>, vector<1x16x1xf32>
    %291 = vector.shape_cast %290 : vector<1x16x1xf32> to vector<16x1xf32>
    %292 = vector.broadcast %291 : vector<16x1xf32> to vector<16x256xf32>
    %293 = arith.mulf %289, %292 : vector<16x256xf32>
    %c3_245 = arith.constant 3 : index
    %c0_246 = arith.constant 0 : index
    %c0_247 = arith.constant 0 : index
    %294 = vector.load %arg4[%c3_245, %c0_246, %c0_247] : memref<6x16x1xf32, #tpu.memory_space<vmem>>, vector<1x16x1xf32>
    %295 = vector.shape_cast %294 : vector<1x16x1xf32> to vector<16x1xf32>
    %296 = vector.broadcast %295 : vector<16x1xf32> to vector<16x256xf32>
    %297 = arith.addf %293, %296 : vector<16x256xf32>
    %cst_248 = arith.constant 0.000000e+00 : f32
    %298 = vector.broadcast %cst_248 : f32 to vector<16x256xf32>
    %299 = arith.maximumf %297, %298 : vector<16x256xf32>
    %c0_249 = arith.constant 0 : index
    %c0_250 = arith.constant 0 : index
    %300 = vector.load %arg7[%c0_249, %c0_250] : memref<16x256xf32, #tpu.memory_space<vmem>>, vector<16x256xf32>
    tpu.vector_store %arg7[%c0_249, %c0_250], %299 {strides = array<i32>} : memref<16x256xf32, #tpu.memory_space<vmem>>, vector<16x256xf32>,
    %c0_251 = arith.constant 0 : index
    %c0_252 = arith.constant 0 : index
    %301 = vector.load %arg7[%c0_251, %c0_252] : memref<16x256xf32, #tpu.memory_space<vmem>>, vector<16x256xf32>
    %c17_i32_253 = arith.constant 17 : i32
    %302 = tpu.dynamic_rotate %301 by %c17_i32_253 dim 1 : vector<16x256xf32>, i32 -> vector<16x256xf32>
    %c0_254 = arith.constant 0 : index
    %c0_255 = arith.constant 0 : index
    %c0_256 = arith.constant 0 : index
    %303 = vector.load %arg5[%c0_254, %c0_255, %c0_256] : memref<9x1x256xf32, #tpu.memory_space<vmem>>, vector<1x1x256xf32>
    %304 = vector.shape_cast %303 : vector<1x1x256xf32> to vector<1x256xf32>
    %305 = vector.broadcast %304 : vector<1x256xf32> to vector<16x256xf32>
    %306 = arith.mulf %302, %305 : vector<16x256xf32>
    %307 = arith.truncf %306 : vector<16x256xf32> to vector<16x256xbf16>
    %c0_257 = arith.constant 0 : index
    %c0_258 = arith.constant 0 : index
    %308 = vector.load %arg8[%c0_257, %c0_258] : memref<144x256xbf16, #tpu.memory_space<vmem>>, vector<16x256xbf16>
    tpu.vector_store %arg8[%c0_257, %c0_258], %307 {strides = array<i32>} : memref<144x256xbf16, #tpu.memory_space<vmem>>, vector<16x256xbf16>,
    %c16_i32_259 = arith.constant 16 : i32
    %309 = tpu.dynamic_rotate %301 by %c16_i32_259 dim 1 : vector<16x256xf32>, i32 -> vector<16x256xf32>
    %c1_260 = arith.constant 1 : index
    %c0_261 = arith.constant 0 : index
    %c0_262 = arith.constant 0 : index
    %310 = vector.load %arg5[%c1_260, %c0_261, %c0_262] : memref<9x1x256xf32, #tpu.memory_space<vmem>>, vector<1x1x256xf32>
    %311 = vector.shape_cast %310 : vector<1x1x256xf32> to vector<1x256xf32>
    %312 = vector.broadcast %311 : vector<1x256xf32> to vector<16x256xf32>
    %313 = arith.mulf %309, %312 : vector<16x256xf32>
    %314 = arith.truncf %313 : vector<16x256xf32> to vector<16x256xbf16>
    %c16_263 = arith.constant 16 : index
    %c0_264 = arith.constant 0 : index
    %315 = vector.load %arg8[%c16_263, %c0_264] : memref<144x256xbf16, #tpu.memory_space<vmem>>, vector<16x256xbf16>
    tpu.vector_store %arg8[%c16_263, %c0_264], %314 {strides = array<i32>} : memref<144x256xbf16, #tpu.memory_space<vmem>>, vector<16x256xbf16>,
    %c15_i32_265 = arith.constant 15 : i32
    %316 = tpu.dynamic_rotate %301 by %c15_i32_265 dim 1 : vector<16x256xf32>, i32 -> vector<16x256xf32>
    %c2_266 = arith.constant 2 : index
    %c0_267 = arith.constant 0 : index
    %c0_268 = arith.constant 0 : index
    %317 = vector.load %arg5[%c2_266, %c0_267, %c0_268] : memref<9x1x256xf32, #tpu.memory_space<vmem>>, vector<1x1x256xf32>
    %318 = vector.shape_cast %317 : vector<1x1x256xf32> to vector<1x256xf32>
    %319 = vector.broadcast %318 : vector<1x256xf32> to vector<16x256xf32>
    %320 = arith.mulf %316, %319 : vector<16x256xf32>
    %321 = arith.truncf %320 : vector<16x256xf32> to vector<16x256xbf16>
    %c32_269 = arith.constant 32 : index
    %c0_270 = arith.constant 0 : index
    %322 = vector.load %arg8[%c32_269, %c0_270] : memref<144x256xbf16, #tpu.memory_space<vmem>>, vector<16x256xbf16>
    tpu.vector_store %arg8[%c32_269, %c0_270], %321 {strides = array<i32>} : memref<144x256xbf16, #tpu.memory_space<vmem>>, vector<16x256xbf16>,
    %c1_i32_271 = arith.constant 1 : i32
    %323 = tpu.dynamic_rotate %301 by %c1_i32_271 dim 1 : vector<16x256xf32>, i32 -> vector<16x256xf32>
    %c3_272 = arith.constant 3 : index
    %c0_273 = arith.constant 0 : index
    %c0_274 = arith.constant 0 : index
    %324 = vector.load %arg5[%c3_272, %c0_273, %c0_274] : memref<9x1x256xf32, #tpu.memory_space<vmem>>, vector<1x1x256xf32>
    %325 = vector.shape_cast %324 : vector<1x1x256xf32> to vector<1x256xf32>
    %326 = vector.broadcast %325 : vector<1x256xf32> to vector<16x256xf32>
    %327 = arith.mulf %323, %326 : vector<16x256xf32>
    %328 = arith.truncf %327 : vector<16x256xf32> to vector<16x256xbf16>
    %c48_275 = arith.constant 48 : index
    %c0_276 = arith.constant 0 : index
    %329 = vector.load %arg8[%c48_275, %c0_276] : memref<144x256xbf16, #tpu.memory_space<vmem>>, vector<16x256xbf16>
    tpu.vector_store %arg8[%c48_275, %c0_276], %328 {strides = array<i32>} : memref<144x256xbf16, #tpu.memory_space<vmem>>, vector<16x256xbf16>,
    %330 = arith.truncf %301 : vector<16x256xf32> to vector<16x256xbf16>
    %c64_277 = arith.constant 64 : index
    %c0_278 = arith.constant 0 : index
    %331 = vector.load %arg8[%c64_277, %c0_278] : memref<144x256xbf16, #tpu.memory_space<vmem>>, vector<16x256xbf16>
    tpu.vector_store %arg8[%c64_277, %c0_278], %330 {strides = array<i32>} : memref<144x256xbf16, #tpu.memory_space<vmem>>, vector<16x256xbf16>,
    %c255_i32_279 = arith.constant 255 : i32
    %332 = tpu.dynamic_rotate %301 by %c255_i32_279 dim 1 : vector<16x256xf32>, i32 -> vector<16x256xf32>
    %c5_280 = arith.constant 5 : index
    %c0_281 = arith.constant 0 : index
    %c0_282 = arith.constant 0 : index
    %333 = vector.load %arg5[%c5_280, %c0_281, %c0_282] : memref<9x1x256xf32, #tpu.memory_space<vmem>>, vector<1x1x256xf32>
    %334 = vector.shape_cast %333 : vector<1x1x256xf32> to vector<1x256xf32>
    %335 = vector.broadcast %334 : vector<1x256xf32> to vector<16x256xf32>
    %336 = arith.mulf %332, %335 : vector<16x256xf32>
    %337 = arith.truncf %336 : vector<16x256xf32> to vector<16x256xbf16>
    %c80_283 = arith.constant 80 : index
    %c0_284 = arith.constant 0 : index
    %338 = vector.load %arg8[%c80_283, %c0_284] : memref<144x256xbf16, #tpu.memory_space<vmem>>, vector<16x256xbf16>
    tpu.vector_store %arg8[%c80_283, %c0_284], %337 {strides = array<i32>} : memref<144x256xbf16, #tpu.memory_space<vmem>>, vector<16x256xbf16>,
    %c241_i32_285 = arith.constant 241 : i32
    %339 = tpu.dynamic_rotate %301 by %c241_i32_285 dim 1 : vector<16x256xf32>, i32 -> vector<16x256xf32>
    %c6_286 = arith.constant 6 : index
    %c0_287 = arith.constant 0 : index
    %c0_288 = arith.constant 0 : index
    %340 = vector.load %arg5[%c6_286, %c0_287, %c0_288] : memref<9x1x256xf32, #tpu.memory_space<vmem>>, vector<1x1x256xf32>
    %341 = vector.shape_cast %340 : vector<1x1x256xf32> to vector<1x256xf32>
    %342 = vector.broadcast %341 : vector<1x256xf32> to vector<16x256xf32>
    %343 = arith.mulf %339, %342 : vector<16x256xf32>
    %344 = arith.truncf %343 : vector<16x256xf32> to vector<16x256xbf16>
    %c96_289 = arith.constant 96 : index
    %c0_290 = arith.constant 0 : index
    %345 = vector.load %arg8[%c96_289, %c0_290] : memref<144x256xbf16, #tpu.memory_space<vmem>>, vector<16x256xbf16>
    tpu.vector_store %arg8[%c96_289, %c0_290], %344 {strides = array<i32>} : memref<144x256xbf16, #tpu.memory_space<vmem>>, vector<16x256xbf16>,
    %c240_i32_291 = arith.constant 240 : i32
    %346 = tpu.dynamic_rotate %301 by %c240_i32_291 dim 1 : vector<16x256xf32>, i32 -> vector<16x256xf32>
    %c7_292 = arith.constant 7 : index
    %c0_293 = arith.constant 0 : index
    %c0_294 = arith.constant 0 : index
    %347 = vector.load %arg5[%c7_292, %c0_293, %c0_294] : memref<9x1x256xf32, #tpu.memory_space<vmem>>, vector<1x1x256xf32>
    %348 = vector.shape_cast %347 : vector<1x1x256xf32> to vector<1x256xf32>
    %349 = vector.broadcast %348 : vector<1x256xf32> to vector<16x256xf32>
    %350 = arith.mulf %346, %349 : vector<16x256xf32>
    %351 = arith.truncf %350 : vector<16x256xf32> to vector<16x256xbf16>
    %c112_295 = arith.constant 112 : index
    %c0_296 = arith.constant 0 : index
    %352 = vector.load %arg8[%c112_295, %c0_296] : memref<144x256xbf16, #tpu.memory_space<vmem>>, vector<16x256xbf16>
    tpu.vector_store %arg8[%c112_295, %c0_296], %351 {strides = array<i32>} : memref<144x256xbf16, #tpu.memory_space<vmem>>, vector<16x256xbf16>,
    %c239_i32_297 = arith.constant 239 : i32
    %353 = tpu.dynamic_rotate %301 by %c239_i32_297 dim 1 : vector<16x256xf32>, i32 -> vector<16x256xf32>
    %c8_298 = arith.constant 8 : index
    %c0_299 = arith.constant 0 : index
    %c0_300 = arith.constant 0 : index
    %354 = vector.load %arg5[%c8_298, %c0_299, %c0_300] : memref<9x1x256xf32, #tpu.memory_space<vmem>>, vector<1x1x256xf32>
    %355 = vector.shape_cast %354 : vector<1x1x256xf32> to vector<1x256xf32>
    %356 = vector.broadcast %355 : vector<1x256xf32> to vector<16x256xf32>
    %357 = arith.mulf %353, %356 : vector<16x256xf32>
    %358 = arith.truncf %357 : vector<16x256xf32> to vector<16x256xbf16>
    %c128_301 = arith.constant 128 : index
    %c0_302 = arith.constant 0 : index
    %359 = vector.load %arg8[%c128_301, %c0_302] : memref<144x256xbf16, #tpu.memory_space<vmem>>, vector<16x256xbf16>
    tpu.vector_store %arg8[%c128_301, %c0_302], %358 {strides = array<i32>} : memref<144x256xbf16, #tpu.memory_space<vmem>>, vector<16x256xbf16>,
    %c4 = arith.constant 4 : index
    %c0_303 = arith.constant 0 : index
    %c0_304 = arith.constant 0 : index
    %360 = vector.load %arg2[%c4, %c0_303, %c0_304] : memref<6x16x144xbf16, #tpu.memory_space<vmem>>, vector<1x16x144xbf16>
    %361 = vector.shape_cast %360 : vector<1x16x144xbf16> to vector<16x144xbf16>
    %c0_305 = arith.constant 0 : index
    %c0_306 = arith.constant 0 : index
    %362 = vector.load %arg8[%c0_305, %c0_306] : memref<144x256xbf16, #tpu.memory_space<vmem>>, vector<144x256xbf16>
    %cst_307 = arith.constant dense<0.000000e+00> : vector<16x256xf32>
    %363 = tpu.matmul %361, %362, %cst_307 {dimension_numbers = #tpu.dot_dimension_numbers<[1], [0], [0], [1], [0, 0, 1, 1], [], []>} : vector<16x144xbf16>, vector<144x256xbf16>, vector<16x256xf32> -> vector<16x256xf32>
    %c4_308 = arith.constant 4 : index
    %c0_309 = arith.constant 0 : index
    %c0_310 = arith.constant 0 : index
    %364 = vector.load %arg3[%c4_308, %c0_309, %c0_310] : memref<6x16x1xf32, #tpu.memory_space<vmem>>, vector<1x16x1xf32>
    %365 = vector.shape_cast %364 : vector<1x16x1xf32> to vector<16x1xf32>
    %366 = vector.broadcast %365 : vector<16x1xf32> to vector<16x256xf32>
    %367 = arith.mulf %363, %366 : vector<16x256xf32>
    %c4_311 = arith.constant 4 : index
    %c0_312 = arith.constant 0 : index
    %c0_313 = arith.constant 0 : index
    %368 = vector.load %arg4[%c4_311, %c0_312, %c0_313] : memref<6x16x1xf32, #tpu.memory_space<vmem>>, vector<1x16x1xf32>
    %369 = vector.shape_cast %368 : vector<1x16x1xf32> to vector<16x1xf32>
    %370 = vector.broadcast %369 : vector<16x1xf32> to vector<16x256xf32>
    %371 = arith.addf %367, %370 : vector<16x256xf32>
    %cst_314 = arith.constant 0.000000e+00 : f32
    %372 = vector.broadcast %cst_314 : f32 to vector<16x256xf32>
    %373 = arith.maximumf %371, %372 : vector<16x256xf32>
    %c0_315 = arith.constant 0 : index
    %c0_316 = arith.constant 0 : index
    %374 = vector.load %arg7[%c0_315, %c0_316] : memref<16x256xf32, #tpu.memory_space<vmem>>, vector<16x256xf32>
    tpu.vector_store %arg7[%c0_315, %c0_316], %373 {strides = array<i32>} : memref<16x256xf32, #tpu.memory_space<vmem>>, vector<16x256xf32>,
    %c0_317 = arith.constant 0 : index
    %c0_318 = arith.constant 0 : index
    %375 = vector.load %arg7[%c0_317, %c0_318] : memref<16x256xf32, #tpu.memory_space<vmem>>, vector<16x256xf32>
    %c17_i32_319 = arith.constant 17 : i32
    %376 = tpu.dynamic_rotate %375 by %c17_i32_319 dim 1 : vector<16x256xf32>, i32 -> vector<16x256xf32>
    %c0_320 = arith.constant 0 : index
    %c0_321 = arith.constant 0 : index
    %c0_322 = arith.constant 0 : index
    %377 = vector.load %arg5[%c0_320, %c0_321, %c0_322] : memref<9x1x256xf32, #tpu.memory_space<vmem>>, vector<1x1x256xf32>
    %378 = vector.shape_cast %377 : vector<1x1x256xf32> to vector<1x256xf32>
    %379 = vector.broadcast %378 : vector<1x256xf32> to vector<16x256xf32>
    %380 = arith.mulf %376, %379 : vector<16x256xf32>
    %381 = arith.truncf %380 : vector<16x256xf32> to vector<16x256xbf16>
    %c0_323 = arith.constant 0 : index
    %c0_324 = arith.constant 0 : index
    %382 = vector.load %arg8[%c0_323, %c0_324] : memref<144x256xbf16, #tpu.memory_space<vmem>>, vector<16x256xbf16>
    tpu.vector_store %arg8[%c0_323, %c0_324], %381 {strides = array<i32>} : memref<144x256xbf16, #tpu.memory_space<vmem>>, vector<16x256xbf16>,
    %c16_i32_325 = arith.constant 16 : i32
    %383 = tpu.dynamic_rotate %375 by %c16_i32_325 dim 1 : vector<16x256xf32>, i32 -> vector<16x256xf32>
    %c1_326 = arith.constant 1 : index
    %c0_327 = arith.constant 0 : index
    %c0_328 = arith.constant 0 : index
    %384 = vector.load %arg5[%c1_326, %c0_327, %c0_328] : memref<9x1x256xf32, #tpu.memory_space<vmem>>, vector<1x1x256xf32>
    %385 = vector.shape_cast %384 : vector<1x1x256xf32> to vector<1x256xf32>
    %386 = vector.broadcast %385 : vector<1x256xf32> to vector<16x256xf32>
    %387 = arith.mulf %383, %386 : vector<16x256xf32>
    %388 = arith.truncf %387 : vector<16x256xf32> to vector<16x256xbf16>
    %c16_329 = arith.constant 16 : index
    %c0_330 = arith.constant 0 : index
    %389 = vector.load %arg8[%c16_329, %c0_330] : memref<144x256xbf16, #tpu.memory_space<vmem>>, vector<16x256xbf16>
    tpu.vector_store %arg8[%c16_329, %c0_330], %388 {strides = array<i32>} : memref<144x256xbf16, #tpu.memory_space<vmem>>, vector<16x256xbf16>,
    %c15_i32_331 = arith.constant 15 : i32
    %390 = tpu.dynamic_rotate %375 by %c15_i32_331 dim 1 : vector<16x256xf32>, i32 -> vector<16x256xf32>
    %c2_332 = arith.constant 2 : index
    %c0_333 = arith.constant 0 : index
    %c0_334 = arith.constant 0 : index
    %391 = vector.load %arg5[%c2_332, %c0_333, %c0_334] : memref<9x1x256xf32, #tpu.memory_space<vmem>>, vector<1x1x256xf32>
    %392 = vector.shape_cast %391 : vector<1x1x256xf32> to vector<1x256xf32>
    %393 = vector.broadcast %392 : vector<1x256xf32> to vector<16x256xf32>
    %394 = arith.mulf %390, %393 : vector<16x256xf32>
    %395 = arith.truncf %394 : vector<16x256xf32> to vector<16x256xbf16>
    %c32_335 = arith.constant 32 : index
    %c0_336 = arith.constant 0 : index
    %396 = vector.load %arg8[%c32_335, %c0_336] : memref<144x256xbf16, #tpu.memory_space<vmem>>, vector<16x256xbf16>
    tpu.vector_store %arg8[%c32_335, %c0_336], %395 {strides = array<i32>} : memref<144x256xbf16, #tpu.memory_space<vmem>>, vector<16x256xbf16>,
    %c1_i32_337 = arith.constant 1 : i32
    %397 = tpu.dynamic_rotate %375 by %c1_i32_337 dim 1 : vector<16x256xf32>, i32 -> vector<16x256xf32>
    %c3_338 = arith.constant 3 : index
    %c0_339 = arith.constant 0 : index
    %c0_340 = arith.constant 0 : index
    %398 = vector.load %arg5[%c3_338, %c0_339, %c0_340] : memref<9x1x256xf32, #tpu.memory_space<vmem>>, vector<1x1x256xf32>
    %399 = vector.shape_cast %398 : vector<1x1x256xf32> to vector<1x256xf32>
    %400 = vector.broadcast %399 : vector<1x256xf32> to vector<16x256xf32>
    %401 = arith.mulf %397, %400 : vector<16x256xf32>
    %402 = arith.truncf %401 : vector<16x256xf32> to vector<16x256xbf16>
    %c48_341 = arith.constant 48 : index
    %c0_342 = arith.constant 0 : index
    %403 = vector.load %arg8[%c48_341, %c0_342] : memref<144x256xbf16, #tpu.memory_space<vmem>>, vector<16x256xbf16>
    tpu.vector_store %arg8[%c48_341, %c0_342], %402 {strides = array<i32>} : memref<144x256xbf16, #tpu.memory_space<vmem>>, vector<16x256xbf16>,
    %404 = arith.truncf %375 : vector<16x256xf32> to vector<16x256xbf16>
    %c64_343 = arith.constant 64 : index
    %c0_344 = arith.constant 0 : index
    %405 = vector.load %arg8[%c64_343, %c0_344] : memref<144x256xbf16, #tpu.memory_space<vmem>>, vector<16x256xbf16>
    tpu.vector_store %arg8[%c64_343, %c0_344], %404 {strides = array<i32>} : memref<144x256xbf16, #tpu.memory_space<vmem>>, vector<16x256xbf16>,
    %c255_i32_345 = arith.constant 255 : i32
    %406 = tpu.dynamic_rotate %375 by %c255_i32_345 dim 1 : vector<16x256xf32>, i32 -> vector<16x256xf32>
    %c5_346 = arith.constant 5 : index
    %c0_347 = arith.constant 0 : index
    %c0_348 = arith.constant 0 : index
    %407 = vector.load %arg5[%c5_346, %c0_347, %c0_348] : memref<9x1x256xf32, #tpu.memory_space<vmem>>, vector<1x1x256xf32>
    %408 = vector.shape_cast %407 : vector<1x1x256xf32> to vector<1x256xf32>
    %409 = vector.broadcast %408 : vector<1x256xf32> to vector<16x256xf32>
    %410 = arith.mulf %406, %409 : vector<16x256xf32>
    %411 = arith.truncf %410 : vector<16x256xf32> to vector<16x256xbf16>
    %c80_349 = arith.constant 80 : index
    %c0_350 = arith.constant 0 : index
    %412 = vector.load %arg8[%c80_349, %c0_350] : memref<144x256xbf16, #tpu.memory_space<vmem>>, vector<16x256xbf16>
    tpu.vector_store %arg8[%c80_349, %c0_350], %411 {strides = array<i32>} : memref<144x256xbf16, #tpu.memory_space<vmem>>, vector<16x256xbf16>,
    %c241_i32_351 = arith.constant 241 : i32
    %413 = tpu.dynamic_rotate %375 by %c241_i32_351 dim 1 : vector<16x256xf32>, i32 -> vector<16x256xf32>
    %c6_352 = arith.constant 6 : index
    %c0_353 = arith.constant 0 : index
    %c0_354 = arith.constant 0 : index
    %414 = vector.load %arg5[%c6_352, %c0_353, %c0_354] : memref<9x1x256xf32, #tpu.memory_space<vmem>>, vector<1x1x256xf32>
    %415 = vector.shape_cast %414 : vector<1x1x256xf32> to vector<1x256xf32>
    %416 = vector.broadcast %415 : vector<1x256xf32> to vector<16x256xf32>
    %417 = arith.mulf %413, %416 : vector<16x256xf32>
    %418 = arith.truncf %417 : vector<16x256xf32> to vector<16x256xbf16>
    %c96_355 = arith.constant 96 : index
    %c0_356 = arith.constant 0 : index
    %419 = vector.load %arg8[%c96_355, %c0_356] : memref<144x256xbf16, #tpu.memory_space<vmem>>, vector<16x256xbf16>
    tpu.vector_store %arg8[%c96_355, %c0_356], %418 {strides = array<i32>} : memref<144x256xbf16, #tpu.memory_space<vmem>>, vector<16x256xbf16>,
    %c240_i32_357 = arith.constant 240 : i32
    %420 = tpu.dynamic_rotate %375 by %c240_i32_357 dim 1 : vector<16x256xf32>, i32 -> vector<16x256xf32>
    %c7_358 = arith.constant 7 : index
    %c0_359 = arith.constant 0 : index
    %c0_360 = arith.constant 0 : index
    %421 = vector.load %arg5[%c7_358, %c0_359, %c0_360] : memref<9x1x256xf32, #tpu.memory_space<vmem>>, vector<1x1x256xf32>
    %422 = vector.shape_cast %421 : vector<1x1x256xf32> to vector<1x256xf32>
    %423 = vector.broadcast %422 : vector<1x256xf32> to vector<16x256xf32>
    %424 = arith.mulf %420, %423 : vector<16x256xf32>
    %425 = arith.truncf %424 : vector<16x256xf32> to vector<16x256xbf16>
    %c112_361 = arith.constant 112 : index
    %c0_362 = arith.constant 0 : index
    %426 = vector.load %arg8[%c112_361, %c0_362] : memref<144x256xbf16, #tpu.memory_space<vmem>>, vector<16x256xbf16>
    tpu.vector_store %arg8[%c112_361, %c0_362], %425 {strides = array<i32>} : memref<144x256xbf16, #tpu.memory_space<vmem>>, vector<16x256xbf16>,
    %c239_i32_363 = arith.constant 239 : i32
    %427 = tpu.dynamic_rotate %375 by %c239_i32_363 dim 1 : vector<16x256xf32>, i32 -> vector<16x256xf32>
    %c8_364 = arith.constant 8 : index
    %c0_365 = arith.constant 0 : index
    %c0_366 = arith.constant 0 : index
    %428 = vector.load %arg5[%c8_364, %c0_365, %c0_366] : memref<9x1x256xf32, #tpu.memory_space<vmem>>, vector<1x1x256xf32>
    %429 = vector.shape_cast %428 : vector<1x1x256xf32> to vector<1x256xf32>
    %430 = vector.broadcast %429 : vector<1x256xf32> to vector<16x256xf32>
    %431 = arith.mulf %427, %430 : vector<16x256xf32>
    %432 = arith.truncf %431 : vector<16x256xf32> to vector<16x256xbf16>
    %c128_367 = arith.constant 128 : index
    %c0_368 = arith.constant 0 : index
    %433 = vector.load %arg8[%c128_367, %c0_368] : memref<144x256xbf16, #tpu.memory_space<vmem>>, vector<16x256xbf16>
    tpu.vector_store %arg8[%c128_367, %c0_368], %432 {strides = array<i32>} : memref<144x256xbf16, #tpu.memory_space<vmem>>, vector<16x256xbf16>,
    %c5_369 = arith.constant 5 : index
    %c0_370 = arith.constant 0 : index
    %c0_371 = arith.constant 0 : index
    %434 = vector.load %arg2[%c5_369, %c0_370, %c0_371] : memref<6x16x144xbf16, #tpu.memory_space<vmem>>, vector<1x16x144xbf16>
    %435 = vector.shape_cast %434 : vector<1x16x144xbf16> to vector<16x144xbf16>
    %c0_372 = arith.constant 0 : index
    %c0_373 = arith.constant 0 : index
    %436 = vector.load %arg8[%c0_372, %c0_373] : memref<144x256xbf16, #tpu.memory_space<vmem>>, vector<144x256xbf16>
    %cst_374 = arith.constant dense<0.000000e+00> : vector<16x256xf32>
    %437 = tpu.matmul %435, %436, %cst_374 {dimension_numbers = #tpu.dot_dimension_numbers<[1], [0], [0], [1], [0, 0, 1, 1], [], []>} : vector<16x144xbf16>, vector<144x256xbf16>, vector<16x256xf32> -> vector<16x256xf32>
    %c5_375 = arith.constant 5 : index
    %c0_376 = arith.constant 0 : index
    %c0_377 = arith.constant 0 : index
    %438 = vector.load %arg3[%c5_375, %c0_376, %c0_377] : memref<6x16x1xf32, #tpu.memory_space<vmem>>, vector<1x16x1xf32>
    %439 = vector.shape_cast %438 : vector<1x16x1xf32> to vector<16x1xf32>
    %440 = vector.broadcast %439 : vector<16x1xf32> to vector<16x256xf32>
    %441 = arith.mulf %437, %440 : vector<16x256xf32>
    %c5_378 = arith.constant 5 : index
    %c0_379 = arith.constant 0 : index
    %c0_380 = arith.constant 0 : index
    %442 = vector.load %arg4[%c5_378, %c0_379, %c0_380] : memref<6x16x1xf32, #tpu.memory_space<vmem>>, vector<1x16x1xf32>
    %443 = vector.shape_cast %442 : vector<1x16x1xf32> to vector<16x1xf32>
    %444 = vector.broadcast %443 : vector<16x1xf32> to vector<16x256xf32>
    %445 = arith.addf %441, %444 : vector<16x256xf32>
    %cst_381 = arith.constant 0.000000e+00 : f32
    %446 = vector.broadcast %cst_381 : f32 to vector<16x256xf32>
    %447 = arith.maximumf %445, %446 : vector<16x256xf32>
    %c0_382 = arith.constant 0 : index
    %c0_383 = arith.constant 0 : index
    %448 = vector.load %arg7[%c0_382, %c0_383] : memref<16x256xf32, #tpu.memory_space<vmem>>, vector<16x256xf32>
    tpu.vector_store %arg7[%c0_382, %c0_383], %447 {strides = array<i32>} : memref<16x256xf32, #tpu.memory_space<vmem>>, vector<16x256xf32>,
    %c0_384 = arith.constant 0 : index
    %c0_385 = arith.constant 0 : index
    %449 = vector.load %arg7[%c0_384, %c0_385] : memref<16x256xf32, #tpu.memory_space<vmem>>, vector<3x256xf32>
    %c0_386 = arith.constant 0 : index
    %c0_387 = arith.constant 0 : index
    %c0_388 = arith.constant 0 : index
    %450 = vector.load %arg1[%c0_386, %c0_387, %c0_388] : memref<1x3x256xf32, #tpu.memory_space<vmem>>, vector<1x3x256xf32>
    %451 = vector.shape_cast %450 : vector<1x3x256xf32> to vector<3x256xf32>
    %452 = arith.addf %449, %451 : vector<3x256xf32>
    %c0_389 = arith.constant 0 : index
    %c0_390 = arith.constant 0 : index
    %c0_391 = arith.constant 0 : index
    %453 = vector.load %arg6[%c0_389, %c0_390, %c0_391] : memref<1x3x256xf32, #tpu.memory_space<vmem>>, vector<1x3x256xf32>
    %454 = vector.shape_cast %453 : vector<1x3x256xf32> to vector<3x256xf32>
    %455 = vector.shape_cast %452 : vector<3x256xf32> to vector<1x3x256xf32>
    tpu.vector_store %arg6[%c0_389, %c0_390, %c0_391], %455 {strides = array<i32>} : memref<1x3x256xf32, #tpu.memory_space<vmem>>, vector<1x3x256xf32>,
    return
  }
  func.func @transform_0(%arg0: i32) -> (i32, i32, i32) {
    %c0_i32 = arith.constant 0 : i32
    %c0_i32_0 = arith.constant 0 : i32
    %c0_i32_1 = arith.constant 0 : i32
    return %arg0, %c0_i32, %c0_i32_0 : i32, i32, i32
  }
  func.func @transform_1(%arg0: i32) -> (i32, i32, i32) {
    %c0_i32 = arith.constant 0 : i32
    %c0_i32_0 = arith.constant 0 : i32
    %c0_i32_1 = arith.constant 0 : i32
    %c0_i32_2 = arith.constant 0 : i32
    return %c0_i32, %c0_i32_0, %c0_i32_1 : i32, i32, i32
  }
  func.func @transform_2(%arg0: i32) -> (i32, i32, i32) {
    %c0_i32 = arith.constant 0 : i32
    %c0_i32_0 = arith.constant 0 : i32
    %c0_i32_1 = arith.constant 0 : i32
    %c0_i32_2 = arith.constant 0 : i32
    return %c0_i32, %c0_i32_0, %c0_i32_1 : i32, i32, i32
  }
  func.func @transform_3(%arg0: i32) -> (i32, i32, i32) {
    %c0_i32 = arith.constant 0 : i32
    %c0_i32_0 = arith.constant 0 : i32
    %c0_i32_1 = arith.constant 0 : i32
    %c0_i32_2 = arith.constant 0 : i32
    return %c0_i32, %c0_i32_0, %c0_i32_1 : i32, i32, i32
  }
  func.func @transform_4(%arg0: i32) -> (i32, i32, i32) {
    %c0_i32 = arith.constant 0 : i32
    %c0_i32_0 = arith.constant 0 : i32
    %c0_i32_1 = arith.constant 0 : i32
    %c0_i32_2 = arith.constant 0 : i32
    return %c0_i32, %c0_i32_0, %c0_i32_1 : i32, i32, i32
  }
  func.func @transform_5(%arg0: i32) -> (i32, i32, i32) {
    %c0_i32 = arith.constant 0 : i32
    %c0_i32_0 = arith.constant 0 : i32
    %c0_i32_1 = arith.constant 0 : i32
    return %arg0, %c0_i32, %c0_i32_0 : i32, i32, i32
  }
}

</mosaic_0001>

<llo_original>
// kernel: norm_identity_forward.1
$region0: #{norm_identity_forward.1}
  #allocation0 [shape = 'u32[]', space=smem, size = 0x4, offset = 0x4, fixed_abs, tag = 'smem constant byte address 0x4 - core index']
  #allocation1 [shape = 'u32[72,128]{1,0:T(1,128)}', space=vmem, size = 0x9000, scoped, tag = 'internal scratch']
  #allocation2 [shape = 'f32[16,256]{1,0:T(8,128)}', space=vmem, size = 0x4000, scoped, tag = 'scratch operand']
  #allocation3 [shape = 'bf16[144,256]{1,0:T(8,128)(2,1)}', space=vmem, size = 0x12000, scoped, tag = 'scratch operand']
  %s0 = inlined_call_operand.vmem [shape: f32[2,3,256], index: 0, kind: input, shape index: {}]
  %s1 = inlined_call_operand.vmem [shape: bf16[6,16,144], index: 1, kind: input, shape index: {}]
  %s2 = inlined_call_operand.vmem [shape: f32[6,16,1], index: 2, kind: input, shape index: {}]
  %s3 = inlined_call_operand.vmem [shape: f32[6,16,1], index: 3, kind: input, shape index: {}]
  %s4 = inlined_call_operand.vmem [shape: f32[9,1,256], index: 4, kind: input, shape index: {}]
  %s5 = inlined_call_operand.vmem [shape: f32[2,3,256], index: 5, kind: output, shape index: {}]
  %s6 = sld [smem:[#allocation0]]
  $region53: #{norm_identity_forward.1} parent=0
    _
  %s8 = ssub.s32 1, %s6
  %s9 = scalar_select 0, %s8, %s6
  loop: start=0, step=1, limit=4
  $region2: #{norm_identity_forward.1} parent=0 // loop_pre_header
    _
  $region3: #{norm_identity_forward.1} parent=0 // loop_header
    %s11 = sphi 0, %s15
    %p12 = scmp.ge.s32.totalorder %s11, 4
    %s21 = sphi 0, %s23
    %s24 = sphi 0, %s21
    %s25 = sphi 0, %s24
    %s41 = sphi 0, %s25
    %s45 = sphi 0, %s45
    %s47 = sphi 0, %s45
    %s48 = sphi 0, %s47
    %s62 = sphi 0, %s48
    %s66 = sphi 0, %s66
    %s68 = sphi 0, %s66
    %s69 = sphi 0, %s68
    %s83 = sphi 0, %s69
    %s87 = sphi 0, %s87
    %s89 = sphi 0, %s87
    %s90 = sphi 0, %s89
    %s104 = sphi 0, %s90
    %s108 = sphi 0, %s108
    %s110 = sphi 0, %s108
    %s111 = sphi 0, %s110
    %s125 = sphi 0, %s111
    %s131 = sphi 0, %s133
    %s134 = sphi 0, %s131
    %s135 = sphi 0, %s134
    %s151 = sphi 0, %s135
  $region4: #{norm_identity_forward.1} parent=0 // loop_header_branch
    %14 = sbr.rel (%p12) target = $region8
  $region5: #{norm_identity_forward.1} parent=0 // loop_body
    %s16 = ssub.s32 %s11, 1
    %s17 = ssub.s32 %s11, 2
    %s18 = sadd.s32 %s11, 1
    %s19 = ssub.s32 %s11, %s18
    %p20 = scmp.eq.s32.totalorder %s19, 0
    %s22 = sadd.s32 %s21, 1
    %s23 = scalar_select %p20, %s21, %s22
    %p26 = pneg %p20
    %p27 = scmp.eq.s32.totalorder %s11, 1
    %p28 = por %p26, %p27
    %p29 = scmp.ne.s32.totalorder %s21, %s24
    %p30 = scmp.eq.s32.totalorder %s11, 0
    %p31 = por %p29, %p30
    %p32 = scmp.ne.s32.totalorder %s21, %s24
    %p33 = scmp.eq.s32.totalorder %s16, 1
    %p34 = por %p32, %p33
    %p35 = scmp.ne.s32.totalorder %s24, %s25
    %p36 = scmp.eq.s32.totalorder %s16, 0
    %p37 = por %p35, %p36
    %p38 = scmp.ne.s32.totalorder %s24, %s25
    %p39 = scmp.eq.s32.totalorder %s17, 1
    %p40 = por %p38, %p39
    %p42 = scmp.ne.s32.totalorder %s25, %s41
    %p43 = scmp.eq.s32.totalorder %s17, 0
    %p44 = por %p42, %p43
    %s46 = sadd.s32 %s45, 1
    %p49 = scmp.eq.s32.totalorder %s11, 1
    %p50 = scmp.ne.s32.totalorder %s45, %s47
    %p51 = scmp.eq.s32.totalorder %s11, 0
    %p52 = por %p50, %p51
    %p53 = scmp.ne.s32.totalorder %s45, %s47
    %p54 = scmp.eq.s32.totalorder %s16, 1
    %p55 = por %p53, %p54
    %p56 = scmp.ne.s32.totalorder %s47, %s48
    %p57 = scmp.eq.s32.totalorder %s16, 0
    %p58 = por %p56, %p57
    %p59 = scmp.ne.s32.totalorder %s47, %s48
    %p60 = scmp.eq.s32.totalorder %s17, 1
    %p61 = por %p59, %p60
    %p63 = scmp.ne.s32.totalorder %s48, %s62
    %p64 = scmp.eq.s32.totalorder %s17, 0
    %p65 = por %p63, %p64
    %s67 = sadd.s32 %s66, 1
    %p70 = scmp.eq.s32.totalorder %s11, 1
    %p71 = scmp.ne.s32.totalorder %s66, %s68
    %p72 = scmp.eq.s32.totalorder %s11, 0
    %p73 = por %p71, %p72
    %p74 = scmp.ne.s32.totalorder %s66, %s68
    %p75 = scmp.eq.s32.totalorder %s16, 1
    %p76 = por %p74, %p75
    %p77 = scmp.ne.s32.totalorder %s68, %s69
    %p78 = scmp.eq.s32.totalorder %s16, 0
    %p79 = por %p77, %p78
    %p80 = scmp.ne.s32.totalorder %s68, %s69
    %p81 = scmp.eq.s32.totalorder %s17, 1
    %p82 = por %p80, %p81
    %p84 = scmp.ne.s32.totalorder %s69, %s83
    %p85 = scmp.eq.s32.totalorder %s17, 0
    %p86 = por %p84, %p85
    %s88 = sadd.s32 %s87, 1
    %p91 = scmp.eq.s32.totalorder %s11, 1
    %p92 = scmp.ne.s32.totalorder %s87, %s89
    %p93 = scmp.eq.s32.totalorder %s11, 0
    %p94 = por %p92, %p93
    %p95 = scmp.ne.s32.totalorder %s87, %s89
    %p96 = scmp.eq.s32.totalorder %s16, 1
    %p97 = por %p95, %p96
    %p98 = scmp.ne.s32.totalorder %s89, %s90
    %p99 = scmp.eq.s32.totalorder %s16, 0
    %p100 = por %p98, %p99
    %p101 = scmp.ne.s32.totalorder %s89, %s90
    %p102 = scmp.eq.s32.totalorder %s17, 1
    %p103 = por %p101, %p102
    %p105 = scmp.ne.s32.totalorder %s90, %s104
    %p106 = scmp.eq.s32.totalorder %s17, 0
    %p107 = por %p105, %p106
    %s109 = sadd.s32 %s108, 1
    %p112 = scmp.eq.s32.totalorder %s11, 1
    %p113 = scmp.ne.s32.totalorder %s108, %s110
    %p114 = scmp.eq.s32.totalorder %s11, 0
    %p115 = por %p113, %p114
    %p116 = scmp.ne.s32.totalorder %s108, %s110
    %p117 = scmp.eq.s32.totalorder %s16, 1
    %p118 = por %p116, %p117
    %p119 = scmp.ne.s32.totalorder %s110, %s111
    %p120 = scmp.eq.s32.totalorder %s16, 0
    %p121 = por %p119, %p120
    %p122 = scmp.ne.s32.totalorder %s110, %s111
    %p123 = scmp.eq.s32.totalorder %s17, 1
    %p124 = por %p122, %p123
    %p126 = scmp.ne.s32.totalorder %s111, %s125
    %p127 = scmp.eq.s32.totalorder %s17, 0
    %p128 = por %p126, %p127
    %s129 = ssub.s32 %s11, %s18
    %p130 = scmp.eq.s32.totalorder %s129, 0
    %s132 = sadd.s32 %s131, 1
    %s133 = scalar_select %p130, %s131, %s132
    %p136 = pneg %p130
    %p137 = scmp.eq.s32.totalorder %s11, 1
    %p138 = por %p136, %p137
    %p139 = scmp.ne.s32.totalorder %s131, %s134
    %p140 = scmp.eq.s32.totalorder %s11, 0
    %p141 = por %p139, %p140
    %p142 = scmp.ne.s32.totalorder %s131, %s134
    %p143 = scmp.eq.s32.totalorder %s16, 1
    %p144 = por %p142, %p143
    %p145 = scmp.ne.s32.totalorder %s134, %s135
    %p146 = scmp.eq.s32.totalorder %s16, 0
    %p147 = por %p145, %p146
    %p148 = scmp.ne.s32.totalorder %s134, %s135
    %p149 = scmp.eq.s32.totalorder %s17, 1
    %p150 = por %p148, %p149
    %p152 = scmp.ne.s32.totalorder %s135, %s151
    %p153 = scmp.eq.s32.totalorder %s17, 0
    %p154 = por %p152, %p153
    %p155 = scmp.le.s32.totalorder 1, %s11
    %p156 = scmp.lt.s32.totalorder %s11, 3
    %p157 = pnand %p155, %p156
    %p158 = pneg %p157
    // Predicated region
    $region9: #{norm_identity_forward.1} parent=5 // pred_check
      _
    $region10: #{norm_identity_forward.1} parent=5 // pred_check_branch
      %160 = sbr.rel (%p157) target = $region12
    $region11: #{norm_identity_forward.1} parent=5 // pred_region
      %s161 = ssub.s32 %s11, 1
      // Predicated region
      $region13: #{norm_identity_forward.1} parent=11 // pred_check
        %p162 = pneg %p58
      $region14: #{norm_identity_forward.1} parent=11 // pred_check_branch
        %164 = sbr.rel (%p162) target = $region16
      $region15: #{norm_identity_forward.1} parent=11 // pred_region
        _
      $region16: #{norm_identity_forward.1} parent=11 // pred_fallthru
        _
      // Predicated region
      $region17: #{norm_identity_forward.1} parent=11 // pred_check
        %p165 = pneg %p79
      $region18: #{norm_identity_forward.1} parent=11 // pred_check_branch
        %167 = sbr.rel (%p165) target = $region20
      $region19: #{norm_identity_forward.1} parent=11 // pred_region
        _
      $region20: #{norm_identity_forward.1} parent=11 // pred_fallthru
        _
      // Predicated region
      $region21: #{norm_identity_forward.1} parent=11 // pred_check
        %p168 = pneg %p100
      $region22: #{norm_identity_forward.1} parent=11 // pred_check_branch
        %170 = sbr.rel (%p168) target = $region24
      $region23: #{norm_identity_forward.1} parent=11 // pred_region
        _
      $region24: #{norm_identity_forward.1} parent=11 // pred_fallthru
        _
      // Predicated region
      $region25: #{norm_identity_forward.1} parent=11 // pred_check
        %p171 = pneg %p121
      $region26: #{norm_identity_forward.1} parent=11 // pred_check_branch
        %173 = sbr.rel (%p171) target = $region28
      $region27: #{norm_identity_forward.1} parent=11 // pred_region
        _
      $region28: #{norm_identity_forward.1} parent=11 // pred_fallthru
        _
    $region12: #{norm_identity_forward.1} parent=5 // pred_fallthru
      _
    %p174 = scmp.lt.s32.totalorder %s11, 2
    // Predicated region
    $region29: #{norm_identity_forward.1} parent=5 // pred_check
      %p175 = pneg %p174
    $region30: #{norm_identity_forward.1} parent=5 // pred_check_branch
      %177 = sbr.rel (%p175) target = $region32
    $region31: #{norm_identity_forward.1} parent=5 // pred_region
      // Predicated region
      $region33: #{norm_identity_forward.1} parent=31 // pred_check
        %p178 = pneg %p31
      $region34: #{norm_identity_forward.1} parent=31 // pred_check_branch
        %180 = sbr.rel (%p178) target = $region36
      $region35: #{norm_identity_forward.1} parent=31 // pred_region
        %p181 = scmp.lt.s32.totalorder %s11, 1
        %s182 = scalar_select %p181, %s11, 1
        %s183 = smul.addr %s182, 2
        %s184 = smul.addr %s183, 4
        %s185 = scalar_lea.vmem %s0, %s184
      $region36: #{norm_identity_forward.1} parent=31 // pred_fallthru
        _
    $region32: #{norm_identity_forward.1} parent=5 // pred_fallthru
      _
    %p186 = scmp.le.s32.totalorder 1, %s11
    %p187 = scmp.lt.s32.totalorder %s11, 3
    %p188 = pnand %p186, %p187
    %p189 = pneg %p188
    // Predicated region
    $region37: #{norm_identity_forward.1} parent=5 // pred_check
      _
    $region38: #{norm_identity_forward.1} parent=5 // pred_check_branch
      %191 = sbr.rel (%p188) target = $region40
    $region39: #{norm_identity_forward.1} parent=5 // pred_region
      %s192 = ssub.s32 %s11, 1
      %p193 = scmp.lt.s32.totalorder %s16, 1
      %s194 = scalar_select %p193, %s16, 1
      %s195 = smul.addr %s194, 2
      %s196 = smul.addr %s195, 4
      %s197 = scalar_lea.vmem %s0, %s196
      %p198 = pneg %p37
      %p199 = pneg %p34
      %p200 = pneg %p58
      %p201 = pneg %p55
      %p202 = pneg %p79
      %p203 = pneg %p76
      %p204 = pneg %p100
      %p205 = pneg %p97
      %p206 = pneg %p121
      %p207 = pneg %p118
      %p208 = pneg %p147
      %p209 = pneg %p144
      %p210 = scmp.lt.s32.totalorder %s16, 1
      %s211 = scalar_select %p210, %s16, 1
      %s212 = smul.addr %s211, 2
      %s213 = smul.addr %s212, 4
      %s214 = scalar_lea.vmem %s5, %s213
      %p215 = scmp.lt.s32.totalorder %s16, 1
      %s216 = scalar_select %p215, %s16, 1
      %s217 = smul.addr %s216, 2
      %s218 = smul.addr %s217, 4
      %s219 = scalar_lea.vmem %s0, %s218
      %p220 = scmp.lt.s32.totalorder %s16, 1
      %s221 = scalar_select %p220, %s16, 1
      %s222 = smul.addr %s221, 2
      %s223 = smul.addr %s222, 4
      %s224 = scalar_lea.vmem %s5, %s223
      %226 = vst [vmem:[#allocation2] sm:$0xff] 0.0
      %227 = vst [vmem:[#allocation2 + $0x8] sm:$0xff] 0.0
      %228 = vst [vmem:[#allocation2 + $0x10] sm:$0xff] 0.0
      %229 = vst [vmem:[#allocation2 + $0x18] sm:$0xff] 0.0
      %v230 = vld [vmem:[%s219] sm:$0x77]
      %232 = vst [vmem:[#allocation1] ss:$2 sm:$0xff] %v230
      %v233 = vld.sshfl [vmem:[#allocation1] sm:$0xff pattern:$0x75316420]
      %v234 = vld.sshfl [vmem:[#allocation1 + $0x8] sm:$0xff pattern:$0x75316420]
      %237 = vst [vmem:[#allocation2] sm:$0x7] %v233
      %238 = vst [vmem:[#allocation2 + $0x8] sm:$0x7] %v234
      %v239 = vld [vmem:[#allocation2] sm:$0xff]
      %v240 = vld [vmem:[#allocation2 + $0x8] sm:$0xff]
      %v241 = vld [vmem:[#allocation2 + $0x10] sm:$0xff]
      %v242 = vld [vmem:[#allocation2 + $0x18] sm:$0xff]
      %243 = vrot.lane.b32.xlu0 %v239, 17
      %v244 = vpop.permute.xlu0 %243
      %245 = vrot.lane.b32.xlu0 %v241, 17
      %v246 = vpop.permute.xlu0 %245
      %247 = vrot.lane.b32.xlu0 %v240, 17
      %v248 = vpop.permute.xlu0 %247
      %249 = vrot.lane.b32.xlu0 %v242, 17
      %v250 = vpop.permute.xlu0 %249
      %v251 = vlaneseq
      %v252 = vand.u32 %v251, 127
      %vm253 = vcmp.lt.s32.totalorder %v252, 17
      %v254 = vsel %vm253, %v244, %v248
      %v255 = vsel %vm253, %v246, %v250
      %v256 = vsel %vm253, %v248, %v244
      %v257 = vsel %vm253, %v250, %v246
      %v258 = vld [vmem:[%s4] sm:$0x3]
      %v260 = vperm.slane %v258, 0
      %v261 = vperm.slane %v258, 1
      %v264 = vmul.f32 %v256, %v260
      %v265 = vmul.f32 %v254, %v261
      %v266 = vmul.f32 %v257, %v260
      %v267 = vmul.f32 %v255, %v261
      %v268 = vpack.c.bf16 %v265, %v264
      %v269 = vpack.c.bf16 %v267, %v266
      %270 = vst [vmem:[#allocation3] sm:$0xff] %v268
      %271 = vst [vmem:[#allocation3 + $0x8] sm:$0xff] %v269
      %272 = vrot.lane.b32.xlu0 %v239, 16
      %v273 = vpop.permute.xlu0 %272
      %274 = vrot.lane.b32.xlu0 %v241, 16
      %v275 = vpop.permute.xlu0 %274
      %276 = vrot.lane.b32.xlu0 %v240, 16
      %v277 = vpop.permute.xlu0 %276
      %278 = vrot.lane.b32.xlu0 %v242, 16
      %v279 = vpop.permute.xlu0 %278
      %vm280 = vcmp.lt.s32.totalorder %v252, 16
      %v281 = vsel %vm280, %v273, %v277
      %v282 = vsel %vm280, %v275, %v279
      %v283 = vsel %vm280, %v277, %v273
      %v284 = vsel %vm280, %v279, %v275
      %s285 = scalar_lea.vmem %s4, 2
      %v286 = vld [vmem:[%s285] sm:$0x3]
      %v288 = vperm.slane %v286, 0
      %v289 = vperm.slane %v286, 1
      %v292 = vmul.f32 %v283, %v288
      %v293 = vmul.f32 %v281, %v289
      %v294 = vmul.f32 %v284, %v288
      %v295 = vmul.f32 %v282, %v289
      %v296 = vpack.c.bf16 %v293, %v292
      %v297 = vpack.c.bf16 %v295, %v294
      %298 = vst [vmem:[#allocation3 + $0x10] sm:$0xff] %v296
      %299 = vst [vmem:[#allocation3 + $0x18] sm:$0xff] %v297
      %300 = vrot.lane.b32.xlu0 %v239, 15
      %v301 = vpop.permute.xlu0 %300
      %302 = vrot.lane.b32.xlu0 %v241, 15
      %v303 = vpop.permute.xlu0 %302
      %304 = vrot.lane.b32.xlu0 %v240, 15
      %v305 = vpop.permute.xlu0 %304
      %306 = vrot.lane.b32.xlu0 %v242, 15
      %v307 = vpop.permute.xlu0 %306
      %vm308 = vcmp.lt.s32.totalorder %v252, 15
      %v309 = vsel %vm308, %v301, %v305
      %v310 = vsel %vm308, %v303, %v307
      %v311 = vsel %vm308, %v305, %v301
      %v312 = vsel %vm308, %v307, %v303
      %s313 = scalar_lea.vmem %s4, 4
      %v314 = vld [vmem:[%s313] sm:$0x3]
      %v316 = vperm.slane %v314, 0
      %v317 = vperm.slane %v314, 1
      %v320 = vmul.f32 %v311, %v316
      %v321 = vmul.f32 %v309, %v317
      %v322 = vmul.f32 %v312, %v316
      %v323 = vmul.f32 %v310, %v317
      %v324 = vpack.c.bf16 %v321, %v320
      %v325 = vpack.c.bf16 %v323, %v322
      %326 = vst [vmem:[#allocation3 + $0x20] sm:$0xff] %v324
      %327 = vst [vmem:[#allocation3 + $0x28] sm:$0xff] %v325
      %328 = vrot.lane.b32.xlu0 %v239, 1
      %v329 = vpop.permute.xlu0 %328
      %330 = vrot.lane.b32.xlu0 %v241, 1
      %v331 = vpop.permute.xlu0 %330
      %332 = vrot.lane.b32.xlu0 %v240, 1
      %v333 = vpop.permute.xlu0 %332
      %334 = vrot.lane.b32.xlu0 %v242, 1
      %v335 = vpop.permute.xlu0 %334
      %vm336 = vcmp.lt.s32.totalorder %v252, 1
      %v337 = vsel %vm336, %v329, %v333
      %v338 = vsel %vm336, %v331, %v335
      %v339 = vsel %vm336, %v333, %v329
      %v340 = vsel %vm336, %v335, %v331
      %s341 = scalar_lea.vmem %s4, 6
      %v342 = vld [vmem:[%s341] sm:$0x3]
      %v344 = vperm.slane %v342, 0
      %v345 = vperm.slane %v342, 1
      %v348 = vmul.f32 %v339, %v344
      %v349 = vmul.f32 %v337, %v345
      %v350 = vmul.f32 %v340, %v344
      %v351 = vmul.f32 %v338, %v345
      %v352 = vpack.c.bf16 %v349, %v348
      %v353 = vpack.c.bf16 %v351, %v350
      %354 = vst [vmem:[#allocation3 + $0x30] sm:$0xff] %v352
      %355 = vst [vmem:[#allocation3 + $0x38] sm:$0xff] %v353
      %v356 = vpack.c.bf16 %v240, %v239
      %v357 = vpack.c.bf16 %v242, %v241
      %358 = vst [vmem:[#allocation3 + $0x40] sm:$0xff] %v356
      %359 = vst [vmem:[#allocation3 + $0x48] sm:$0xff] %v357
      %360 = vrot.lane.b32.xlu0 %v239, 127
      %v361 = vpop.permute.xlu0 %360
      %362 = vrot.lane.b32.xlu0 %v241, 127
      %v363 = vpop.permute.xlu0 %362
      %364 = vrot.lane.b32.xlu0 %v240, 127
      %v365 = vpop.permute.xlu0 %364
      %366 = vrot.lane.b32.xlu0 %v242, 127
      %v367 = vpop.permute.xlu0 %366
      %vm368 = vcmp.lt.s32.totalorder %v252, 127
      %v369 = vsel %vm368, %v361, %v365
      %v370 = vsel %vm368, %v363, %v367
      %v371 = vsel %vm368, %v365, %v361
      %v372 = vsel %vm368, %v367, %v363
      %s373 = scalar_lea.vmem %s4, 10
      %v374 = vld [vmem:[%s373] sm:$0x3]
      %v376 = vperm.slane %v374, 0
      %v377 = vperm.slane %v374, 1
      %v380 = vmul.f32 %v369, %v376
      %v381 = vmul.f32 %v371, %v377
      %v382 = vmul.f32 %v370, %v376
      %v383 = vmul.f32 %v372, %v377
      %v384 = vpack.c.bf16 %v381, %v380
      %v385 = vpack.c.bf16 %v383, %v382
      %386 = vst [vmem:[#allocation3 + $0x50] sm:$0xff] %v384
      %387 = vst [vmem:[#allocation3 + $0x58] sm:$0xff] %v385
      %388 = vrot.lane.b32.xlu0 %v239, 113
      %v389 = vpop.permute.xlu0 %388
      %390 = vrot.lane.b32.xlu0 %v241, 113
      %v391 = vpop.permute.xlu0 %390
      %392 = vrot.lane.b32.xlu0 %v240, 113
      %v393 = vpop.permute.xlu0 %392
      %394 = vrot.lane.b32.xlu0 %v242, 113
      %v395 = vpop.permute.xlu0 %394
      %vm396 = vcmp.lt.s32.totalorder %v252, 113
      %v397 = vsel %vm396, %v389, %v393
      %v398 = vsel %vm396, %v391, %v395
      %v399 = vsel %vm396, %v393, %v389
      %v400 = vsel %vm396, %v395, %v391
      %s401 = scalar_lea.vmem %s4, 12
      %v402 = vld [vmem:[%s401] sm:$0x3]
      %v404 = vperm.slane %v402, 0
      %v405 = vperm.slane %v402, 1
      %v408 = vmul.f32 %v397, %v404
      %v409 = vmul.f32 %v399, %v405
      %v410 = vmul.f32 %v398, %v404
      %v411 = vmul.f32 %v400, %v405
      %v412 = vpack.c.bf16 %v409, %v408
      %v413 = vpack.c.bf16 %v411, %v410
      %414 = vst [vmem:[#allocation3 + $0x60] sm:$0xff] %v412
      %415 = vst [vmem:[#allocation3 + $0x68] sm:$0xff] %v413
      %416 = vrot.lane.b32.xlu0 %v239, 112
      %v417 = vpop.permute.xlu0 %416
      %418 = vrot.lane.b32.xlu0 %v241, 112
      %v419 = vpop.permute.xlu0 %418
      %420 = vrot.lane.b32.xlu0 %v240, 112
      %v421 = vpop.permute.xlu0 %420
      %422 = vrot.lane.b32.xlu0 %v242, 112
      %v423 = vpop.permute.xlu0 %422
      %vm424 = vcmp.lt.s32.totalorder %v252, 112
      %v425 = vsel %vm424, %v417, %v421
      %v426 = vsel %vm424, %v419, %v423
      %v427 = vsel %vm424, %v421, %v417
      %v428 = vsel %vm424, %v423, %v419
      %s429 = scalar_lea.vmem %s4, 14
      %v430 = vld [vmem:[%s429] sm:$0x3]
      %v432 = vperm.slane %v430, 0
      %v433 = vperm.slane %v430, 1
      %v436 = vmul.f32 %v425, %v432
      %v437 = vmul.f32 %v427, %v433
      %v438 = vmul.f32 %v426, %v432
      %v439 = vmul.f32 %v428, %v433
      %v440 = vpack.c.bf16 %v437, %v436
      %v441 = vpack.c.bf16 %v439, %v438
      %442 = vst [vmem:[#allocation3 + $0x70] sm:$0xff] %v440
      %443 = vst [vmem:[#allocation3 + $0x78] sm:$0xff] %v441
      %444 = vrot.lane.b32.xlu0 %v239, 111
      %v445 = vpop.permute.xlu0 %444
      %446 = vrot.lane.b32.xlu0 %v241, 111
      %v447 = vpop.permute.xlu0 %446
      %448 = vrot.lane.b32.xlu0 %v240, 111
      %v449 = vpop.permute.xlu0 %448
      %450 = vrot.lane.b32.xlu0 %v242, 111
      %v451 = vpop.permute.xlu0 %450
      %vm452 = vcmp.lt.s32.totalorder %v252, 111
      %v453 = vsel %vm452, %v445, %v449
      %v454 = vsel %vm452, %v447, %v451
      %v455 = vsel %vm452, %v449, %v445
      %v456 = vsel %vm452, %v451, %v447
      %s457 = scalar_lea.vmem %s4, 16
      %v458 = vld [vmem:[%s457] sm:$0x3]
      %v460 = vperm.slane %v458, 0
      %v461 = vperm.slane %v458, 1
      %v464 = vmul.f32 %v453, %v460
      %v465 = vmul.f32 %v455, %v461
      %v466 = vmul.f32 %v454, %v460
      %v467 = vmul.f32 %v456, %v461
      %v468 = vpack.c.bf16 %v465, %v464
      %v469 = vpack.c.bf16 %v467, %v466
      %470 = vst [vmem:[#allocation3 + $0x80] sm:$0xff] %v468
      %471 = vst [vmem:[#allocation3 + $0x88] sm:$0xff] %v469
      %v472 = vld [vmem:[%s1] sm:$0xff]
      %v473 = vld [vmem:[%s1 + $0x8] sm:$0xff]
      %v474 = vld [vmem:[#allocation3] sm:$0xff]
      %v475 = vld [vmem:[#allocation3 + $0x8] sm:$0xff]
      %v476 = vld [vmem:[#allocation3 + $0x10] sm:$0xff]
      %v477 = vld [vmem:[#allocation3 + $0x18] sm:$0xff]
      %v478 = vld [vmem:[#allocation3 + $0x20] sm:$0xff]
      %v479 = vld [vmem:[#allocation3 + $0x28] sm:$0xff]
      %v480 = vld [vmem:[#allocation3 + $0x30] sm:$0xff]
      %v481 = vld [vmem:[#allocation3 + $0x38] sm:$0xff]
      %v482 = vld [vmem:[#allocation3 + $0x40] sm:$0xff]
      %v483 = vld [vmem:[#allocation3 + $0x48] sm:$0xff]
      %v484 = vld [vmem:[#allocation3 + $0x50] sm:$0xff]
      %v485 = vld [vmem:[#allocation3 + $0x58] sm:$0xff]
      %v486 = vld [vmem:[#allocation3 + $0x60] sm:$0xff]
      %v487 = vld [vmem:[#allocation3 + $0x68] sm:$0xff]
      %v488 = vld [vmem:[#allocation3 + $0x70] sm:$0xff]
      %v489 = vld [vmem:[#allocation3 + $0x78] sm:$0xff]
      %v490 = vld [vmem:[#allocation3 + $0x80] sm:$0xff]
      %v491 = vld [vmem:[#allocation3 + $0x88] sm:$0xff]
      %v494 = vunpack.c.l.b16 %v472
      %v495 = vunpack.c.h.b16 %v472
      %v496 = vunpack.c.l.b16 %v473
      %v497 = vunpack.c.h.b16 %v473
      %v498 = vpack.c.b16 %v496, %v494
      %v499 = vpack.c.b16 %v497, %v495
      %v519 = vunpack.c.l.b16 %v474
      %v520 = vunpack.c.h.b16 %v474
      %v521 = vunpack.c.l.b16 %v475
      %v522 = vunpack.c.h.b16 %v475
      %v523 = vunpack.c.l.b16 %v476
      %v524 = vunpack.c.h.b16 %v476
      %v525 = vunpack.c.l.b16 %v477
      %v526 = vunpack.c.h.b16 %v477
      %v527 = vunpack.c.l.b16 %v478
      %v528 = vunpack.c.h.b16 %v478
      %v529 = vunpack.c.l.b16 %v479
      %v530 = vunpack.c.h.b16 %v479
      %v531 = vunpack.c.l.b16 %v480
      %v532 = vunpack.c.h.b16 %v480
      %v533 = vunpack.c.l.b16 %v481
      %v534 = vunpack.c.h.b16 %v481
      %v535 = vunpack.c.l.b16 %v482
      %v536 = vunpack.c.h.b16 %v482
      %v537 = vunpack.c.l.b16 %v483
      %v538 = vunpack.c.h.b16 %v483
      %v539 = vunpack.c.l.b16 %v484
      %v540 = vunpack.c.h.b16 %v484
      %v541 = vunpack.c.l.b16 %v485
      %v542 = vunpack.c.h.b16 %v485
      %v543 = vunpack.c.l.b16 %v486
      %v544 = vunpack.c.h.b16 %v486
      %v545 = vunpack.c.l.b16 %v487
      %v546 = vunpack.c.h.b16 %v487
      %v547 = vunpack.c.l.b16 %v488
      %v548 = vunpack.c.h.b16 %v488
      %v549 = vunpack.c.l.b16 %v489
      %v550 = vunpack.c.h.b16 %v489
      %v551 = vunpack.c.l.b16 %v490
      %v552 = vunpack.c.h.b16 %v490
      %v553 = vunpack.c.l.b16 %v491
      %v554 = vunpack.c.h.b16 %v491
      %v555 = vpack.c.b16 %v521, %v519
      %v556 = vpack.c.b16 %v522, %v520
      %v557 = vpack.c.b16 %v525, %v523
      %v558 = vpack.c.b16 %v526, %v524
      %v559 = vpack.c.b16 %v529, %v527
      %v560 = vpack.c.b16 %v530, %v528
      %v561 = vpack.c.b16 %v533, %v531
      %v562 = vpack.c.b16 %v534, %v532
      %v563 = vpack.c.b16 %v537, %v535
      %v564 = vpack.c.b16 %v538, %v536
      %v565 = vpack.c.b16 %v541, %v539
      %v566 = vpack.c.b16 %v542, %v540
      %v567 = vpack.c.b16 %v545, %v543
      %v568 = vpack.c.b16 %v546, %v544
      %v569 = vpack.c.b16 %v549, %v547
      %v570 = vpack.c.b16 %v550, %v548
      %v571 = vpack.c.b16 %v553, %v551
      %v572 = vpack.c.b16 %v554, %v552
      %vm591 = vcmask 130048
      %v593 = vsel %vm591, %v499, 0
      %595 = vmatpush.bf16.msra.mxu0 %v569
      %596 = vmatpush.bf16.msra.mxu0 %v567
      %597 = vmatpush.bf16.msra.mxu0 %v565
      %598 = vmatpush.bf16.msra.mxu0 %v563
      %599 = vmatpush.bf16.msra.mxu0 %v561
      %600 = vmatpush.bf16.msra.mxu0 %v559
      %601 = vmatpush.bf16.msra.mxu0 %v557
      %602 = vmatpush.bf16.msra.mxu0 %v555
      %603 = vmatmul.bf16.gmra.mxu0 %v498
      %v604 = vpop.f32.mrf.mxu0
      %v605 = vadd.f32 0.0, %v604
      %v606 = vpop.f32.mrf.mxu0
      %v607 = vadd.f32 0.0, %v606
      %608 = vdwg.mxu0
      %609 = vmatpush.bf16.msra.mxu0 0
      %610 = vmatpush.bf16.msra.mxu0 0
      %611 = vmatpush.bf16.msra.mxu0 0
      %612 = vmatpush.bf16.msra.mxu0 0
      %613 = vmatpush.bf16.msra.mxu0 0
      %614 = vmatpush.bf16.msra.mxu0 0
      %615 = vmatpush.bf16.msra.mxu0 0
      %616 = vmatpush.bf16.msra.mxu0 %v571
      %617 = vmatmul.bf16.gmra.mxu0 %v593
      %v618 = vpop.f32.mrf.mxu0
      %v619 = vadd.f32 %v605, %v618
      %v620 = vpop.f32.mrf.mxu0
      %v621 = vadd.f32 %v607, %v620
      %622 = vdwg.mxu0
      %623 = vmatpush.bf16.msra.mxu0 %v570
      %624 = vmatpush.bf16.msra.mxu0 %v568
      %625 = vmatpush.bf16.msra.mxu0 %v566
      %626 = vmatpush.bf16.msra.mxu0 %v564
      %627 = vmatpush.bf16.msra.mxu0 %v562
      %628 = vmatpush.bf16.msra.mxu0 %v560
      %629 = vmatpush.bf16.msra.mxu0 %v558
      %630 = vmatpush.bf16.msra.mxu0 %v556
      %631 = vmatmul.bf16.gmra.mxu0 %v498
      %v632 = vpop.f32.mrf.mxu0
      %v633 = vadd.f32 0.0, %v632
      %v634 = vpop.f32.mrf.mxu0
      %v635 = vadd.f32 0.0, %v634
      %636 = vdwg.mxu0
      %637 = vmatpush.bf16.msra.mxu0 0
      %638 = vmatpush.bf16.msra.mxu0 0
      %639 = vmatpush.bf16.msra.mxu0 0
      %640 = vmatpush.bf16.msra.mxu0 0
      %641 = vmatpush.bf16.msra.mxu0 0
      %642 = vmatpush.bf16.msra.mxu0 0
      %643 = vmatpush.bf16.msra.mxu0 0
      %644 = vmatpush.bf16.msra.mxu0 %v572
      %645 = vmatmul.bf16.gmra.mxu0 %v593
      %v646 = vpop.f32.mrf.mxu0
      %v647 = vadd.f32 %v633, %v646
      %v648 = vpop.f32.mrf.mxu0
      %v649 = vadd.f32 %v635, %v648
      %650 = vdwg.mxu0
      %v651 = vld [vmem:[%s2] sm:$0xff]
      %v652 = vld [vmem:[%s2 + $0x8] sm:$0xff]
      %654 = vset.pattern.permute.xlu0 0
      %655 = vperm.xlu0 %654, %v651
      %v656 = vpop.permute.xlu0 %655
      %659 = vset.pattern.permute.xlu0 0
      %660 = vperm.xlu0 %659, %v652
      %v661 = vpop.permute.xlu0 %660
      %v663 = vmul.f32 %v619, %v656
      %v664 = vmul.f32 %v647, %v656
      %v665 = vmul.f32 %v621, %v661
      %v666 = vmul.f32 %v649, %v661
      %v667 = vld [vmem:[%s3] sm:$0xff]
      %v668 = vld [vmem:[%s3 + $0x8] sm:$0xff]
      %670 = vset.pattern.permute.xlu0 0
      %671 = vperm.xlu0 %670, %v667
      %v672 = vpop.permute.xlu0 %671
      %675 = vset.pattern.permute.xlu0 0
      %676 = vperm.xlu0 %675, %v668
      %v677 = vpop.permute.xlu0 %676
      %v679 = vadd.f32 %v663, %v672
      %v680 = vadd.f32 %v664, %v672
      %v681 = vadd.f32 %v665, %v677
      %v682 = vadd.f32 %v666, %v677
      %v683 = vmax.f32 %v679, 0.0
      %v684 = vmax.f32 %v680, 0.0
      %v685 = vmax.f32 %v681, 0.0
      %v686 = vmax.f32 %v682, 0.0
      %687 = vst [vmem:[#allocation2] sm:$0xff] %v683
      %688 = vst [vmem:[#allocation2 + $0x8] sm:$0xff] %v684
      %689 = vst [vmem:[#allocation2 + $0x10] sm:$0xff] %v685
      %690 = vst [vmem:[#allocation2 + $0x18] sm:$0xff] %v686
      %v691 = vld [vmem:[#allocation2] sm:$0xff]
      %v692 = vld [vmem:[#allocation2 + $0x8] sm:$0xff]
      %v693 = vld [vmem:[#allocation2 + $0x10] sm:$0xff]
      %v694 = vld [vmem:[#allocation2 + $0x18] sm:$0xff]
      %695 = vrot.lane.b32.xlu0 %v691, 17
      %v696 = vpop.permute.xlu0 %695
      %697 = vrot.lane.b32.xlu0 %v693, 17
      %v698 = vpop.permute.xlu0 %697
      %699 = vrot.lane.b32.xlu0 %v692, 17
      %v700 = vpop.permute.xlu0 %699
      %701 = vrot.lane.b32.xlu0 %v694, 17
      %v702 = vpop.permute.xlu0 %701
      %v703 = vsel %vm253, %v696, %v700
      %v704 = vsel %vm253, %v698, %v702
      %v705 = vsel %vm253, %v700, %v696
      %v706 = vsel %vm253, %v702, %v698
      %v707 = vld [vmem:[%s4] sm:$0x3]
      %v709 = vperm.slane %v707, 0
      %v710 = vperm.slane %v707, 1
      %v713 = vmul.f32 %v705, %v709
      %v714 = vmul.f32 %v703, %v710
      %v715 = vmul.f32 %v706, %v709
      %v716 = vmul.f32 %v704, %v710
      %v717 = vpack.c.bf16 %v714, %v713
      %v718 = vpack.c.bf16 %v716, %v715
      %719 = vst [vmem:[#allocation3] sm:$0xff] %v717
      %720 = vst [vmem:[#allocation3 + $0x8] sm:$0xff] %v718
      %721 = vrot.lane.b32.xlu0 %v691, 16
      %v722 = vpop.permute.xlu0 %721
      %723 = vrot.lane.b32.xlu0 %v693, 16
      %v724 = vpop.permute.xlu0 %723
      %725 = vrot.lane.b32.xlu0 %v692, 16
      %v726 = vpop.permute.xlu0 %725
      %727 = vrot.lane.b32.xlu0 %v694, 16
      %v728 = vpop.permute.xlu0 %727
      %v729 = vsel %vm280, %v722, %v726
      %v730 = vsel %vm280, %v724, %v728
      %v731 = vsel %vm280, %v726, %v722
      %v732 = vsel %vm280, %v728, %v724
      %v733 = vld [vmem:[%s285] sm:$0x3]
      %v735 = vperm.slane %v733, 0
      %v736 = vperm.slane %v733, 1
      %v739 = vmul.f32 %v731, %v735
      %v740 = vmul.f32 %v729, %v736
      %v741 = vmul.f32 %v732, %v735
      %v742 = vmul.f32 %v730, %v736
      %v743 = vpack.c.bf16 %v740, %v739
      %v744 = vpack.c.bf16 %v742, %v741
      %745 = vst [vmem:[#allocation3 + $0x10] sm:$0xff] %v743
      %746 = vst [vmem:[#allocation3 + $0x18] sm:$0xff] %v744
      %747 = vrot.lane.b32.xlu0 %v691, 15
      %v748 = vpop.permute.xlu0 %747
      %749 = vrot.lane.b32.xlu0 %v693, 15
      %v750 = vpop.permute.xlu0 %749
      %751 = vrot.lane.b32.xlu0 %v692, 15
      %v752 = vpop.permute.xlu0 %751
      %753 = vrot.lane.b32.xlu0 %v694, 15
      %v754 = vpop.permute.xlu0 %753
      %v755 = vsel %vm308, %v748, %v752
      %v756 = vsel %vm308, %v750, %v754
      %v757 = vsel %vm308, %v752, %v748
      %v758 = vsel %vm308, %v754, %v750
      %v759 = vld [vmem:[%s313] sm:$0x3]
      %v761 = vperm.slane %v759, 0
      %v762 = vperm.slane %v759, 1
      %v765 = vmul.f32 %v757, %v761
      %v766 = vmul.f32 %v755, %v762
      %v767 = vmul.f32 %v758, %v761
      %v768 = vmul.f32 %v756, %v762
      %v769 = vpack.c.bf16 %v766, %v765
      %v770 = vpack.c.bf16 %v768, %v767
      %771 = vst [vmem:[#allocation3 + $0x20] sm:$0xff] %v769
      %772 = vst [vmem:[#allocation3 + $0x28] sm:$0xff] %v770
      %773 = vrot.lane.b32.xlu0 %v691, 1
      %v774 = vpop.permute.xlu0 %773
      %775 = vrot.lane.b32.xlu0 %v693, 1
      %v776 = vpop.permute.xlu0 %775
      %777 = vrot.lane.b32.xlu0 %v692, 1
      %v778 = vpop.permute.xlu0 %777
      %779 = vrot.lane.b32.xlu0 %v694, 1
      %v780 = vpop.permute.xlu0 %779
      %v781 = vsel %vm336, %v774, %v778
      %v782 = vsel %vm336, %v776, %v780
      %v783 = vsel %vm336, %v778, %v774
      %v784 = vsel %vm336, %v780, %v776
      %v785 = vld [vmem:[%s341] sm:$0x3]
      %v787 = vperm.slane %v785, 0
      %v788 = vperm.slane %v785, 1
      %v791 = vmul.f32 %v783, %v787
      %v792 = vmul.f32 %v781, %v788
      %v793 = vmul.f32 %v784, %v787
      %v794 = vmul.f32 %v782, %v788
      %v795 = vpack.c.bf16 %v792, %v791
      %v796 = vpack.c.bf16 %v794, %v793
      %797 = vst [vmem:[#allocation3 + $0x30] sm:$0xff] %v795
      %798 = vst [vmem:[#allocation3 + $0x38] sm:$0xff] %v796
      %v799 = vpack.c.bf16 %v692, %v691
      %v800 = vpack.c.bf16 %v694, %v693
      %801 = vst [vmem:[#allocation3 + $0x40] sm:$0xff] %v799
      %802 = vst [vmem:[#allocation3 + $0x48] sm:$0xff] %v800
      %803 = vrot.lane.b32.xlu0 %v691, 127
      %v804 = vpop.permute.xlu0 %803
      %805 = vrot.lane.b32.xlu0 %v693, 127
      %v806 = vpop.permute.xlu0 %805
      %807 = vrot.lane.b32.xlu0 %v692, 127
      %v808 = vpop.permute.xlu0 %807
      %809 = vrot.lane.b32.xlu0 %v694, 127
      %v810 = vpop.permute.xlu0 %809
      %v811 = vsel %vm368, %v804, %v808
      %v812 = vsel %vm368, %v806, %v810
      %v813 = vsel %vm368, %v808, %v804
      %v814 = vsel %vm368, %v810, %v806
      %v815 = vld [vmem:[%s373] sm:$0x3]
      %v817 = vperm.slane %v815, 0
      %v818 = vperm.slane %v815, 1
      %v821 = vmul.f32 %v811, %v817
      %v822 = vmul.f32 %v813, %v818
      %v823 = vmul.f32 %v812, %v817
      %v824 = vmul.f32 %v814, %v818
      %v825 = vpack.c.bf16 %v822, %v821
      %v826 = vpack.c.bf16 %v824, %v823
      %827 = vst [vmem:[#allocation3 + $0x50] sm:$0xff] %v825
      %828 = vst [vmem:[#allocation3 + $0x58] sm:$0xff] %v826
      %829 = vrot.lane.b32.xlu0 %v691, 113
      %v830 = vpop.permute.xlu0 %829
      %831 = vrot.lane.b32.xlu0 %v693, 113
      %v832 = vpop.permute.xlu0 %831
      %833 = vrot.lane.b32.xlu0 %v692, 113
      %v834 = vpop.permute.xlu0 %833
      %835 = vrot.lane.b32.xlu0 %v694, 113
      %v836 = vpop.permute.xlu0 %835
      %v837 = vsel %vm396, %v830, %v834
      %v838 = vsel %vm396, %v832, %v836
      %v839 = vsel %vm396, %v834, %v830
      %v840 = vsel %vm396, %v836, %v832
      %v841 = vld [vmem:[%s401] sm:$0x3]
      %v843 = vperm.slane %v841, 0
      %v844 = vperm.slane %v841, 1
      %v847 = vmul.f32 %v837, %v843
      %v848 = vmul.f32 %v839, %v844
      %v849 = vmul.f32 %v838, %v843
      %v850 = vmul.f32 %v840, %v844
      %v851 = vpack.c.bf16 %v848, %v847
      %v852 = vpack.c.bf16 %v850, %v849
      %853 = vst [vmem:[#allocation3 + $0x60] sm:$0xff] %v851
      %854 = vst [vmem:[#allocation3 + $0x68] sm:$0xff] %v852
      %855 = vrot.lane.b32.xlu0 %v691, 112
      %v856 = vpop.permute.xlu0 %855
      %857 = vrot.lane.b32.xlu0 %v693, 112
      %v858 = vpop.permute.xlu0 %857
      %859 = vrot.lane.b32.xlu0 %v692, 112
      %v860 = vpop.permute.xlu0 %859
      %861 = vrot.lane.b32.xlu0 %v694, 112
      %v862 = vpop.permute.xlu0 %861
      %v863 = vsel %vm424, %v856, %v860
      %v864 = vsel %vm424, %v858, %v862
      %v865 = vsel %vm424, %v860, %v856
      %v866 = vsel %vm424, %v862, %v858
      %v867 = vld [vmem:[%s429] sm:$0x3]
      %v869 = vperm.slane %v867, 0
      %v870 = vperm.slane %v867, 1
      %v873 = vmul.f32 %v863, %v869
      %v874 = vmul.f32 %v865, %v870
      %v875 = vmul.f32 %v864, %v869
      %v876 = vmul.f32 %v866, %v870
      %v877 = vpack.c.bf16 %v874, %v873
      %v878 = vpack.c.bf16 %v876, %v875
      %879 = vst [vmem:[#allocation3 + $0x70] sm:$0xff] %v877
      %880 = vst [vmem:[#allocation3 + $0x78] sm:$0xff] %v878
      %881 = vrot.lane.b32.xlu0 %v691, 111
      %v882 = vpop.permute.xlu0 %881
      %883 = vrot.lane.b32.xlu0 %v693, 111
      %v884 = vpop.permute.xlu0 %883
      %885 = vrot.lane.b32.xlu0 %v692, 111
      %v886 = vpop.permute.xlu0 %885
      %887 = vrot.lane.b32.xlu0 %v694, 111
      %v888 = vpop.permute.xlu0 %887
      %v889 = vsel %vm452, %v882, %v886
      %v890 = vsel %vm452, %v884, %v888
      %v891 = vsel %vm452, %v886, %v882
      %v892 = vsel %vm452, %v888, %v884
      %v893 = vld [vmem:[%s457] sm:$0x3]
      %v895 = vperm.slane %v893, 0
      %v896 = vperm.slane %v893, 1
      %v899 = vmul.f32 %v889, %v895
      %v900 = vmul.f32 %v891, %v896
      %v901 = vmul.f32 %v890, %v895
      %v902 = vmul.f32 %v892, %v896
      %v903 = vpack.c.bf16 %v900, %v899
      %v904 = vpack.c.bf16 %v902, %v901
      %905 = vst [vmem:[#allocation3 + $0x80] sm:$0xff] %v903
      %906 = vst [vmem:[#allocation3 + $0x88] sm:$0xff] %v904
      %s907 = scalar_lea.vmem %s1, 16
      %v908 = vld [vmem:[%s907] sm:$0xff]
      %v909 = vld [vmem:[%s907 + $0x8] sm:$0xff]
      %v910 = vld [vmem:[#allocation3] sm:$0xff]
      %v911 = vld [vmem:[#allocation3 + $0x8] sm:$0xff]
      %v912 = vld [vmem:[#allocation3 + $0x10] sm:$0xff]
      %v913 = vld [vmem:[#allocation3 + $0x18] sm:$0xff]
      %v914 = vld [vmem:[#allocation3 + $0x20] sm:$0xff]
      %v915 = vld [vmem:[#allocation3 + $0x28] sm:$0xff]
      %v916 = vld [vmem:[#allocation3 + $0x30] sm:$0xff]
      %v917 = vld [vmem:[#allocation3 + $0x38] sm:$0xff]
      %v918 = vld [vmem:[#allocation3 + $0x40] sm:$0xff]
      %v919 = vld [vmem:[#allocation3 + $0x48] sm:$0xff]
      %v920 = vld [vmem:[#allocation3 + $0x50] sm:$0xff]
      %v921 = vld [vmem:[#allocation3 + $0x58] sm:$0xff]
      %v922 = vld [vmem:[#allocation3 + $0x60] sm:$0xff]
      %v923 = vld [vmem:[#allocation3 + $0x68] sm:$0xff]
      %v924 = vld [vmem:[#allocation3 + $0x70] sm:$0xff]
      %v925 = vld [vmem:[#allocation3 + $0x78] sm:$0xff]
      %v926 = vld [vmem:[#allocation3 + $0x80] sm:$0xff]
      %v927 = vld [vmem:[#allocation3 + $0x88] sm:$0xff]
      %v930 = vunpack.c.l.b16 %v908
      %v931 = vunpack.c.h.b16 %v908
      %v932 = vunpack.c.l.b16 %v909
      %v933 = vunpack.c.h.b16 %v909
      %v934 = vpack.c.b16 %v932, %v930
      %v935 = vpack.c.b16 %v933, %v931
      %v955 = vunpack.c.l.b16 %v910
      %v956 = vunpack.c.h.b16 %v910
      %v957 = vunpack.c.l.b16 %v911
      %v958 = vunpack.c.h.b16 %v911
      %v959 = vunpack.c.l.b16 %v912
      %v960 = vunpack.c.h.b16 %v912
      %v961 = vunpack.c.l.b16 %v913
      %v962 = vunpack.c.h.b16 %v913
      %v963 = vunpack.c.l.b16 %v914
      %v964 = vunpack.c.h.b16 %v914
      %v965 = vunpack.c.l.b16 %v915
      %v966 = vunpack.c.h.b16 %v915
      %v967 = vunpack.c.l.b16 %v916
      %v968 = vunpack.c.h.b16 %v916
      %v969 = vunpack.c.l.b16 %v917
      %v970 = vunpack.c.h.b16 %v917
      %v971 = vunpack.c.l.b16 %v918
      %v972 = vunpack.c.h.b16 %v918
      %v973 = vunpack.c.l.b16 %v919
      %v974 = vunpack.c.h.b16 %v919
      %v975 = vunpack.c.l.b16 %v920
      %v976 = vunpack.c.h.b16 %v920
      %v977 = vunpack.c.l.b16 %v921
      %v978 = vunpack.c.h.b16 %v921
      %v979 = vunpack.c.l.b16 %v922
      %v980 = vunpack.c.h.b16 %v922
      %v981 = vunpack.c.l.b16 %v923
      %v982 = vunpack.c.h.b16 %v923
      %v983 = vunpack.c.l.b16 %v924
      %v984 = vunpack.c.h.b16 %v924
      %v985 = vunpack.c.l.b16 %v925
      %v986 = vunpack.c.h.b16 %v925
      %v987 = vunpack.c.l.b16 %v926
      %v988 = vunpack.c.h.b16 %v926
      %v989 = vunpack.c.l.b16 %v927
      %v990 = vunpack.c.h.b16 %v927
      %v991 = vpack.c.b16 %v957, %v955
      %v992 = vpack.c.b16 %v958, %v956
      %v993 = vpack.c.b16 %v961, %v959
      %v994 = vpack.c.b16 %v962, %v960
      %v995 = vpack.c.b16 %v965, %v963
      %v996 = vpack.c.b16 %v966, %v964
      %v997 = vpack.c.b16 %v969, %v967
      %v998 = vpack.c.b16 %v970, %v968
      %v999 = vpack.c.b16 %v973, %v971
      %v1000 = vpack.c.b16 %v974, %v972
      %v1001 = vpack.c.b16 %v977, %v975
      %v1002 = vpack.c.b16 %v978, %v976
      %v1003 = vpack.c.b16 %v981, %v979
      %v1004 = vpack.c.b16 %v982, %v980
      %v1005 = vpack.c.b16 %v985, %v983
      %v1006 = vpack.c.b16 %v986, %v984
      %v1007 = vpack.c.b16 %v989, %v987
      %v1008 = vpack.c.b16 %v990, %v988
      %v1028 = vsel %vm591, %v935, 0
      %1030 = vmatpush.bf16.msra.mxu0 %v1005
      %1031 = vmatpush.bf16.msra.mxu0 %v1003
      %1032 = vmatpush.bf16.msra.mxu0 %v1001
      %1033 = vmatpush.bf16.msra.mxu0 %v999
      %1034 = vmatpush.bf16.msra.mxu0 %v997
      %1035 = vmatpush.bf16.msra.mxu0 %v995
      %1036 = vmatpush.bf16.msra.mxu0 %v993
      %1037 = vmatpush.bf16.msra.mxu0 %v991
      %1038 = vmatmul.bf16.gmra.mxu0 %v934
      %v1039 = vpop.f32.mrf.mxu0
      %v1040 = vadd.f32 0.0, %v1039
      %v1041 = vpop.f32.mrf.mxu0
      %v1042 = vadd.f32 0.0, %v1041
      %1043 = vdwg.mxu0
      %1044 = vmatpush.bf16.msra.mxu0 0
      %1045 = vmatpush.bf16.msra.mxu0 0
      %1046 = vmatpush.bf16.msra.mxu0 0
      %1047 = vmatpush.bf16.msra.mxu0 0
      %1048 = vmatpush.bf16.msra.mxu0 0
      %1049 = vmatpush.bf16.msra.mxu0 0
      %1050 = vmatpush.bf16.msra.mxu0 0
      %1051 = vmatpush.bf16.msra.mxu0 %v1007
      %1052 = vmatmul.bf16.gmra.mxu0 %v1028
      %v1053 = vpop.f32.mrf.mxu0
      %v1054 = vadd.f32 %v1040, %v1053
      %v1055 = vpop.f32.mrf.mxu0
      %v1056 = vadd.f32 %v1042, %v1055
      %1057 = vdwg.mxu0
      %1058 = vmatpush.bf16.msra.mxu0 %v1006
      %1059 = vmatpush.bf16.msra.mxu0 %v1004
      %1060 = vmatpush.bf16.msra.mxu0 %v1002
      %1061 = vmatpush.bf16.msra.mxu0 %v1000
      %1062 = vmatpush.bf16.msra.mxu0 %v998
      %1063 = vmatpush.bf16.msra.mxu0 %v996
      %1064 = vmatpush.bf16.msra.mxu0 %v994
      %1065 = vmatpush.bf16.msra.mxu0 %v992
      %1066 = vmatmul.bf16.gmra.mxu0 %v934
      %v1067 = vpop.f32.mrf.mxu0
      %v1068 = vadd.f32 0.0, %v1067
      %v1069 = vpop.f32.mrf.mxu0
      %v1070 = vadd.f32 0.0, %v1069
      %1071 = vdwg.mxu0
      %1072 = vmatpush.bf16.msra.mxu0 0
      %1073 = vmatpush.bf16.msra.mxu0 0
      %1074 = vmatpush.bf16.msra.mxu0 0
      %1075 = vmatpush.bf16.msra.mxu0 0
      %1076 = vmatpush.bf16.msra.mxu0 0
      %1077 = vmatpush.bf16.msra.mxu0 0
      %1078 = vmatpush.bf16.msra.mxu0 0
      %1079 = vmatpush.bf16.msra.mxu0 %v1008
      %1080 = vmatmul.bf16.gmra.mxu0 %v1028
      %v1081 = vpop.f32.mrf.mxu0
      %v1082 = vadd.f32 %v1068, %v1081
      %v1083 = vpop.f32.mrf.mxu0
      %v1084 = vadd.f32 %v1070, %v1083
      %1085 = vdwg.mxu0
      %s1086 = scalar_lea.vmem %s2, 16
      %v1087 = vld [vmem:[%s1086] sm:$0xff]
      %v1088 = vld [vmem:[%s1086 + $0x8] sm:$0xff]
      %1090 = vset.pattern.permute.xlu0 0
      %1091 = vperm.xlu0 %1090, %v1087
      %v1092 = vpop.permute.xlu0 %1091
      %1095 = vset.pattern.permute.xlu0 0
      %1096 = vperm.xlu0 %1095, %v1088
      %v1097 = vpop.permute.xlu0 %1096
      %v1099 = vmul.f32 %v1054, %v1092
      %v1100 = vmul.f32 %v1082, %v1092
      %v1101 = vmul.f32 %v1056, %v1097
      %v1102 = vmul.f32 %v1084, %v1097
      %s1103 = scalar_lea.vmem %s3, 16
      %v1104 = vld [vmem:[%s1103] sm:$0xff]
      %v1105 = vld [vmem:[%s1103 + $0x8] sm:$0xff]
      %1107 = vset.pattern.permute.xlu0 0
      %1108 = vperm.xlu0 %1107, %v1104
      %v1109 = vpop.permute.xlu0 %1108
      %1112 = vset.pattern.permute.xlu0 0
      %1113 = vperm.xlu0 %1112, %v1105
      %v1114 = vpop.permute.xlu0 %1113
      %v1116 = vadd.f32 %v1099, %v1109
      %v1117 = vadd.f32 %v1100, %v1109
      %v1118 = vadd.f32 %v1101, %v1114
      %v1119 = vadd.f32 %v1102, %v1114
      %v1120 = vmax.f32 %v1116, 0.0
      %v1121 = vmax.f32 %v1117, 0.0
      %v1122 = vmax.f32 %v1118, 0.0
      %v1123 = vmax.f32 %v1119, 0.0
      %1124 = vst [vmem:[#allocation2] sm:$0xff] %v1120
      %1125 = vst [vmem:[#allocation2 + $0x8] sm:$0xff] %v1121
      %1126 = vst [vmem:[#allocation2 + $0x10] sm:$0xff] %v1122
      %1127 = vst [vmem:[#allocation2 + $0x18] sm:$0xff] %v1123
      %v1128 = vld [vmem:[#allocation2] sm:$0xff]
      %v1129 = vld [vmem:[#allocation2 + $0x8] sm:$0xff]
      %v1130 = vld [vmem:[#allocation2 + $0x10] sm:$0xff]
      %v1131 = vld [vmem:[#allocation2 + $0x18] sm:$0xff]
      %1132 = vrot.lane.b32.xlu0 %v1128, 17
      %v1133 = vpop.permute.xlu0 %1132
      %1134 = vrot.lane.b32.xlu0 %v1130, 17
      %v1135 = vpop.permute.xlu0 %1134
      %1136 = vrot.lane.b32.xlu0 %v1129, 17
      %v1137 = vpop.permute.xlu0 %1136
      %1138 = vrot.lane.b32.xlu0 %v1131, 17
      %v1139 = vpop.permute.xlu0 %1138
      %v1140 = vsel %vm253, %v1133, %v1137
      %v1141 = vsel %vm253, %v1135, %v1139
      %v1142 = vsel %vm253, %v1137, %v1133
      %v1143 = vsel %vm253, %v1139, %v1135
      %v1144 = vld [vmem:[%s4] sm:$0x3]
      %v1146 = vperm.slane %v1144, 0
      %v1147 = vperm.slane %v1144, 1
      %v1150 = vmul.f32 %v1142, %v1146
      %v1151 = vmul.f32 %v1140, %v1147
      %v1152 = vmul.f32 %v1143, %v1146
      %v1153 = vmul.f32 %v1141, %v1147
      %v1154 = vpack.c.bf16 %v1151, %v1150
      %v1155 = vpack.c.bf16 %v1153, %v1152
      %1156 = vst [vmem:[#allocation3] sm:$0xff] %v1154
      %1157 = vst [vmem:[#allocation3 + $0x8] sm:$0xff] %v1155
      %1158 = vrot.lane.b32.xlu0 %v1128, 16
      %v1159 = vpop.permute.xlu0 %1158
      %1160 = vrot.lane.b32.xlu0 %v1130, 16
      %v1161 = vpop.permute.xlu0 %1160
      %1162 = vrot.lane.b32.xlu0 %v1129, 16
      %v1163 = vpop.permute.xlu0 %1162
      %1164 = vrot.lane.b32.xlu0 %v1131, 16
      %v1165 = vpop.permute.xlu0 %1164
      %v1166 = vsel %vm280, %v1159, %v1163
      %v1167 = vsel %vm280, %v1161, %v1165
      %v1168 = vsel %vm280, %v1163, %v1159
      %v1169 = vsel %vm280, %v1165, %v1161
      %v1170 = vld [vmem:[%s285] sm:$0x3]
      %v1172 = vperm.slane %v1170, 0
      %v1173 = vperm.slane %v1170, 1
      %v1176 = vmul.f32 %v1168, %v1172
      %v1177 = vmul.f32 %v1166, %v1173
      %v1178 = vmul.f32 %v1169, %v1172
      %v1179 = vmul.f32 %v1167, %v1173
      %v1180 = vpack.c.bf16 %v1177, %v1176
      %v1181 = vpack.c.bf16 %v1179, %v1178
      %1182 = vst [vmem:[#allocation3 + $0x10] sm:$0xff] %v1180
      %1183 = vst [vmem:[#allocation3 + $0x18] sm:$0xff] %v1181
      %1184 = vrot.lane.b32.xlu0 %v1128, 15
      %v1185 = vpop.permute.xlu0 %1184
      %1186 = vrot.lane.b32.xlu0 %v1130, 15
      %v1187 = vpop.permute.xlu0 %1186
      %1188 = vrot.lane.b32.xlu0 %v1129, 15
      %v1189 = vpop.permute.xlu0 %1188
      %1190 = vrot.lane.b32.xlu0 %v1131, 15
      %v1191 = vpop.permute.xlu0 %1190
      %v1192 = vsel %vm308, %v1185, %v1189
      %v1193 = vsel %vm308, %v1187, %v1191
      %v1194 = vsel %vm308, %v1189, %v1185
      %v1195 = vsel %vm308, %v1191, %v1187
      %v1196 = vld [vmem:[%s313] sm:$0x3]
      %v1198 = vperm.slane %v1196, 0
      %v1199 = vperm.slane %v1196, 1
      %v1202 = vmul.f32 %v1194, %v1198
      %v1203 = vmul.f32 %v1192, %v1199
      %v1204 = vmul.f32 %v1195, %v1198
      %v1205 = vmul.f32 %v1193, %v1199
      %v1206 = vpack.c.bf16 %v1203, %v1202
      %v1207 = vpack.c.bf16 %v1205, %v1204
      %1208 = vst [vmem:[#allocation3 + $0x20] sm:$0xff] %v1206
      %1209 = vst [vmem:[#allocation3 + $0x28] sm:$0xff] %v1207
      %1210 = vrot.lane.b32.xlu0 %v1128, 1
      %v1211 = vpop.permute.xlu0 %1210
      %1212 = vrot.lane.b32.xlu0 %v1130, 1
      %v1213 = vpop.permute.xlu0 %1212
      %1214 = vrot.lane.b32.xlu0 %v1129, 1
      %v1215 = vpop.permute.xlu0 %1214
      %1216 = vrot.lane.b32.xlu0 %v1131, 1
      %v1217 = vpop.permute.xlu0 %1216
      %v1218 = vsel %vm336, %v1211, %v1215
      %v1219 = vsel %vm336, %v1213, %v1217
      %v1220 = vsel %vm336, %v1215, %v1211
      %v1221 = vsel %vm336, %v1217, %v1213
      %v1222 = vld [vmem:[%s341] sm:$0x3]
      %v1224 = vperm.slane %v1222, 0
      %v1225 = vperm.slane %v1222, 1
      %v1228 = vmul.f32 %v1220, %v1224
      %v1229 = vmul.f32 %v1218, %v1225
      %v1230 = vmul.f32 %v1221, %v1224
      %v1231 = vmul.f32 %v1219, %v1225
      %v1232 = vpack.c.bf16 %v1229, %v1228
      %v1233 = vpack.c.bf16 %v1231, %v1230
      %1234 = vst [vmem:[#allocation3 + $0x30] sm:$0xff] %v1232
      %1235 = vst [vmem:[#allocation3 + $0x38] sm:$0xff] %v1233
      %v1236 = vpack.c.bf16 %v1129, %v1128
      %v1237 = vpack.c.bf16 %v1131, %v1130
      %1238 = vst [vmem:[#allocation3 + $0x40] sm:$0xff] %v1236
      %1239 = vst [vmem:[#allocation3 + $0x48] sm:$0xff] %v1237
      %1240 = vrot.lane.b32.xlu0 %v1128, 127
      %v1241 = vpop.permute.xlu0 %1240
      %1242 = vrot.lane.b32.xlu0 %v1130, 127
      %v1243 = vpop.permute.xlu0 %1242
      %1244 = vrot.lane.b32.xlu0 %v1129, 127
      %v1245 = vpop.permute.xlu0 %1244
      %1246 = vrot.lane.b32.xlu0 %v1131, 127
      %v1247 = vpop.permute.xlu0 %1246
      %v1248 = vsel %vm368, %v1241, %v1245
      %v1249 = vsel %vm368, %v1243, %v1247
      %v1250 = vsel %vm368, %v1245, %v1241
      %v1251 = vsel %vm368, %v1247, %v1243
      %v1252 = vld [vmem:[%s373] sm:$0x3]
      %v1254 = vperm.slane %v1252, 0
      %v1255 = vperm.slane %v1252, 1
      %v1258 = vmul.f32 %v1248, %v1254
      %v1259 = vmul.f32 %v1250, %v1255
      %v1260 = vmul.f32 %v1249, %v1254
      %v1261 = vmul.f32 %v1251, %v1255
      %v1262 = vpack.c.bf16 %v1259, %v1258
      %v1263 = vpack.c.bf16 %v1261, %v1260
      %1264 = vst [vmem:[#allocation3 + $0x50] sm:$0xff] %v1262
      %1265 = vst [vmem:[#allocation3 + $0x58] sm:$0xff] %v1263
      %1266 = vrot.lane.b32.xlu0 %v1128, 113
      %v1267 = vpop.permute.xlu0 %1266
      %1268 = vrot.lane.b32.xlu0 %v1130, 113
      %v1269 = vpop.permute.xlu0 %1268
      %1270 = vrot.lane.b32.xlu0 %v1129, 113
      %v1271 = vpop.permute.xlu0 %1270
      %1272 = vrot.lane.b32.xlu0 %v1131, 113
      %v1273 = vpop.permute.xlu0 %1272
      %v1274 = vsel %vm396, %v1267, %v1271
      %v1275 = vsel %vm396, %v1269, %v1273
      %v1276 = vsel %vm396, %v1271, %v1267
      %v1277 = vsel %vm396, %v1273, %v1269
      %v1278 = vld [vmem:[%s401] sm:$0x3]
      %v1280 = vperm.slane %v1278, 0
      %v1281 = vperm.slane %v1278, 1
      %v1284 = vmul.f32 %v1274, %v1280
      %v1285 = vmul.f32 %v1276, %v1281
      %v1286 = vmul.f32 %v1275, %v1280
      %v1287 = vmul.f32 %v1277, %v1281
      %v1288 = vpack.c.bf16 %v1285, %v1284
      %v1289 = vpack.c.bf16 %v1287, %v1286
      %1290 = vst [vmem:[#allocation3 + $0x60] sm:$0xff] %v1288
      %1291 = vst [vmem:[#allocation3 + $0x68] sm:$0xff] %v1289
      %1292 = vrot.lane.b32.xlu0 %v1128, 112
      %v1293 = vpop.permute.xlu0 %1292
      %1294 = vrot.lane.b32.xlu0 %v1130, 112
      %v1295 = vpop.permute.xlu0 %1294
      %1296 = vrot.lane.b32.xlu0 %v1129, 112
      %v1297 = vpop.permute.xlu0 %1296
      %1298 = vrot.lane.b32.xlu0 %v1131, 112
      %v1299 = vpop.permute.xlu0 %1298
      %v1300 = vsel %vm424, %v1293, %v1297
      %v1301 = vsel %vm424, %v1295, %v1299
      %v1302 = vsel %vm424, %v1297, %v1293
      %v1303 = vsel %vm424, %v1299, %v1295
      %v1304 = vld [vmem:[%s429] sm:$0x3]
      %v1306 = vperm.slane %v1304, 0
      %v1307 = vperm.slane %v1304, 1
      %v1310 = vmul.f32 %v1300, %v1306
      %v1311 = vmul.f32 %v1302, %v1307
      %v1312 = vmul.f32 %v1301, %v1306
      %v1313 = vmul.f32 %v1303, %v1307
      %v1314 = vpack.c.bf16 %v1311, %v1310
      %v1315 = vpack.c.bf16 %v1313, %v1312
      %1316 = vst [vmem:[#allocation3 + $0x70] sm:$0xff] %v1314
      %1317 = vst [vmem:[#allocation3 + $0x78] sm:$0xff] %v1315
      %1318 = vrot.lane.b32.xlu0 %v1128, 111
      %v1319 = vpop.permute.xlu0 %1318
      %1320 = vrot.lane.b32.xlu0 %v1130, 111
      %v1321 = vpop.permute.xlu0 %1320
      %1322 = vrot.lane.b32.xlu0 %v1129, 111
      %v1323 = vpop.permute.xlu0 %1322
      %1324 = vrot.lane.b32.xlu0 %v1131, 111
      %v1325 = vpop.permute.xlu0 %1324
      %v1326 = vsel %vm452, %v1319, %v1323
      %v1327 = vsel %vm452, %v1321, %v1325
      %v1328 = vsel %vm452, %v1323, %v1319
      %v1329 = vsel %vm452, %v1325, %v1321
      %v1330 = vld [vmem:[%s457] sm:$0x3]
      %v1332 = vperm.slane %v1330, 0
      %v1333 = vperm.slane %v1330, 1
      %v1336 = vmul.f32 %v1326, %v1332
      %v1337 = vmul.f32 %v1328, %v1333
      %v1338 = vmul.f32 %v1327, %v1332
      %v1339 = vmul.f32 %v1329, %v1333
      %v1340 = vpack.c.bf16 %v1337, %v1336
      %v1341 = vpack.c.bf16 %v1339, %v1338
      %1342 = vst [vmem:[#allocation3 + $0x80] sm:$0xff] %v1340
      %1343 = vst [vmem:[#allocation3 + $0x88] sm:$0xff] %v1341
      %s1344 = scalar_lea.vmem %s1, 32
      %v1345 = vld [vmem:[%s1344] sm:$0xff]
      %v1346 = vld [vmem:[%s1344 + $0x8] sm:$0xff]
      %v1347 = vld [vmem:[#allocation3] sm:$0xff]
      %v1348 = vld [vmem:[#allocation3 + $0x8] sm:$0xff]
      %v1349 = vld [vmem:[#allocation3 + $0x10] sm:$0xff]
      %v1350 = vld [vmem:[#allocation3 + $0x18] sm:$0xff]
      %v1351 = vld [vmem:[#allocation3 + $0x20] sm:$0xff]
      %v1352 = vld [vmem:[#allocation3 + $0x28] sm:$0xff]
      %v1353 = vld [vmem:[#allocation3 + $0x30] sm:$0xff]
      %v1354 = vld [vmem:[#allocation3 + $0x38] sm:$0xff]
      %v1355 = vld [vmem:[#allocation3 + $0x40] sm:$0xff]
      %v1356 = vld [vmem:[#allocation3 + $0x48] sm:$0xff]
      %v1357 = vld [vmem:[#allocation3 + $0x50] sm:$0xff]
      %v1358 = vld [vmem:[#allocation3 + $0x58] sm:$0xff]
      %v1359 = vld [vmem:[#allocation3 + $0x60] sm:$0xff]
      %v1360 = vld [vmem:[#allocation3 + $0x68] sm:$0xff]
      %v1361 = vld [vmem:[#allocation3 + $0x70] sm:$0xff]
      %v1362 = vld [vmem:[#allocation3 + $0x78] sm:$0xff]
      %v1363 = vld [vmem:[#allocation3 + $0x80] sm:$0xff]
      %v1364 = vld [vmem:[#allocation3 + $0x88] sm:$0xff]
      %v1367 = vunpack.c.l.b16 %v1345
      %v1368 = vunpack.c.h.b16 %v1345
      %v1369 = vunpack.c.l.b16 %v1346
      %v1370 = vunpack.c.h.b16 %v1346
      %v1371 = vpack.c.b16 %v1369, %v1367
      %v1372 = vpack.c.b16 %v1370, %v1368
      %v1392 = vunpack.c.l.b16 %v1347
      %v1393 = vunpack.c.h.b16 %v1347
      %v1394 = vunpack.c.l.b16 %v1348
      %v1395 = vunpack.c.h.b16 %v1348
      %v1396 = vunpack.c.l.b16 %v1349
      %v1397 = vunpack.c.h.b16 %v1349
      %v1398 = vunpack.c.l.b16 %v1350
      %v1399 = vunpack.c.h.b16 %v1350
      %v1400 = vunpack.c.l.b16 %v1351
      %v1401 = vunpack.c.h.b16 %v1351
      %v1402 = vunpack.c.l.b16 %v1352
      %v1403 = vunpack.c.h.b16 %v1352
      %v1404 = vunpack.c.l.b16 %v1353
      %v1405 = vunpack.c.h.b16 %v1353
      %v1406 = vunpack.c.l.b16 %v1354
      %v1407 = vunpack.c.h.b16 %v1354
      %v1408 = vunpack.c.l.b16 %v1355
      %v1409 = vunpack.c.h.b16 %v1355
      %v1410 = vunpack.c.l.b16 %v1356
      %v1411 = vunpack.c.h.b16 %v1356
      %v1412 = vunpack.c.l.b16 %v1357
      %v1413 = vunpack.c.h.b16 %v1357
      %v1414 = vunpack.c.l.b16 %v1358
      %v1415 = vunpack.c.h.b16 %v1358
      %v1416 = vunpack.c.l.b16 %v1359
      %v1417 = vunpack.c.h.b16 %v1359
      %v1418 = vunpack.c.l.b16 %v1360
      %v1419 = vunpack.c.h.b16 %v1360
      %v1420 = vunpack.c.l.b16 %v1361
      %v1421 = vunpack.c.h.b16 %v1361
      %v1422 = vunpack.c.l.b16 %v1362
      %v1423 = vunpack.c.h.b16 %v1362
      %v1424 = vunpack.c.l.b16 %v1363
      %v1425 = vunpack.c.h.b16 %v1363
      %v1426 = vunpack.c.l.b16 %v1364
      %v1427 = vunpack.c.h.b16 %v1364
      %v1428 = vpack.c.b16 %v1394, %v1392
      %v1429 = vpack.c.b16 %v1395, %v1393
      %v1430 = vpack.c.b16 %v1398, %v1396
      %v1431 = vpack.c.b16 %v1399, %v1397
      %v1432 = vpack.c.b16 %v1402, %v1400
      %v1433 = vpack.c.b16 %v1403, %v1401
      %v1434 = vpack.c.b16 %v1406, %v1404
      %v1435 = vpack.c.b16 %v1407, %v1405
      %v1436 = vpack.c.b16 %v1410, %v1408
      %v1437 = vpack.c.b16 %v1411, %v1409
      %v1438 = vpack.c.b16 %v1414, %v1412
      %v1439 = vpack.c.b16 %v1415, %v1413
      %v1440 = vpack.c.b16 %v1418, %v1416
      %v1441 = vpack.c.b16 %v1419, %v1417
      %v1442 = vpack.c.b16 %v1422, %v1420
      %v1443 = vpack.c.b16 %v1423, %v1421
      %v1444 = vpack.c.b16 %v1426, %v1424
      %v1445 = vpack.c.b16 %v1427, %v1425
      %v1465 = vsel %vm591, %v1372, 0
      %1467 = vmatpush.bf16.msra.mxu0 %v1442
      %1468 = vmatpush.bf16.msra.mxu0 %v1440
      %1469 = vmatpush.bf16.msra.mxu0 %v1438
      %1470 = vmatpush.bf16.msra.mxu0 %v1436
      %1471 = vmatpush.bf16.msra.mxu0 %v1434
      %1472 = vmatpush.bf16.msra.mxu0 %v1432
      %1473 = vmatpush.bf16.msra.mxu0 %v1430
      %1474 = vmatpush.bf16.msra.mxu0 %v1428
      %1475 = vmatmul.bf16.gmra.mxu0 %v1371
      %v1476 = vpop.f32.mrf.mxu0
      %v1477 = vadd.f32 0.0, %v1476
      %v1478 = vpop.f32.mrf.mxu0
      %v1479 = vadd.f32 0.0, %v1478
      %1480 = vdwg.mxu0
      %1481 = vmatpush.bf16.msra.mxu0 0
      %1482 = vmatpush.bf16.msra.mxu0 0
      %1483 = vmatpush.bf16.msra.mxu0 0
      %1484 = vmatpush.bf16.msra.mxu0 0
      %1485 = vmatpush.bf16.msra.mxu0 0
      %1486 = vmatpush.bf16.msra.mxu0 0
      %1487 = vmatpush.bf16.msra.mxu0 0
      %1488 = vmatpush.bf16.msra.mxu0 %v1444
      %1489 = vmatmul.bf16.gmra.mxu0 %v1465
      %v1490 = vpop.f32.mrf.mxu0
      %v1491 = vadd.f32 %v1477, %v1490
      %v1492 = vpop.f32.mrf.mxu0
      %v1493 = vadd.f32 %v1479, %v1492
      %1494 = vdwg.mxu0
      %1495 = vmatpush.bf16.msra.mxu0 %v1443
      %1496 = vmatpush.bf16.msra.mxu0 %v1441
      %1497 = vmatpush.bf16.msra.mxu0 %v1439
      %1498 = vmatpush.bf16.msra.mxu0 %v1437
      %1499 = vmatpush.bf16.msra.mxu0 %v1435
      %1500 = vmatpush.bf16.msra.mxu0 %v1433
      %1501 = vmatpush.bf16.msra.mxu0 %v1431
      %1502 = vmatpush.bf16.msra.mxu0 %v1429
      %1503 = vmatmul.bf16.gmra.mxu0 %v1371
      %v1504 = vpop.f32.mrf.mxu0
      %v1505 = vadd.f32 0.0, %v1504
      %v1506 = vpop.f32.mrf.mxu0
      %v1507 = vadd.f32 0.0, %v1506
      %1508 = vdwg.mxu0
      %1509 = vmatpush.bf16.msra.mxu0 0
      %1510 = vmatpush.bf16.msra.mxu0 0
      %1511 = vmatpush.bf16.msra.mxu0 0
      %1512 = vmatpush.bf16.msra.mxu0 0
      %1513 = vmatpush.bf16.msra.mxu0 0
      %1514 = vmatpush.bf16.msra.mxu0 0
      %1515 = vmatpush.bf16.msra.mxu0 0
      %1516 = vmatpush.bf16.msra.mxu0 %v1445
      %1517 = vmatmul.bf16.gmra.mxu0 %v1465
      %v1518 = vpop.f32.mrf.mxu0
      %v1519 = vadd.f32 %v1505, %v1518
      %v1520 = vpop.f32.mrf.mxu0
      %v1521 = vadd.f32 %v1507, %v1520
      %1522 = vdwg.mxu0
      %s1523 = scalar_lea.vmem %s2, 32
      %v1524 = vld [vmem:[%s1523] sm:$0xff]
      %v1525 = vld [vmem:[%s1523 + $0x8] sm:$0xff]
      %1527 = vset.pattern.permute.xlu0 0
      %1528 = vperm.xlu0 %1527, %v1524
      %v1529 = vpop.permute.xlu0 %1528
      %1532 = vset.pattern.permute.xlu0 0
      %1533 = vperm.xlu0 %1532, %v1525
      %v1534 = vpop.permute.xlu0 %1533
      %v1536 = vmul.f32 %v1491, %v1529
      %v1537 = vmul.f32 %v1519, %v1529
      %v1538 = vmul.f32 %v1493, %v1534
      %v1539 = vmul.f32 %v1521, %v1534
      %s1540 = scalar_lea.vmem %s3, 32
      %v1541 = vld [vmem:[%s1540] sm:$0xff]
      %v1542 = vld [vmem:[%s1540 + $0x8] sm:$0xff]
      %1544 = vset.pattern.permute.xlu0 0
      %1545 = vperm.xlu0 %1544, %v1541
      %v1546 = vpop.permute.xlu0 %1545
      %1549 = vset.pattern.permute.xlu0 0
      %1550 = vperm.xlu0 %1549, %v1542
      %v1551 = vpop.permute.xlu0 %1550
      %v1553 = vadd.f32 %v1536, %v1546
      %v1554 = vadd.f32 %v1537, %v1546
      %v1555 = vadd.f32 %v1538, %v1551
      %v1556 = vadd.f32 %v1539, %v1551
      %v1557 = vmax.f32 %v1553, 0.0
      %v1558 = vmax.f32 %v1554, 0.0
      %v1559 = vmax.f32 %v1555, 0.0
      %v1560 = vmax.f32 %v1556, 0.0
      %1561 = vst [vmem:[#allocation2] sm:$0xff] %v1557
      %1562 = vst [vmem:[#allocation2 + $0x8] sm:$0xff] %v1558
      %1563 = vst [vmem:[#allocation2 + $0x10] sm:$0xff] %v1559
      %1564 = vst [vmem:[#allocation2 + $0x18] sm:$0xff] %v1560
      %v1565 = vld [vmem:[#allocation2] sm:$0xff]
      %v1566 = vld [vmem:[#allocation2 + $0x8] sm:$0xff]
      %v1567 = vld [vmem:[#allocation2 + $0x10] sm:$0xff]
      %v1568 = vld [vmem:[#allocation2 + $0x18] sm:$0xff]
      %1569 = vrot.lane.b32.xlu0 %v1565, 17
      %v1570 = vpop.permute.xlu0 %1569
      %1571 = vrot.lane.b32.xlu0 %v1567, 17
      %v1572 = vpop.permute.xlu0 %1571
      %1573 = vrot.lane.b32.xlu0 %v1566, 17
      %v1574 = vpop.permute.xlu0 %1573
      %1575 = vrot.lane.b32.xlu0 %v1568, 17
      %v1576 = vpop.permute.xlu0 %1575
      %v1577 = vsel %vm253, %v1570, %v1574
      %v1578 = vsel %vm253, %v1572, %v1576
      %v1579 = vsel %vm253, %v1574, %v1570
      %v1580 = vsel %vm253, %v1576, %v1572
      %v1581 = vld [vmem:[%s4] sm:$0x3]
      %v1583 = vperm.slane %v1581, 0
      %v1584 = vperm.slane %v1581, 1
      %v1587 = vmul.f32 %v1579, %v1583
      %v1588 = vmul.f32 %v1577, %v1584
      %v1589 = vmul.f32 %v1580, %v1583
      %v1590 = vmul.f32 %v1578, %v1584
      %v1591 = vpack.c.bf16 %v1588, %v1587
      %v1592 = vpack.c.bf16 %v1590, %v1589
      %1593 = vst [vmem:[#allocation3] sm:$0xff] %v1591
      %1594 = vst [vmem:[#allocation3 + $0x8] sm:$0xff] %v1592
      %1595 = vrot.lane.b32.xlu0 %v1565, 16
      %v1596 = vpop.permute.xlu0 %1595
      %1597 = vrot.lane.b32.xlu0 %v1567, 16
      %v1598 = vpop.permute.xlu0 %1597
      %1599 = vrot.lane.b32.xlu0 %v1566, 16
      %v1600 = vpop.permute.xlu0 %1599
      %1601 = vrot.lane.b32.xlu0 %v1568, 16
      %v1602 = vpop.permute.xlu0 %1601
      %v1603 = vsel %vm280, %v1596, %v1600
      %v1604 = vsel %vm280, %v1598, %v1602
      %v1605 = vsel %vm280, %v1600, %v1596
      %v1606 = vsel %vm280, %v1602, %v1598
      %v1607 = vld [vmem:[%s285] sm:$0x3]
      %v1609 = vperm.slane %v1607, 0
      %v1610 = vperm.slane %v1607, 1
      %v1613 = vmul.f32 %v1605, %v1609
      %v1614 = vmul.f32 %v1603, %v1610
      %v1615 = vmul.f32 %v1606, %v1609
      %v1616 = vmul.f32 %v1604, %v1610
      %v1617 = vpack.c.bf16 %v1614, %v1613
      %v1618 = vpack.c.bf16 %v1616, %v1615
      %1619 = vst [vmem:[#allocation3 + $0x10] sm:$0xff] %v1617
      %1620 = vst [vmem:[#allocation3 + $0x18] sm:$0xff] %v1618
      %1621 = vrot.lane.b32.xlu0 %v1565, 15
      %v1622 = vpop.permute.xlu0 %1621
      %1623 = vrot.lane.b32.xlu0 %v1567, 15
      %v1624 = vpop.permute.xlu0 %1623
      %1625 = vrot.lane.b32.xlu0 %v1566, 15
      %v1626 = vpop.permute.xlu0 %1625
      %1627 = vrot.lane.b32.xlu0 %v1568, 15
      %v1628 = vpop.permute.xlu0 %1627
      %v1629 = vsel %vm308, %v1622, %v1626
      %v1630 = vsel %vm308, %v1624, %v1628
      %v1631 = vsel %vm308, %v1626, %v1622
      %v1632 = vsel %vm308, %v1628, %v1624
      %v1633 = vld [vmem:[%s313] sm:$0x3]
      %v1635 = vperm.slane %v1633, 0
      %v1636 = vperm.slane %v1633, 1
      %v1639 = vmul.f32 %v1631, %v1635
      %v1640 = vmul.f32 %v1629, %v1636
      %v1641 = vmul.f32 %v1632, %v1635
      %v1642 = vmul.f32 %v1630, %v1636
      %v1643 = vpack.c.bf16 %v1640, %v1639
      %v1644 = vpack.c.bf16 %v1642, %v1641
      %1645 = vst [vmem:[#allocation3 + $0x20] sm:$0xff] %v1643
      %1646 = vst [vmem:[#allocation3 + $0x28] sm:$0xff] %v1644
      %1647 = vrot.lane.b32.xlu0 %v1565, 1
      %v1648 = vpop.permute.xlu0 %1647
      %1649 = vrot.lane.b32.xlu0 %v1567, 1
      %v1650 = vpop.permute.xlu0 %1649
      %1651 = vrot.lane.b32.xlu0 %v1566, 1
      %v1652 = vpop.permute.xlu0 %1651
      %1653 = vrot.lane.b32.xlu0 %v1568, 1
      %v1654 = vpop.permute.xlu0 %1653
      %v1655 = vsel %vm336, %v1648, %v1652
      %v1656 = vsel %vm336, %v1650, %v1654
      %v1657 = vsel %vm336, %v1652, %v1648
      %v1658 = vsel %vm336, %v1654, %v1650
      %v1659 = vld [vmem:[%s341] sm:$0x3]
      %v1661 = vperm.slane %v1659, 0
      %v1662 = vperm.slane %v1659, 1
      %v1665 = vmul.f32 %v1657, %v1661
      %v1666 = vmul.f32 %v1655, %v1662
      %v1667 = vmul.f32 %v1658, %v1661
      %v1668 = vmul.f32 %v1656, %v1662
      %v1669 = vpack.c.bf16 %v1666, %v1665
      %v1670 = vpack.c.bf16 %v1668, %v1667
      %1671 = vst [vmem:[#allocation3 + $0x30] sm:$0xff] %v1669
      %1672 = vst [vmem:[#allocation3 + $0x38] sm:$0xff] %v1670
      %v1673 = vpack.c.bf16 %v1566, %v1565
      %v1674 = vpack.c.bf16 %v1568, %v1567
      %1675 = vst [vmem:[#allocation3 + $0x40] sm:$0xff] %v1673
      %1676 = vst [vmem:[#allocation3 + $0x48] sm:$0xff] %v1674
      %1677 = vrot.lane.b32.xlu0 %v1565, 127
      %v1678 = vpop.permute.xlu0 %1677
      %1679 = vrot.lane.b32.xlu0 %v1567, 127
      %v1680 = vpop.permute.xlu0 %1679
      %1681 = vrot.lane.b32.xlu0 %v1566, 127
      %v1682 = vpop.permute.xlu0 %1681
      %1683 = vrot.lane.b32.xlu0 %v1568, 127
      %v1684 = vpop.permute.xlu0 %1683
      %v1685 = vsel %vm368, %v1678, %v1682
      %v1686 = vsel %vm368, %v1680, %v1684
      %v1687 = vsel %vm368, %v1682, %v1678
      %v1688 = vsel %vm368, %v1684, %v1680
      %v1689 = vld [vmem:[%s373] sm:$0x3]
      %v1691 = vperm.slane %v1689, 0
      %v1692 = vperm.slane %v1689, 1
      %v1695 = vmul.f32 %v1685, %v1691
      %v1696 = vmul.f32 %v1687, %v1692
      %v1697 = vmul.f32 %v1686, %v1691
      %v1698 = vmul.f32 %v1688, %v1692
      %v1699 = vpack.c.bf16 %v1696, %v1695
      %v1700 = vpack.c.bf16 %v1698, %v1697
      %1701 = vst [vmem:[#allocation3 + $0x50] sm:$0xff] %v1699
      %1702 = vst [vmem:[#allocation3 + $0x58] sm:$0xff] %v1700
      %1703 = vrot.lane.b32.xlu0 %v1565, 113
      %v1704 = vpop.permute.xlu0 %1703
      %1705 = vrot.lane.b32.xlu0 %v1567, 113
      %v1706 = vpop.permute.xlu0 %1705
      %1707 = vrot.lane.b32.xlu0 %v1566, 113
      %v1708 = vpop.permute.xlu0 %1707
      %1709 = vrot.lane.b32.xlu0 %v1568, 113
      %v1710 = vpop.permute.xlu0 %1709
      %v1711 = vsel %vm396, %v1704, %v1708
      %v1712 = vsel %vm396, %v1706, %v1710
      %v1713 = vsel %vm396, %v1708, %v1704
      %v1714 = vsel %vm396, %v1710, %v1706
      %v1715 = vld [vmem:[%s401] sm:$0x3]
      %v1717 = vperm.slane %v1715, 0
      %v1718 = vperm.slane %v1715, 1
      %v1721 = vmul.f32 %v1711, %v1717
      %v1722 = vmul.f32 %v1713, %v1718
      %v1723 = vmul.f32 %v1712, %v1717
      %v1724 = vmul.f32 %v1714, %v1718
      %v1725 = vpack.c.bf16 %v1722, %v1721
      %v1726 = vpack.c.bf16 %v1724, %v1723
      %1727 = vst [vmem:[#allocation3 + $0x60] sm:$0xff] %v1725
      %1728 = vst [vmem:[#allocation3 + $0x68] sm:$0xff] %v1726
      %1729 = vrot.lane.b32.xlu0 %v1565, 112
      %v1730 = vpop.permute.xlu0 %1729
      %1731 = vrot.lane.b32.xlu0 %v1567, 112
      %v1732 = vpop.permute.xlu0 %1731
      %1733 = vrot.lane.b32.xlu0 %v1566, 112
      %v1734 = vpop.permute.xlu0 %1733
      %1735 = vrot.lane.b32.xlu0 %v1568, 112
      %v1736 = vpop.permute.xlu0 %1735
      %v1737 = vsel %vm424, %v1730, %v1734
      %v1738 = vsel %vm424, %v1732, %v1736
      %v1739 = vsel %vm424, %v1734, %v1730
      %v1740 = vsel %vm424, %v1736, %v1732
      %v1741 = vld [vmem:[%s429] sm:$0x3]
      %v1743 = vperm.slane %v1741, 0
      %v1744 = vperm.slane %v1741, 1
      %v1747 = vmul.f32 %v1737, %v1743
      %v1748 = vmul.f32 %v1739, %v1744
      %v1749 = vmul.f32 %v1738, %v1743
      %v1750 = vmul.f32 %v1740, %v1744
      %v1751 = vpack.c.bf16 %v1748, %v1747
      %v1752 = vpack.c.bf16 %v1750, %v1749
      %1753 = vst [vmem:[#allocation3 + $0x70] sm:$0xff] %v1751
      %1754 = vst [vmem:[#allocation3 + $0x78] sm:$0xff] %v1752
      %1755 = vrot.lane.b32.xlu0 %v1565, 111
      %v1756 = vpop.permute.xlu0 %1755
      %1757 = vrot.lane.b32.xlu0 %v1567, 111
      %v1758 = vpop.permute.xlu0 %1757
      %1759 = vrot.lane.b32.xlu0 %v1566, 111
      %v1760 = vpop.permute.xlu0 %1759
      %1761 = vrot.lane.b32.xlu0 %v1568, 111
      %v1762 = vpop.permute.xlu0 %1761
      %v1763 = vsel %vm452, %v1756, %v1760
      %v1764 = vsel %vm452, %v1758, %v1762
      %v1765 = vsel %vm452, %v1760, %v1756
      %v1766 = vsel %vm452, %v1762, %v1758
      %v1767 = vld [vmem:[%s457] sm:$0x3]
      %v1769 = vperm.slane %v1767, 0
      %v1770 = vperm.slane %v1767, 1
      %v1773 = vmul.f32 %v1763, %v1769
      %v1774 = vmul.f32 %v1765, %v1770
      %v1775 = vmul.f32 %v1764, %v1769
      %v1776 = vmul.f32 %v1766, %v1770
      %v1777 = vpack.c.bf16 %v1774, %v1773
      %v1778 = vpack.c.bf16 %v1776, %v1775
      %1779 = vst [vmem:[#allocation3 + $0x80] sm:$0xff] %v1777
      %1780 = vst [vmem:[#allocation3 + $0x88] sm:$0xff] %v1778
      %s1781 = scalar_lea.vmem %s1, 48
      %v1782 = vld [vmem:[%s1781] sm:$0xff]
      %v1783 = vld [vmem:[%s1781 + $0x8] sm:$0xff]
      %v1784 = vld [vmem:[#allocation3] sm:$0xff]
      %v1785 = vld [vmem:[#allocation3 + $0x8] sm:$0xff]
      %v1786 = vld [vmem:[#allocation3 + $0x10] sm:$0xff]
      %v1787 = vld [vmem:[#allocation3 + $0x18] sm:$0xff]
      %v1788 = vld [vmem:[#allocation3 + $0x20] sm:$0xff]
      %v1789 = vld [vmem:[#allocation3 + $0x28] sm:$0xff]
      %v1790 = vld [vmem:[#allocation3 + $0x30] sm:$0xff]
      %v1791 = vld [vmem:[#allocation3 + $0x38] sm:$0xff]
      %v1792 = vld [vmem:[#allocation3 + $0x40] sm:$0xff]
      %v1793 = vld [vmem:[#allocation3 + $0x48] sm:$0xff]
      %v1794 = vld [vmem:[#allocation3 + $0x50] sm:$0xff]
      %v1795 = vld [vmem:[#allocation3 + $0x58] sm:$0xff]
      %v1796 = vld [vmem:[#allocation3 + $0x60] sm:$0xff]
      %v1797 = vld [vmem:[#allocation3 + $0x68] sm:$0xff]
      %v1798 = vld [vmem:[#allocation3 + $0x70] sm:$0xff]
      %v1799 = vld [vmem:[#allocation3 + $0x78] sm:$0xff]
      %v1800 = vld [vmem:[#allocation3 + $0x80] sm:$0xff]
      %v1801 = vld [vmem:[#allocation3 + $0x88] sm:$0xff]
      %v1804 = vunpack.c.l.b16 %v1782
      %v1805 = vunpack.c.h.b16 %v1782
      %v1806 = vunpack.c.l.b16 %v1783
      %v1807 = vunpack.c.h.b16 %v1783
      %v1808 = vpack.c.b16 %v1806, %v1804
      %v1809 = vpack.c.b16 %v1807, %v1805
      %v1829 = vunpack.c.l.b16 %v1784
      %v1830 = vunpack.c.h.b16 %v1784
      %v1831 = vunpack.c.l.b16 %v1785
      %v1832 = vunpack.c.h.b16 %v1785
      %v1833 = vunpack.c.l.b16 %v1786
      %v1834 = vunpack.c.h.b16 %v1786
      %v1835 = vunpack.c.l.b16 %v1787
      %v1836 = vunpack.c.h.b16 %v1787
      %v1837 = vunpack.c.l.b16 %v1788
      %v1838 = vunpack.c.h.b16 %v1788
      %v1839 = vunpack.c.l.b16 %v1789
      %v1840 = vunpack.c.h.b16 %v1789
      %v1841 = vunpack.c.l.b16 %v1790
      %v1842 = vunpack.c.h.b16 %v1790
      %v1843 = vunpack.c.l.b16 %v1791
      %v1844 = vunpack.c.h.b16 %v1791
      %v1845 = vunpack.c.l.b16 %v1792
      %v1846 = vunpack.c.h.b16 %v1792
      %v1847 = vunpack.c.l.b16 %v1793
      %v1848 = vunpack.c.h.b16 %v1793
      %v1849 = vunpack.c.l.b16 %v1794
      %v1850 = vunpack.c.h.b16 %v1794
      %v1851 = vunpack.c.l.b16 %v1795
      %v1852 = vunpack.c.h.b16 %v1795
      %v1853 = vunpack.c.l.b16 %v1796
      %v1854 = vunpack.c.h.b16 %v1796
      %v1855 = vunpack.c.l.b16 %v1797
      %v1856 = vunpack.c.h.b16 %v1797
      %v1857 = vunpack.c.l.b16 %v1798
      %v1858 = vunpack.c.h.b16 %v1798
      %v1859 = vunpack.c.l.b16 %v1799
      %v1860 = vunpack.c.h.b16 %v1799
      %v1861 = vunpack.c.l.b16 %v1800
      %v1862 = vunpack.c.h.b16 %v1800
      %v1863 = vunpack.c.l.b16 %v1801
      %v1864 = vunpack.c.h.b16 %v1801
      %v1865 = vpack.c.b16 %v1831, %v1829
      %v1866 = vpack.c.b16 %v1832, %v1830
      %v1867 = vpack.c.b16 %v1835, %v1833
      %v1868 = vpack.c.b16 %v1836, %v1834
      %v1869 = vpack.c.b16 %v1839, %v1837
      %v1870 = vpack.c.b16 %v1840, %v1838
      %v1871 = vpack.c.b16 %v1843, %v1841
      %v1872 = vpack.c.b16 %v1844, %v1842
      %v1873 = vpack.c.b16 %v1847, %v1845
      %v1874 = vpack.c.b16 %v1848, %v1846
      %v1875 = vpack.c.b16 %v1851, %v1849
      %v1876 = vpack.c.b16 %v1852, %v1850
      %v1877 = vpack.c.b16 %v1855, %v1853
      %v1878 = vpack.c.b16 %v1856, %v1854
      %v1879 = vpack.c.b16 %v1859, %v1857
      %v1880 = vpack.c.b16 %v1860, %v1858
      %v1881 = vpack.c.b16 %v1863, %v1861
      %v1882 = vpack.c.b16 %v1864, %v1862
      %v1902 = vsel %vm591, %v1809, 0
      %1904 = vmatpush.bf16.msra.mxu0 %v1879
      %1905 = vmatpush.bf16.msra.mxu0 %v1877
      %1906 = vmatpush.bf16.msra.mxu0 %v1875
      %1907 = vmatpush.bf16.msra.mxu0 %v1873
      %1908 = vmatpush.bf16.msra.mxu0 %v1871
      %1909 = vmatpush.bf16.msra.mxu0 %v1869
      %1910 = vmatpush.bf16.msra.mxu0 %v1867
      %1911 = vmatpush.bf16.msra.mxu0 %v1865
      %1912 = vmatmul.bf16.gmra.mxu0 %v1808
      %v1913 = vpop.f32.mrf.mxu0
      %v1914 = vadd.f32 0.0, %v1913
      %v1915 = vpop.f32.mrf.mxu0
      %v1916 = vadd.f32 0.0, %v1915
      %1917 = vdwg.mxu0
      %1918 = vmatpush.bf16.msra.mxu0 0
      %1919 = vmatpush.bf16.msra.mxu0 0
      %1920 = vmatpush.bf16.msra.mxu0 0
      %1921 = vmatpush.bf16.msra.mxu0 0
      %1922 = vmatpush.bf16.msra.mxu0 0
      %1923 = vmatpush.bf16.msra.mxu0 0
      %1924 = vmatpush.bf16.msra.mxu0 0
      %1925 = vmatpush.bf16.msra.mxu0 %v1881
      %1926 = vmatmul.bf16.gmra.mxu0 %v1902
      %v1927 = vpop.f32.mrf.mxu0
      %v1928 = vadd.f32 %v1914, %v1927
      %v1929 = vpop.f32.mrf.mxu0
      %v1930 = vadd.f32 %v1916, %v1929
      %1931 = vdwg.mxu0
      %1932 = vmatpush.bf16.msra.mxu0 %v1880
      %1933 = vmatpush.bf16.msra.mxu0 %v1878
      %1934 = vmatpush.bf16.msra.mxu0 %v1876
      %1935 = vmatpush.bf16.msra.mxu0 %v1874
      %1936 = vmatpush.bf16.msra.mxu0 %v1872
      %1937 = vmatpush.bf16.msra.mxu0 %v1870
      %1938 = vmatpush.bf16.msra.mxu0 %v1868
      %1939 = vmatpush.bf16.msra.mxu0 %v1866
      %1940 = vmatmul.bf16.gmra.mxu0 %v1808
      %v1941 = vpop.f32.mrf.mxu0
      %v1942 = vadd.f32 0.0, %v1941
      %v1943 = vpop.f32.mrf.mxu0
      %v1944 = vadd.f32 0.0, %v1943
      %1945 = vdwg.mxu0
      %1946 = vmatpush.bf16.msra.mxu0 0
      %1947 = vmatpush.bf16.msra.mxu0 0
      %1948 = vmatpush.bf16.msra.mxu0 0
      %1949 = vmatpush.bf16.msra.mxu0 0
      %1950 = vmatpush.bf16.msra.mxu0 0
      %1951 = vmatpush.bf16.msra.mxu0 0
      %1952 = vmatpush.bf16.msra.mxu0 0
      %1953 = vmatpush.bf16.msra.mxu0 %v1882
      %1954 = vmatmul.bf16.gmra.mxu0 %v1902
      %v1955 = vpop.f32.mrf.mxu0
      %v1956 = vadd.f32 %v1942, %v1955
      %v1957 = vpop.f32.mrf.mxu0
      %v1958 = vadd.f32 %v1944, %v1957
      %1959 = vdwg.mxu0
      %s1960 = scalar_lea.vmem %s2, 48
      %v1961 = vld [vmem:[%s1960] sm:$0xff]
      %v1962 = vld [vmem:[%s1960 + $0x8] sm:$0xff]
      %1964 = vset.pattern.permute.xlu0 0
      %1965 = vperm.xlu0 %1964, %v1961
      %v1966 = vpop.permute.xlu0 %1965
      %1969 = vset.pattern.permute.xlu0 0
      %1970 = vperm.xlu0 %1969, %v1962
      %v1971 = vpop.permute.xlu0 %1970
      %v1973 = vmul.f32 %v1928, %v1966
      %v1974 = vmul.f32 %v1956, %v1966
      %v1975 = vmul.f32 %v1930, %v1971
      %v1976 = vmul.f32 %v1958, %v1971
      %s1977 = scalar_lea.vmem %s3, 48
      %v1978 = vld [vmem:[%s1977] sm:$0xff]
      %v1979 = vld [vmem:[%s1977 + $0x8] sm:$0xff]
      %1981 = vset.pattern.permute.xlu0 0
      %1982 = vperm.xlu0 %1981, %v1978
      %v1983 = vpop.permute.xlu0 %1982
      %1986 = vset.pattern.permute.xlu0 0
      %1987 = vperm.xlu0 %1986, %v1979
      %v1988 = vpop.permute.xlu0 %1987
      %v1990 = vadd.f32 %v1973, %v1983
      %v1991 = vadd.f32 %v1974, %v1983
      %v1992 = vadd.f32 %v1975, %v1988
      %v1993 = vadd.f32 %v1976, %v1988
      %v1994 = vmax.f32 %v1990, 0.0
      %v1995 = vmax.f32 %v1991, 0.0
      %v1996 = vmax.f32 %v1992, 0.0
      %v1997 = vmax.f32 %v1993, 0.0
      %1998 = vst [vmem:[#allocation2] sm:$0xff] %v1994
      %1999 = vst [vmem:[#allocation2 + $0x8] sm:$0xff] %v1995
      %2000 = vst [vmem:[#allocation2 + $0x10] sm:$0xff] %v1996
      %2001 = vst [vmem:[#allocation2 + $0x18] sm:$0xff] %v1997
      %v2002 = vld [vmem:[#allocation2] sm:$0xff]
      %v2003 = vld [vmem:[#allocation2 + $0x8] sm:$0xff]
      %v2004 = vld [vmem:[#allocation2 + $0x10] sm:$0xff]
      %v2005 = vld [vmem:[#allocation2 + $0x18] sm:$0xff]
      %2006 = vrot.lane.b32.xlu0 %v2002, 17
      %v2007 = vpop.permute.xlu0 %2006
      %2008 = vrot.lane.b32.xlu0 %v2004, 17
      %v2009 = vpop.permute.xlu0 %2008
      %2010 = vrot.lane.b32.xlu0 %v2003, 17
      %v2011 = vpop.permute.xlu0 %2010
      %2012 = vrot.lane.b32.xlu0 %v2005, 17
      %v2013 = vpop.permute.xlu0 %2012
      %v2014 = vsel %vm253, %v2007, %v2011
      %v2015 = vsel %vm253, %v2009, %v2013
      %v2016 = vsel %vm253, %v2011, %v2007
      %v2017 = vsel %vm253, %v2013, %v2009
      %v2018 = vld [vmem:[%s4] sm:$0x3]
      %v2020 = vperm.slane %v2018, 0
      %v2021 = vperm.slane %v2018, 1
      %v2024 = vmul.f32 %v2016, %v2020
      %v2025 = vmul.f32 %v2014, %v2021
      %v2026 = vmul.f32 %v2017, %v2020
      %v2027 = vmul.f32 %v2015, %v2021
      %v2028 = vpack.c.bf16 %v2025, %v2024
      %v2029 = vpack.c.bf16 %v2027, %v2026
      %2030 = vst [vmem:[#allocation3] sm:$0xff] %v2028
      %2031 = vst [vmem:[#allocation3 + $0x8] sm:$0xff] %v2029
      %2032 = vrot.lane.b32.xlu0 %v2002, 16
      %v2033 = vpop.permute.xlu0 %2032
      %2034 = vrot.lane.b32.xlu0 %v2004, 16
      %v2035 = vpop.permute.xlu0 %2034
      %2036 = vrot.lane.b32.xlu0 %v2003, 16
      %v2037 = vpop.permute.xlu0 %2036
      %2038 = vrot.lane.b32.xlu0 %v2005, 16
      %v2039 = vpop.permute.xlu0 %2038
      %v2040 = vsel %vm280, %v2033, %v2037
      %v2041 = vsel %vm280, %v2035, %v2039
      %v2042 = vsel %vm280, %v2037, %v2033
      %v2043 = vsel %vm280, %v2039, %v2035
      %v2044 = vld [vmem:[%s285] sm:$0x3]
      %v2046 = vperm.slane %v2044, 0
      %v2047 = vperm.slane %v2044, 1
      %v2050 = vmul.f32 %v2042, %v2046
      %v2051 = vmul.f32 %v2040, %v2047
      %v2052 = vmul.f32 %v2043, %v2046
      %v2053 = vmul.f32 %v2041, %v2047
      %v2054 = vpack.c.bf16 %v2051, %v2050
      %v2055 = vpack.c.bf16 %v2053, %v2052
      %2056 = vst [vmem:[#allocation3 + $0x10] sm:$0xff] %v2054
      %2057 = vst [vmem:[#allocation3 + $0x18] sm:$0xff] %v2055
      %2058 = vrot.lane.b32.xlu0 %v2002, 15
      %v2059 = vpop.permute.xlu0 %2058
      %2060 = vrot.lane.b32.xlu0 %v2004, 15
      %v2061 = vpop.permute.xlu0 %2060
      %2062 = vrot.lane.b32.xlu0 %v2003, 15
      %v2063 = vpop.permute.xlu0 %2062
      %2064 = vrot.lane.b32.xlu0 %v2005, 15
      %v2065 = vpop.permute.xlu0 %2064
      %v2066 = vsel %vm308, %v2059, %v2063
      %v2067 = vsel %vm308, %v2061, %v2065
      %v2068 = vsel %vm308, %v2063, %v2059
      %v2069 = vsel %vm308, %v2065, %v2061
      %v2070 = vld [vmem:[%s313] sm:$0x3]
      %v2072 = vperm.slane %v2070, 0
      %v2073 = vperm.slane %v2070, 1
      %v2076 = vmul.f32 %v2068, %v2072
      %v2077 = vmul.f32 %v2066, %v2073
      %v2078 = vmul.f32 %v2069, %v2072
      %v2079 = vmul.f32 %v2067, %v2073
      %v2080 = vpack.c.bf16 %v2077, %v2076
      %v2081 = vpack.c.bf16 %v2079, %v2078
      %2082 = vst [vmem:[#allocation3 + $0x20] sm:$0xff] %v2080
      %2083 = vst [vmem:[#allocation3 + $0x28] sm:$0xff] %v2081
      %2084 = vrot.lane.b32.xlu0 %v2002, 1
      %v2085 = vpop.permute.xlu0 %2084
      %2086 = vrot.lane.b32.xlu0 %v2004, 1
      %v2087 = vpop.permute.xlu0 %2086
      %2088 = vrot.lane.b32.xlu0 %v2003, 1
      %v2089 = vpop.permute.xlu0 %2088
      %2090 = vrot.lane.b32.xlu0 %v2005, 1
      %v2091 = vpop.permute.xlu0 %2090
      %v2092 = vsel %vm336, %v2085, %v2089
      %v2093 = vsel %vm336, %v2087, %v2091
      %v2094 = vsel %vm336, %v2089, %v2085
      %v2095 = vsel %vm336, %v2091, %v2087
      %v2096 = vld [vmem:[%s341] sm:$0x3]
      %v2098 = vperm.slane %v2096, 0
      %v2099 = vperm.slane %v2096, 1
      %v2102 = vmul.f32 %v2094, %v2098
      %v2103 = vmul.f32 %v2092, %v2099
      %v2104 = vmul.f32 %v2095, %v2098
      %v2105 = vmul.f32 %v2093, %v2099
      %v2106 = vpack.c.bf16 %v2103, %v2102
      %v2107 = vpack.c.bf16 %v2105, %v2104
      %2108 = vst [vmem:[#allocation3 + $0x30] sm:$0xff] %v2106
      %2109 = vst [vmem:[#allocation3 + $0x38] sm:$0xff] %v2107
      %v2110 = vpack.c.bf16 %v2003, %v2002
      %v2111 = vpack.c.bf16 %v2005, %v2004
      %2112 = vst [vmem:[#allocation3 + $0x40] sm:$0xff] %v2110
      %2113 = vst [vmem:[#allocation3 + $0x48] sm:$0xff] %v2111
      %2114 = vrot.lane.b32.xlu0 %v2002, 127
      %v2115 = vpop.permute.xlu0 %2114
      %2116 = vrot.lane.b32.xlu0 %v2004, 127
      %v2117 = vpop.permute.xlu0 %2116
      %2118 = vrot.lane.b32.xlu0 %v2003, 127
      %v2119 = vpop.permute.xlu0 %2118
      %2120 = vrot.lane.b32.xlu0 %v2005, 127
      %v2121 = vpop.permute.xlu0 %2120
      %v2122 = vsel %vm368, %v2115, %v2119
      %v2123 = vsel %vm368, %v2117, %v2121
      %v2124 = vsel %vm368, %v2119, %v2115
      %v2125 = vsel %vm368, %v2121, %v2117
      %v2126 = vld [vmem:[%s373] sm:$0x3]
      %v2128 = vperm.slane %v2126, 0
      %v2129 = vperm.slane %v2126, 1
      %v2132 = vmul.f32 %v2122, %v2128
      %v2133 = vmul.f32 %v2124, %v2129
      %v2134 = vmul.f32 %v2123, %v2128
      %v2135 = vmul.f32 %v2125, %v2129
      %v2136 = vpack.c.bf16 %v2133, %v2132
      %v2137 = vpack.c.bf16 %v2135, %v2134
      %2138 = vst [vmem:[#allocation3 + $0x50] sm:$0xff] %v2136
      %2139 = vst [vmem:[#allocation3 + $0x58] sm:$0xff] %v2137
      %2140 = vrot.lane.b32.xlu0 %v2002, 113
      %v2141 = vpop.permute.xlu0 %2140
      %2142 = vrot.lane.b32.xlu0 %v2004, 113
      %v2143 = vpop.permute.xlu0 %2142
      %2144 = vrot.lane.b32.xlu0 %v2003, 113
      %v2145 = vpop.permute.xlu0 %2144
      %2146 = vrot.lane.b32.xlu0 %v2005, 113
      %v2147 = vpop.permute.xlu0 %2146
      %v2148 = vsel %vm396, %v2141, %v2145
      %v2149 = vsel %vm396, %v2143, %v2147
      %v2150 = vsel %vm396, %v2145, %v2141
      %v2151 = vsel %vm396, %v2147, %v2143
      %v2152 = vld [vmem:[%s401] sm:$0x3]
      %v2154 = vperm.slane %v2152, 0
      %v2155 = vperm.slane %v2152, 1
      %v2158 = vmul.f32 %v2148, %v2154
      %v2159 = vmul.f32 %v2150, %v2155
      %v2160 = vmul.f32 %v2149, %v2154
      %v2161 = vmul.f32 %v2151, %v2155
      %v2162 = vpack.c.bf16 %v2159, %v2158
      %v2163 = vpack.c.bf16 %v2161, %v2160
      %2164 = vst [vmem:[#allocation3 + $0x60] sm:$0xff] %v2162
      %2165 = vst [vmem:[#allocation3 + $0x68] sm:$0xff] %v2163
      %2166 = vrot.lane.b32.xlu0 %v2002, 112
      %v2167 = vpop.permute.xlu0 %2166
      %2168 = vrot.lane.b32.xlu0 %v2004, 112
      %v2169 = vpop.permute.xlu0 %2168
      %2170 = vrot.lane.b32.xlu0 %v2003, 112
      %v2171 = vpop.permute.xlu0 %2170
      %2172 = vrot.lane.b32.xlu0 %v2005, 112
      %v2173 = vpop.permute.xlu0 %2172
      %v2174 = vsel %vm424, %v2167, %v2171
      %v2175 = vsel %vm424, %v2169, %v2173
      %v2176 = vsel %vm424, %v2171, %v2167
      %v2177 = vsel %vm424, %v2173, %v2169
      %v2178 = vld [vmem:[%s429] sm:$0x3]
      %v2180 = vperm.slane %v2178, 0
      %v2181 = vperm.slane %v2178, 1
      %v2184 = vmul.f32 %v2174, %v2180
      %v2185 = vmul.f32 %v2176, %v2181
      %v2186 = vmul.f32 %v2175, %v2180
      %v2187 = vmul.f32 %v2177, %v2181
      %v2188 = vpack.c.bf16 %v2185, %v2184
      %v2189 = vpack.c.bf16 %v2187, %v2186
      %2190 = vst [vmem:[#allocation3 + $0x70] sm:$0xff] %v2188
      %2191 = vst [vmem:[#allocation3 + $0x78] sm:$0xff] %v2189
      %2192 = vrot.lane.b32.xlu0 %v2002, 111
      %v2193 = vpop.permute.xlu0 %2192
      %2194 = vrot.lane.b32.xlu0 %v2004, 111
      %v2195 = vpop.permute.xlu0 %2194
      %2196 = vrot.lane.b32.xlu0 %v2003, 111
      %v2197 = vpop.permute.xlu0 %2196
      %2198 = vrot.lane.b32.xlu0 %v2005, 111
      %v2199 = vpop.permute.xlu0 %2198
      %v2200 = vsel %vm452, %v2193, %v2197
      %v2201 = vsel %vm452, %v2195, %v2199
      %v2202 = vsel %vm452, %v2197, %v2193
      %v2203 = vsel %vm452, %v2199, %v2195
      %v2204 = vld [vmem:[%s457] sm:$0x3]
      %v2206 = vperm.slane %v2204, 0
      %v2207 = vperm.slane %v2204, 1
      %v2210 = vmul.f32 %v2200, %v2206
      %v2211 = vmul.f32 %v2202, %v2207
      %v2212 = vmul.f32 %v2201, %v2206
      %v2213 = vmul.f32 %v2203, %v2207
      %v2214 = vpack.c.bf16 %v2211, %v2210
      %v2215 = vpack.c.bf16 %v2213, %v2212
      %2216 = vst [vmem:[#allocation3 + $0x80] sm:$0xff] %v2214
      %2217 = vst [vmem:[#allocation3 + $0x88] sm:$0xff] %v2215
      %s2218 = scalar_lea.vmem %s1, 64
      %v2219 = vld [vmem:[%s2218] sm:$0xff]
      %v2220 = vld [vmem:[%s2218 + $0x8] sm:$0xff]
      %v2221 = vld [vmem:[#allocation3] sm:$0xff]
      %v2222 = vld [vmem:[#allocation3 + $0x8] sm:$0xff]
      %v2223 = vld [vmem:[#allocation3 + $0x10] sm:$0xff]
      %v2224 = vld [vmem:[#allocation3 + $0x18] sm:$0xff]
      %v2225 = vld [vmem:[#allocation3 + $0x20] sm:$0xff]
      %v2226 = vld [vmem:[#allocation3 + $0x28] sm:$0xff]
      %v2227 = vld [vmem:[#allocation3 + $0x30] sm:$0xff]
      %v2228 = vld [vmem:[#allocation3 + $0x38] sm:$0xff]
      %v2229 = vld [vmem:[#allocation3 + $0x40] sm:$0xff]
      %v2230 = vld [vmem:[#allocation3 + $0x48] sm:$0xff]
      %v2231 = vld [vmem:[#allocation3 + $0x50] sm:$0xff]
      %v2232 = vld [vmem:[#allocation3 + $0x58] sm:$0xff]
      %v2233 = vld [vmem:[#allocation3 + $0x60] sm:$0xff]
      %v2234 = vld [vmem:[#allocation3 + $0x68] sm:$0xff]
      %v2235 = vld [vmem:[#allocation3 + $0x70] sm:$0xff]
      %v2236 = vld [vmem:[#allocation3 + $0x78] sm:$0xff]
      %v2237 = vld [vmem:[#allocation3 + $0x80] sm:$0xff]
      %v2238 = vld [vmem:[#allocation3 + $0x88] sm:$0xff]
      %v2241 = vunpack.c.l.b16 %v2219
      %v2242 = vunpack.c.h.b16 %v2219
      %v2243 = vunpack.c.l.b16 %v2220
      %v2244 = vunpack.c.h.b16 %v2220
      %v2245 = vpack.c.b16 %v2243, %v2241
      %v2246 = vpack.c.b16 %v2244, %v2242
      %v2266 = vunpack.c.l.b16 %v2221
      %v2267 = vunpack.c.h.b16 %v2221
      %v2268 = vunpack.c.l.b16 %v2222
      %v2269 = vunpack.c.h.b16 %v2222
      %v2270 = vunpack.c.l.b16 %v2223
      %v2271 = vunpack.c.h.b16 %v2223
      %v2272 = vunpack.c.l.b16 %v2224
      %v2273 = vunpack.c.h.b16 %v2224
      %v2274 = vunpack.c.l.b16 %v2225
      %v2275 = vunpack.c.h.b16 %v2225
      %v2276 = vunpack.c.l.b16 %v2226
      %v2277 = vunpack.c.h.b16 %v2226
      %v2278 = vunpack.c.l.b16 %v2227
      %v2279 = vunpack.c.h.b16 %v2227
      %v2280 = vunpack.c.l.b16 %v2228
      %v2281 = vunpack.c.h.b16 %v2228
      %v2282 = vunpack.c.l.b16 %v2229
      %v2283 = vunpack.c.h.b16 %v2229
      %v2284 = vunpack.c.l.b16 %v2230
      %v2285 = vunpack.c.h.b16 %v2230
      %v2286 = vunpack.c.l.b16 %v2231
      %v2287 = vunpack.c.h.b16 %v2231
      %v2288 = vunpack.c.l.b16 %v2232
      %v2289 = vunpack.c.h.b16 %v2232
      %v2290 = vunpack.c.l.b16 %v2233
      %v2291 = vunpack.c.h.b16 %v2233
      %v2292 = vunpack.c.l.b16 %v2234
      %v2293 = vunpack.c.h.b16 %v2234
      %v2294 = vunpack.c.l.b16 %v2235
      %v2295 = vunpack.c.h.b16 %v2235
      %v2296 = vunpack.c.l.b16 %v2236
      %v2297 = vunpack.c.h.b16 %v2236
      %v2298 = vunpack.c.l.b16 %v2237
      %v2299 = vunpack.c.h.b16 %v2237
      %v2300 = vunpack.c.l.b16 %v2238
      %v2301 = vunpack.c.h.b16 %v2238
      %v2302 = vpack.c.b16 %v2268, %v2266
      %v2303 = vpack.c.b16 %v2269, %v2267
      %v2304 = vpack.c.b16 %v2272, %v2270
      %v2305 = vpack.c.b16 %v2273, %v2271
      %v2306 = vpack.c.b16 %v2276, %v2274
      %v2307 = vpack.c.b16 %v2277, %v2275
      %v2308 = vpack.c.b16 %v2280, %v2278
      %v2309 = vpack.c.b16 %v2281, %v2279
      %v2310 = vpack.c.b16 %v2284, %v2282
      %v2311 = vpack.c.b16 %v2285, %v2283
      %v2312 = vpack.c.b16 %v2288, %v2286
      %v2313 = vpack.c.b16 %v2289, %v2287
      %v2314 = vpack.c.b16 %v2292, %v2290
      %v2315 = vpack.c.b16 %v2293, %v2291
      %v2316 = vpack.c.b16 %v2296, %v2294
      %v2317 = vpack.c.b16 %v2297, %v2295
      %v2318 = vpack.c.b16 %v2300, %v2298
      %v2319 = vpack.c.b16 %v2301, %v2299
      %v2339 = vsel %vm591, %v2246, 0
      %2341 = vmatpush.bf16.msra.mxu0 %v2316
      %2342 = vmatpush.bf16.msra.mxu0 %v2314
      %2343 = vmatpush.bf16.msra.mxu0 %v2312
      %2344 = vmatpush.bf16.msra.mxu0 %v2310
      %2345 = vmatpush.bf16.msra.mxu0 %v2308
      %2346 = vmatpush.bf16.msra.mxu0 %v2306
      %2347 = vmatpush.bf16.msra.mxu0 %v2304
      %2348 = vmatpush.bf16.msra.mxu0 %v2302
      %2349 = vmatmul.bf16.gmra.mxu0 %v2245
      %v2350 = vpop.f32.mrf.mxu0
      %v2351 = vadd.f32 0.0, %v2350
      %v2352 = vpop.f32.mrf.mxu0
      %v2353 = vadd.f32 0.0, %v2352
      %2354 = vdwg.mxu0
      %2355 = vmatpush.bf16.msra.mxu0 0
      %2356 = vmatpush.bf16.msra.mxu0 0
      %2357 = vmatpush.bf16.msra.mxu0 0
      %2358 = vmatpush.bf16.msra.mxu0 0
      %2359 = vmatpush.bf16.msra.mxu0 0
      %2360 = vmatpush.bf16.msra.mxu0 0
      %2361 = vmatpush.bf16.msra.mxu0 0
      %2362 = vmatpush.bf16.msra.mxu0 %v2318
      %2363 = vmatmul.bf16.gmra.mxu0 %v2339
      %v2364 = vpop.f32.mrf.mxu0
      %v2365 = vadd.f32 %v2351, %v2364
      %v2366 = vpop.f32.mrf.mxu0
      %v2367 = vadd.f32 %v2353, %v2366
      %2368 = vdwg.mxu0
      %2369 = vmatpush.bf16.msra.mxu0 %v2317
      %2370 = vmatpush.bf16.msra.mxu0 %v2315
      %2371 = vmatpush.bf16.msra.mxu0 %v2313
      %2372 = vmatpush.bf16.msra.mxu0 %v2311
      %2373 = vmatpush.bf16.msra.mxu0 %v2309
      %2374 = vmatpush.bf16.msra.mxu0 %v2307
      %2375 = vmatpush.bf16.msra.mxu0 %v2305
      %2376 = vmatpush.bf16.msra.mxu0 %v2303
      %2377 = vmatmul.bf16.gmra.mxu0 %v2245
      %v2378 = vpop.f32.mrf.mxu0
      %v2379 = vadd.f32 0.0, %v2378
      %v2380 = vpop.f32.mrf.mxu0
      %v2381 = vadd.f32 0.0, %v2380
      %2382 = vdwg.mxu0
      %2383 = vmatpush.bf16.msra.mxu0 0
      %2384 = vmatpush.bf16.msra.mxu0 0
      %2385 = vmatpush.bf16.msra.mxu0 0
      %2386 = vmatpush.bf16.msra.mxu0 0
      %2387 = vmatpush.bf16.msra.mxu0 0
      %2388 = vmatpush.bf16.msra.mxu0 0
      %2389 = vmatpush.bf16.msra.mxu0 0
      %2390 = vmatpush.bf16.msra.mxu0 %v2319
      %2391 = vmatmul.bf16.gmra.mxu0 %v2339
      %v2392 = vpop.f32.mrf.mxu0
      %v2393 = vadd.f32 %v2379, %v2392
      %v2394 = vpop.f32.mrf.mxu0
      %v2395 = vadd.f32 %v2381, %v2394
      %2396 = vdwg.mxu0
      %s2397 = scalar_lea.vmem %s2, 64
      %v2398 = vld [vmem:[%s2397] sm:$0xff]
      %v2399 = vld [vmem:[%s2397 + $0x8] sm:$0xff]
      %2401 = vset.pattern.permute.xlu0 0
      %2402 = vperm.xlu0 %2401, %v2398
      %v2403 = vpop.permute.xlu0 %2402
      %2406 = vset.pattern.permute.xlu0 0
      %2407 = vperm.xlu0 %2406, %v2399
      %v2408 = vpop.permute.xlu0 %2407
      %v2410 = vmul.f32 %v2365, %v2403
      %v2411 = vmul.f32 %v2393, %v2403
      %v2412 = vmul.f32 %v2367, %v2408
      %v2413 = vmul.f32 %v2395, %v2408
      %s2414 = scalar_lea.vmem %s3, 64
      %v2415 = vld [vmem:[%s2414] sm:$0xff]
      %v2416 = vld [vmem:[%s2414 + $0x8] sm:$0xff]
      %2418 = vset.pattern.permute.xlu0 0
      %2419 = vperm.xlu0 %2418, %v2415
      %v2420 = vpop.permute.xlu0 %2419
      %2423 = vset.pattern.permute.xlu0 0
      %2424 = vperm.xlu0 %2423, %v2416
      %v2425 = vpop.permute.xlu0 %2424
      %v2427 = vadd.f32 %v2410, %v2420
      %v2428 = vadd.f32 %v2411, %v2420
      %v2429 = vadd.f32 %v2412, %v2425
      %v2430 = vadd.f32 %v2413, %v2425
      %v2431 = vmax.f32 %v2427, 0.0
      %v2432 = vmax.f32 %v2428, 0.0
      %v2433 = vmax.f32 %v2429, 0.0
      %v2434 = vmax.f32 %v2430, 0.0
      %2435 = vst [vmem:[#allocation2] sm:$0xff] %v2431
      %2436 = vst [vmem:[#allocation2 + $0x8] sm:$0xff] %v2432
      %2437 = vst [vmem:[#allocation2 + $0x10] sm:$0xff] %v2433
      %2438 = vst [vmem:[#allocation2 + $0x18] sm:$0xff] %v2434
      %v2439 = vld [vmem:[#allocation2] sm:$0xff]
      %v2440 = vld [vmem:[#allocation2 + $0x8] sm:$0xff]
      %v2441 = vld [vmem:[#allocation2 + $0x10] sm:$0xff]
      %v2442 = vld [vmem:[#allocation2 + $0x18] sm:$0xff]
      %2443 = vrot.lane.b32.xlu0 %v2439, 17
      %v2444 = vpop.permute.xlu0 %2443
      %2445 = vrot.lane.b32.xlu0 %v2441, 17
      %v2446 = vpop.permute.xlu0 %2445
      %2447 = vrot.lane.b32.xlu0 %v2440, 17
      %v2448 = vpop.permute.xlu0 %2447
      %2449 = vrot.lane.b32.xlu0 %v2442, 17
      %v2450 = vpop.permute.xlu0 %2449
      %v2451 = vsel %vm253, %v2444, %v2448
      %v2452 = vsel %vm253, %v2446, %v2450
      %v2453 = vsel %vm253, %v2448, %v2444
      %v2454 = vsel %vm253, %v2450, %v2446
      %v2455 = vld [vmem:[%s4] sm:$0x3]
      %v2457 = vperm.slane %v2455, 0
      %v2458 = vperm.slane %v2455, 1
      %v2461 = vmul.f32 %v2453, %v2457
      %v2462 = vmul.f32 %v2451, %v2458
      %v2463 = vmul.f32 %v2454, %v2457
      %v2464 = vmul.f32 %v2452, %v2458
      %v2465 = vpack.c.bf16 %v2462, %v2461
      %v2466 = vpack.c.bf16 %v2464, %v2463
      %2467 = vst [vmem:[#allocation3] sm:$0xff] %v2465
      %2468 = vst [vmem:[#allocation3 + $0x8] sm:$0xff] %v2466
      %2469 = vrot.lane.b32.xlu0 %v2439, 16
      %v2470 = vpop.permute.xlu0 %2469
      %2471 = vrot.lane.b32.xlu0 %v2441, 16
      %v2472 = vpop.permute.xlu0 %2471
      %2473 = vrot.lane.b32.xlu0 %v2440, 16
      %v2474 = vpop.permute.xlu0 %2473
      %2475 = vrot.lane.b32.xlu0 %v2442, 16
      %v2476 = vpop.permute.xlu0 %2475
      %v2477 = vsel %vm280, %v2470, %v2474
      %v2478 = vsel %vm280, %v2472, %v2476
      %v2479 = vsel %vm280, %v2474, %v2470
      %v2480 = vsel %vm280, %v2476, %v2472
      %v2481 = vld [vmem:[%s285] sm:$0x3]
      %v2483 = vperm.slane %v2481, 0
      %v2484 = vperm.slane %v2481, 1
      %v2487 = vmul.f32 %v2479, %v2483
      %v2488 = vmul.f32 %v2477, %v2484
      %v2489 = vmul.f32 %v2480, %v2483
      %v2490 = vmul.f32 %v2478, %v2484
      %v2491 = vpack.c.bf16 %v2488, %v2487
      %v2492 = vpack.c.bf16 %v2490, %v2489
      %2493 = vst [vmem:[#allocation3 + $0x10] sm:$0xff] %v2491
      %2494 = vst [vmem:[#allocation3 + $0x18] sm:$0xff] %v2492
      %2495 = vrot.lane.b32.xlu0 %v2439, 15
      %v2496 = vpop.permute.xlu0 %2495
      %2497 = vrot.lane.b32.xlu0 %v2441, 15
      %v2498 = vpop.permute.xlu0 %2497
      %2499 = vrot.lane.b32.xlu0 %v2440, 15
      %v2500 = vpop.permute.xlu0 %2499
      %2501 = vrot.lane.b32.xlu0 %v2442, 15
      %v2502 = vpop.permute.xlu0 %2501
      %v2503 = vsel %vm308, %v2496, %v2500
      %v2504 = vsel %vm308, %v2498, %v2502
      %v2505 = vsel %vm308, %v2500, %v2496
      %v2506 = vsel %vm308, %v2502, %v2498
      %v2507 = vld [vmem:[%s313] sm:$0x3]
      %v2509 = vperm.slane %v2507, 0
      %v2510 = vperm.slane %v2507, 1
      %v2513 = vmul.f32 %v2505, %v2509
      %v2514 = vmul.f32 %v2503, %v2510
      %v2515 = vmul.f32 %v2506, %v2509
      %v2516 = vmul.f32 %v2504, %v2510
      %v2517 = vpack.c.bf16 %v2514, %v2513
      %v2518 = vpack.c.bf16 %v2516, %v2515
      %2519 = vst [vmem:[#allocation3 + $0x20] sm:$0xff] %v2517
      %2520 = vst [vmem:[#allocation3 + $0x28] sm:$0xff] %v2518
      %2521 = vrot.lane.b32.xlu0 %v2439, 1
      %v2522 = vpop.permute.xlu0 %2521
      %2523 = vrot.lane.b32.xlu0 %v2441, 1
      %v2524 = vpop.permute.xlu0 %2523
      %2525 = vrot.lane.b32.xlu0 %v2440, 1
      %v2526 = vpop.permute.xlu0 %2525
      %2527 = vrot.lane.b32.xlu0 %v2442, 1
      %v2528 = vpop.permute.xlu0 %2527
      %v2529 = vsel %vm336, %v2522, %v2526
      %v2530 = vsel %vm336, %v2524, %v2528
      %v2531 = vsel %vm336, %v2526, %v2522
      %v2532 = vsel %vm336, %v2528, %v2524
      %v2533 = vld [vmem:[%s341] sm:$0x3]
      %v2535 = vperm.slane %v2533, 0
      %v2536 = vperm.slane %v2533, 1
      %v2539 = vmul.f32 %v2531, %v2535
      %v2540 = vmul.f32 %v2529, %v2536
      %v2541 = vmul.f32 %v2532, %v2535
      %v2542 = vmul.f32 %v2530, %v2536
      %v2543 = vpack.c.bf16 %v2540, %v2539
      %v2544 = vpack.c.bf16 %v2542, %v2541
      %2545 = vst [vmem:[#allocation3 + $0x30] sm:$0xff] %v2543
      %2546 = vst [vmem:[#allocation3 + $0x38] sm:$0xff] %v2544
      %v2547 = vpack.c.bf16 %v2440, %v2439
      %v2548 = vpack.c.bf16 %v2442, %v2441
      %2549 = vst [vmem:[#allocation3 + $0x40] sm:$0xff] %v2547
      %2550 = vst [vmem:[#allocation3 + $0x48] sm:$0xff] %v2548
      %2551 = vrot.lane.b32.xlu0 %v2439, 127
      %v2552 = vpop.permute.xlu0 %2551
      %2553 = vrot.lane.b32.xlu0 %v2441, 127
      %v2554 = vpop.permute.xlu0 %2553
      %2555 = vrot.lane.b32.xlu0 %v2440, 127
      %v2556 = vpop.permute.xlu0 %2555
      %2557 = vrot.lane.b32.xlu0 %v2442, 127
      %v2558 = vpop.permute.xlu0 %2557
      %v2559 = vsel %vm368, %v2552, %v2556
      %v2560 = vsel %vm368, %v2554, %v2558
      %v2561 = vsel %vm368, %v2556, %v2552
      %v2562 = vsel %vm368, %v2558, %v2554
      %v2563 = vld [vmem:[%s373] sm:$0x3]
      %v2565 = vperm.slane %v2563, 0
      %v2566 = vperm.slane %v2563, 1
      %v2569 = vmul.f32 %v2559, %v2565
      %v2570 = vmul.f32 %v2561, %v2566
      %v2571 = vmul.f32 %v2560, %v2565
      %v2572 = vmul.f32 %v2562, %v2566
      %v2573 = vpack.c.bf16 %v2570, %v2569
      %v2574 = vpack.c.bf16 %v2572, %v2571
      %2575 = vst [vmem:[#allocation3 + $0x50] sm:$0xff] %v2573
      %2576 = vst [vmem:[#allocation3 + $0x58] sm:$0xff] %v2574
      %2577 = vrot.lane.b32.xlu0 %v2439, 113
      %v2578 = vpop.permute.xlu0 %2577
      %2579 = vrot.lane.b32.xlu0 %v2441, 113
      %v2580 = vpop.permute.xlu0 %2579
      %2581 = vrot.lane.b32.xlu0 %v2440, 113
      %v2582 = vpop.permute.xlu0 %2581
      %2583 = vrot.lane.b32.xlu0 %v2442, 113
      %v2584 = vpop.permute.xlu0 %2583
      %v2585 = vsel %vm396, %v2578, %v2582
      %v2586 = vsel %vm396, %v2580, %v2584
      %v2587 = vsel %vm396, %v2582, %v2578
      %v2588 = vsel %vm396, %v2584, %v2580
      %v2589 = vld [vmem:[%s401] sm:$0x3]
      %v2591 = vperm.slane %v2589, 0
      %v2592 = vperm.slane %v2589, 1
      %v2595 = vmul.f32 %v2585, %v2591
      %v2596 = vmul.f32 %v2587, %v2592
      %v2597 = vmul.f32 %v2586, %v2591
      %v2598 = vmul.f32 %v2588, %v2592
      %v2599 = vpack.c.bf16 %v2596, %v2595
      %v2600 = vpack.c.bf16 %v2598, %v2597
      %2601 = vst [vmem:[#allocation3 + $0x60] sm:$0xff] %v2599
      %2602 = vst [vmem:[#allocation3 + $0x68] sm:$0xff] %v2600
      %2603 = vrot.lane.b32.xlu0 %v2439, 112
      %v2604 = vpop.permute.xlu0 %2603
      %2605 = vrot.lane.b32.xlu0 %v2441, 112
      %v2606 = vpop.permute.xlu0 %2605
      %2607 = vrot.lane.b32.xlu0 %v2440, 112
      %v2608 = vpop.permute.xlu0 %2607
      %2609 = vrot.lane.b32.xlu0 %v2442, 112
      %v2610 = vpop.permute.xlu0 %2609
      %v2611 = vsel %vm424, %v2604, %v2608
      %v2612 = vsel %vm424, %v2606, %v2610
      %v2613 = vsel %vm424, %v2608, %v2604
      %v2614 = vsel %vm424, %v2610, %v2606
      %v2615 = vld [vmem:[%s429] sm:$0x3]
      %v2617 = vperm.slane %v2615, 0
      %v2618 = vperm.slane %v2615, 1
      %v2621 = vmul.f32 %v2611, %v2617
      %v2622 = vmul.f32 %v2613, %v2618
      %v2623 = vmul.f32 %v2612, %v2617
      %v2624 = vmul.f32 %v2614, %v2618
      %v2625 = vpack.c.bf16 %v2622, %v2621
      %v2626 = vpack.c.bf16 %v2624, %v2623
      %2627 = vst [vmem:[#allocation3 + $0x70] sm:$0xff] %v2625
      %2628 = vst [vmem:[#allocation3 + $0x78] sm:$0xff] %v2626
      %2629 = vrot.lane.b32.xlu0 %v2439, 111
      %v2630 = vpop.permute.xlu0 %2629
      %2631 = vrot.lane.b32.xlu0 %v2441, 111
      %v2632 = vpop.permute.xlu0 %2631
      %2633 = vrot.lane.b32.xlu0 %v2440, 111
      %v2634 = vpop.permute.xlu0 %2633
      %2635 = vrot.lane.b32.xlu0 %v2442, 111
      %v2636 = vpop.permute.xlu0 %2635
      %v2637 = vsel %vm452, %v2630, %v2634
      %v2638 = vsel %vm452, %v2632, %v2636
      %v2639 = vsel %vm452, %v2634, %v2630
      %v2640 = vsel %vm452, %v2636, %v2632
      %v2641 = vld [vmem:[%s457] sm:$0x3]
      %v2643 = vperm.slane %v2641, 0
      %v2644 = vperm.slane %v2641, 1
      %v2647 = vmul.f32 %v2637, %v2643
      %v2648 = vmul.f32 %v2639, %v2644
      %v2649 = vmul.f32 %v2638, %v2643
      %v2650 = vmul.f32 %v2640, %v2644
      %v2651 = vpack.c.bf16 %v2648, %v2647
      %v2652 = vpack.c.bf16 %v2650, %v2649
      %2653 = vst [vmem:[#allocation3 + $0x80] sm:$0xff] %v2651
      %2654 = vst [vmem:[#allocation3 + $0x88] sm:$0xff] %v2652
      %s2655 = scalar_lea.vmem %s1, 80
      %v2656 = vld [vmem:[%s2655] sm:$0xff]
      %v2657 = vld [vmem:[%s2655 + $0x8] sm:$0xff]
      %v2658 = vld [vmem:[#allocation3] sm:$0xff]
      %v2659 = vld [vmem:[#allocation3 + $0x8] sm:$0xff]
      %v2660 = vld [vmem:[#allocation3 + $0x10] sm:$0xff]
      %v2661 = vld [vmem:[#allocation3 + $0x18] sm:$0xff]
      %v2662 = vld [vmem:[#allocation3 + $0x20] sm:$0xff]
      %v2663 = vld [vmem:[#allocation3 + $0x28] sm:$0xff]
      %v2664 = vld [vmem:[#allocation3 + $0x30] sm:$0xff]
      %v2665 = vld [vmem:[#allocation3 + $0x38] sm:$0xff]
      %v2666 = vld [vmem:[#allocation3 + $0x40] sm:$0xff]
      %v2667 = vld [vmem:[#allocation3 + $0x48] sm:$0xff]
      %v2668 = vld [vmem:[#allocation3 + $0x50] sm:$0xff]
      %v2669 = vld [vmem:[#allocation3 + $0x58] sm:$0xff]
      %v2670 = vld [vmem:[#allocation3 + $0x60] sm:$0xff]
      %v2671 = vld [vmem:[#allocation3 + $0x68] sm:$0xff]
      %v2672 = vld [vmem:[#allocation3 + $0x70] sm:$0xff]
      %v2673 = vld [vmem:[#allocation3 + $0x78] sm:$0xff]
      %v2674 = vld [vmem:[#allocation3 + $0x80] sm:$0xff]
      %v2675 = vld [vmem:[#allocation3 + $0x88] sm:$0xff]
      %v2678 = vunpack.c.l.b16 %v2656
      %v2679 = vunpack.c.h.b16 %v2656
      %v2680 = vunpack.c.l.b16 %v2657
      %v2681 = vunpack.c.h.b16 %v2657
      %v2682 = vpack.c.b16 %v2680, %v2678
      %v2683 = vpack.c.b16 %v2681, %v2679
      %v2703 = vunpack.c.l.b16 %v2658
      %v2704 = vunpack.c.h.b16 %v2658
      %v2705 = vunpack.c.l.b16 %v2659
      %v2706 = vunpack.c.h.b16 %v2659
      %v2707 = vunpack.c.l.b16 %v2660
      %v2708 = vunpack.c.h.b16 %v2660
      %v2709 = vunpack.c.l.b16 %v2661
      %v2710 = vunpack.c.h.b16 %v2661
      %v2711 = vunpack.c.l.b16 %v2662
      %v2712 = vunpack.c.h.b16 %v2662
      %v2713 = vunpack.c.l.b16 %v2663
      %v2714 = vunpack.c.h.b16 %v2663
      %v2715 = vunpack.c.l.b16 %v2664
      %v2716 = vunpack.c.h.b16 %v2664
      %v2717 = vunpack.c.l.b16 %v2665
      %v2718 = vunpack.c.h.b16 %v2665
      %v2719 = vunpack.c.l.b16 %v2666
      %v2720 = vunpack.c.h.b16 %v2666
      %v2721 = vunpack.c.l.b16 %v2667
      %v2722 = vunpack.c.h.b16 %v2667
      %v2723 = vunpack.c.l.b16 %v2668
      %v2724 = vunpack.c.h.b16 %v2668
      %v2725 = vunpack.c.l.b16 %v2669
      %v2726 = vunpack.c.h.b16 %v2669
      %v2727 = vunpack.c.l.b16 %v2670
      %v2728 = vunpack.c.h.b16 %v2670
      %v2729 = vunpack.c.l.b16 %v2671
      %v2730 = vunpack.c.h.b16 %v2671
      %v2731 = vunpack.c.l.b16 %v2672
      %v2732 = vunpack.c.h.b16 %v2672
      %v2733 = vunpack.c.l.b16 %v2673
      %v2734 = vunpack.c.h.b16 %v2673
      %v2735 = vunpack.c.l.b16 %v2674
      %v2736 = vunpack.c.h.b16 %v2674
      %v2737 = vunpack.c.l.b16 %v2675
      %v2738 = vunpack.c.h.b16 %v2675
      %v2739 = vpack.c.b16 %v2705, %v2703
      %v2740 = vpack.c.b16 %v2706, %v2704
      %v2741 = vpack.c.b16 %v2709, %v2707
      %v2742 = vpack.c.b16 %v2710, %v2708
      %v2743 = vpack.c.b16 %v2713, %v2711
      %v2744 = vpack.c.b16 %v2714, %v2712
      %v2745 = vpack.c.b16 %v2717, %v2715
      %v2746 = vpack.c.b16 %v2718, %v2716
      %v2747 = vpack.c.b16 %v2721, %v2719
      %v2748 = vpack.c.b16 %v2722, %v2720
      %v2749 = vpack.c.b16 %v2725, %v2723
      %v2750 = vpack.c.b16 %v2726, %v2724
      %v2751 = vpack.c.b16 %v2729, %v2727
      %v2752 = vpack.c.b16 %v2730, %v2728
      %v2753 = vpack.c.b16 %v2733, %v2731
      %v2754 = vpack.c.b16 %v2734, %v2732
      %v2755 = vpack.c.b16 %v2737, %v2735
      %v2756 = vpack.c.b16 %v2738, %v2736
      %v2776 = vsel %vm591, %v2683, 0
      %2778 = vmatpush.bf16.msra.mxu0 %v2753
      %2779 = vmatpush.bf16.msra.mxu0 %v2751
      %2780 = vmatpush.bf16.msra.mxu0 %v2749
      %2781 = vmatpush.bf16.msra.mxu0 %v2747
      %2782 = vmatpush.bf16.msra.mxu0 %v2745
      %2783 = vmatpush.bf16.msra.mxu0 %v2743
      %2784 = vmatpush.bf16.msra.mxu0 %v2741
      %2785 = vmatpush.bf16.msra.mxu0 %v2739
      %2786 = vmatmul.bf16.gmra.mxu0 %v2682
      %v2787 = vpop.f32.mrf.mxu0
      %v2788 = vadd.f32 0.0, %v2787
      %v2789 = vpop.f32.mrf.mxu0
      %v2790 = vadd.f32 0.0, %v2789
      %2791 = vdwg.mxu0
      %2792 = vmatpush.bf16.msra.mxu0 0
      %2793 = vmatpush.bf16.msra.mxu0 0
      %2794 = vmatpush.bf16.msra.mxu0 0
      %2795 = vmatpush.bf16.msra.mxu0 0
      %2796 = vmatpush.bf16.msra.mxu0 0
      %2797 = vmatpush.bf16.msra.mxu0 0
      %2798 = vmatpush.bf16.msra.mxu0 0
      %2799 = vmatpush.bf16.msra.mxu0 %v2755
      %2800 = vmatmul.bf16.gmra.mxu0 %v2776
      %v2801 = vpop.f32.mrf.mxu0
      %v2802 = vadd.f32 %v2788, %v2801
      %v2803 = vpop.f32.mrf.mxu0
      %v2804 = vadd.f32 %v2790, %v2803
      %2805 = vdwg.mxu0
      %2806 = vmatpush.bf16.msra.mxu0 %v2754
      %2807 = vmatpush.bf16.msra.mxu0 %v2752
      %2808 = vmatpush.bf16.msra.mxu0 %v2750
      %2809 = vmatpush.bf16.msra.mxu0 %v2748
      %2810 = vmatpush.bf16.msra.mxu0 %v2746
      %2811 = vmatpush.bf16.msra.mxu0 %v2744
      %2812 = vmatpush.bf16.msra.mxu0 %v2742
      %2813 = vmatpush.bf16.msra.mxu0 %v2740
      %2814 = vmatmul.bf16.gmra.mxu0 %v2682
      %v2815 = vpop.f32.mrf.mxu0
      %v2816 = vadd.f32 0.0, %v2815
      %v2817 = vpop.f32.mrf.mxu0
      %v2818 = vadd.f32 0.0, %v2817
      %2819 = vdwg.mxu0
      %2820 = vmatpush.bf16.msra.mxu0 0
      %2821 = vmatpush.bf16.msra.mxu0 0
      %2822 = vmatpush.bf16.msra.mxu0 0
      %2823 = vmatpush.bf16.msra.mxu0 0
      %2824 = vmatpush.bf16.msra.mxu0 0
      %2825 = vmatpush.bf16.msra.mxu0 0
      %2826 = vmatpush.bf16.msra.mxu0 0
      %2827 = vmatpush.bf16.msra.mxu0 %v2756
      %2828 = vmatmul.bf16.gmra.mxu0 %v2776
      %v2829 = vpop.f32.mrf.mxu0
      %v2830 = vadd.f32 %v2816, %v2829
      %v2831 = vpop.f32.mrf.mxu0
      %v2832 = vadd.f32 %v2818, %v2831
      %2833 = vdwg.mxu0
      %s2834 = scalar_lea.vmem %s2, 80
      %v2835 = vld [vmem:[%s2834] sm:$0xff]
      %v2836 = vld [vmem:[%s2834 + $0x8] sm:$0xff]
      %2838 = vset.pattern.permute.xlu0 0
      %2839 = vperm.xlu0 %2838, %v2835
      %v2840 = vpop.permute.xlu0 %2839
      %2843 = vset.pattern.permute.xlu0 0
      %2844 = vperm.xlu0 %2843, %v2836
      %v2845 = vpop.permute.xlu0 %2844
      %v2847 = vmul.f32 %v2802, %v2840
      %v2848 = vmul.f32 %v2830, %v2840
      %v2849 = vmul.f32 %v2804, %v2845
      %v2850 = vmul.f32 %v2832, %v2845
      %s2851 = scalar_lea.vmem %s3, 80
      %v2852 = vld [vmem:[%s2851] sm:$0xff]
      %v2853 = vld [vmem:[%s2851 + $0x8] sm:$0xff]
      %2855 = vset.pattern.permute.xlu0 0
      %2856 = vperm.xlu0 %2855, %v2852
      %v2857 = vpop.permute.xlu0 %2856
      %2860 = vset.pattern.permute.xlu0 0
      %2861 = vperm.xlu0 %2860, %v2853
      %v2862 = vpop.permute.xlu0 %2861
      %v2864 = vadd.f32 %v2847, %v2857
      %v2865 = vadd.f32 %v2848, %v2857
      %v2866 = vadd.f32 %v2849, %v2862
      %v2867 = vadd.f32 %v2850, %v2862
      %v2868 = vmax.f32 %v2864, 0.0
      %v2869 = vmax.f32 %v2865, 0.0
      %v2870 = vmax.f32 %v2866, 0.0
      %v2871 = vmax.f32 %v2867, 0.0
      %2872 = vst [vmem:[#allocation2] sm:$0xff] %v2868
      %2873 = vst [vmem:[#allocation2 + $0x8] sm:$0xff] %v2869
      %2874 = vst [vmem:[#allocation2 + $0x10] sm:$0xff] %v2870
      %2875 = vst [vmem:[#allocation2 + $0x18] sm:$0xff] %v2871
      %v2876 = vld [vmem:[#allocation2] sm:$0x7]
      %v2877 = vld [vmem:[#allocation2 + $0x8] sm:$0x7]
      %v2878 = vld [vmem:[%s219] sm:$0x77]
      %2880 = vst [vmem:[#allocation1] ss:$2 sm:$0xff] %v2878
      %v2881 = vld.sshfl [vmem:[#allocation1] sm:$0xff pattern:$0x75316420]
      %v2882 = vld.sshfl [vmem:[#allocation1 + $0x8] sm:$0xff pattern:$0x75316420]
      %v2885 = vadd.f32 %v2876, %v2881
      %v2886 = vadd.f32 %v2877, %v2882
      %v2889 = vrot.slane %v2886, 4
      %vm2890 = vcmask 1043456
      %v2891 = vsel %vm2890, %v2885, %v2889
      %2893 = vst [vmem:[%s224] sm:$0x77] %v2891
      %p2894 = scmp.lt.s32.totalorder %s16, 1
      %s2895 = scalar_select %p2894, %s16, 1
      %s2896 = smul.addr %s2895, 2
      %s2897 = smul.addr %s2896, 4
      %s2898 = scalar_lea.vmem %s5, %s2897
      // Predicated region
      $region41: #{norm_identity_forward.1} parent=39 // pred_check
        %p2899 = pneg %p144
      $region42: #{norm_identity_forward.1} parent=39 // pred_check_branch
        %2901 = sbr.rel (%p2899) target = $region44
      $region43: #{norm_identity_forward.1} parent=39 // pred_region
        _
      $region44: #{norm_identity_forward.1} parent=39 // pred_fallthru
        _
    $region40: #{norm_identity_forward.1} parent=5 // pred_fallthru
      _
    %p2902 = scmp.le.s32.totalorder 2, %s11
    // Predicated region
    $region45: #{norm_identity_forward.1} parent=5 // pred_check
      %p2903 = pneg %p2902
    $region46: #{norm_identity_forward.1} parent=5 // pred_check_branch
      %2905 = sbr.rel (%p2903) target = $region48
    $region47: #{norm_identity_forward.1} parent=5 // pred_region
      %s2906 = ssub.s32 %s11, 2
      // Predicated region
      $region49: #{norm_identity_forward.1} parent=47 // pred_check
        %p2907 = pneg %p150
      $region50: #{norm_identity_forward.1} parent=47 // pred_check_branch
        %2909 = sbr.rel (%p2907) target = $region52
      $region51: #{norm_identity_forward.1} parent=47 // pred_region
        %p2910 = scmp.lt.s32.totalorder %s17, 1
        %s2911 = scalar_select %p2910, %s17, 1
        %s2912 = smul.addr %s2911, 2
        %s2913 = smul.addr %s2912, 4
        %s2914 = scalar_lea.vmem %s5, %s2913
      $region52: #{norm_identity_forward.1} parent=47 // pred_fallthru
        _
    $region48: #{norm_identity_forward.1} parent=5 // pred_fallthru
      _
  $region6: #{norm_identity_forward.1} parent=0 // loop_footer
    %s15 = sadd.s32 1, %s11
  $region7: #{norm_identity_forward.1} parent=0 // loop_footer_branch
    %10 = sbr.rel target = $region3
  $region8: #{norm_identity_forward.1} parent=0 // loop_exit
    _

</llo_original>
